<compile_context>
chip_gen: v7x
topology: tpu7x:2x2x1
jax: 0.10.0
libtpu: 0.0.40
codegen_flags: <defaults>
</compile_context>

<pallas_src>
import functools

import jax
import jax.numpy as jnp
from jax import lax
from jax.experimental import pallas as pl
from jax.experimental.pallas import tpu as pltpu


def _round_up(x, m):
    return (x + m - 1) // m * m


# ----------------------------- Pallas kernel --------------------------------
def _attention_kernel(
    x_ref,                        # [tile_b, audio_dim + text_dim]  (audio | text)
    w1, b1,                       # merged block-diagonal layer-1: [in, 2*l1], f32 bias [1, 2*l1]
    aw2, ab2, vw2, vb2,           # layer-2 of audio / video MLPs
    mw1a, mw1v, mb1, mw2, mb2,    # attention MLP (first-layer concat eliminated)
    attw, attb,                   # fc_att
    hwv, hwa, hb,                 # fused heads: (vow|bow), (aow|bow) column-packed, f32 bias slab
    out_ref,                      # [tile_b, out_lanes] lane-dense output slab
    *, l1, out_dim, out_lanes,
):
    def mm(x, w_ref):
        w = w_ref[...]
        return jnp.dot(x.astype(w.dtype), w, preferred_element_type=jnp.float32)

    def linear(x, w_ref, b_ref):
        return mm(x, w_ref) + b_ref[...]          # bias stays f32, accumulator is f32

    relu = lambda v: jnp.maximum(v, 0.0)

    x = x_ref[...]

    # Layer-1 of audio_mlp and video_mlp as one block-diagonal MXU pass.
    h1 = relu(linear(x, w1, b1))                  # [B, 2*l1]
    a1 = h1[:, :l1]                               # l1 is a multiple of 128 -> aligned slices
    v1 = h1[:, l1:]

    audio_hidden = relu(linear(a1, aw2, ab2))     # [B, l2]
    video_hidden = relu(linear(v1, vw2, vb2))     # [B, l2]

    # attention_mlp layer-1, concat eliminated: two accumulating matmuls.
    h_m = relu(mm(audio_hidden, mw1a) + mm(video_hidden, mw1v) + mb1[...])
    att_hidden = relu(linear(h_m, mw2, mb2))      # [B, l2]
    att = linear(att_hidden, attw, attb)          # [B, 2]
    att_a = att[:, 0:1]                           # scalar per row for audio_hidden
    att_v = att[:, 1:2]                           # scalar per row for video_hidden

    # Fused output heads (fc_out_b folded through attention): only TWO head matmuls.
    pv = mm(video_hidden, hwv)                    # cols [0,out)=vow,      [2out,3out)=bow
    pa = mm(audio_hidden, hwa)                    # cols [out,2out)=aow,   [2out,3out)=bow
    lane = lax.broadcasted_iota(jnp.int32, (1, out_lanes), 1)
    in_b = (lane >= 2 * out_dim) & (lane < 3 * out_dim)
    out = (pv * jnp.where(in_b, att_v, 1.0)
           + pa * jnp.where(in_b, att_a, 1.0)
           + hb[...])
    out_ref[...] = out.astype(out_ref.dtype)


# ------------------------------ wrapper --------------------------------------
def attention_forward(audio_feat, text_feat, params, output_dim1, *,
                      tile_b=None, weight_dtype=jnp.bfloat16, out_dtype=None,
                      min_grid=1):
    """Fused forward in a single Pallas kernel with VMEM-resident weights."""
    batch, audio_dim = audio_feat.shape
    text_dim = text_feat.shape[1]
    l1 = params["aw1"].shape[1]
    l2 = params["aw2"].shape[1]
    out = output_dim1
    out_lanes = max(128, _round_up(3 * out, 128))   # lane-dense output slab width
    in_dim = audio_dim + text_dim

    is_bf16_w = jnp.dtype(weight_dtype) == jnp.dtype(jnp.bfloat16)
    if out_dtype is None:
        out_dtype = jnp.bfloat16 if is_bf16_w else jnp.float32

    # ---- batch tiling ----
    # Per-row work is tiny, so grid-step overhead dominates: use a single big tile for
    # small/medium batches, 512-row tiles above that.  min_grid=2 keeps an even parallel
    # grid so v7x's two TensorCores both get work.
    padded_min = _round_up(batch, 8)
    splits = max(int(min_grid), 1)
    if tile_b is None:
        if padded_min <= 1024 * splits:
            tile_b = _round_up(pl.cdiv(padded_min, splits), 8)
        else:
            tile_b = 512
    tile_b = max(8, _round_up(tile_b, 8))           # NB: production should keep tile_b >= 128
    padded_batch = _round_up(batch, tile_b)

    # ---- inputs: lane-concat once in the wrapper (audio | text), pad batch ----
    x = jnp.concatenate([audio_feat, text_feat], axis=1)
    pad_b = padded_batch - batch
    if pad_b:
        # Padded rows compute garbage-but-finite values independently; dropped on output.
        x = jnp.pad(x, ((0, pad_b), (0, 0)))

    # ---- parameter packing ----
    f32 = jnp.float32
    cast_w = lambda a: a.astype(weight_dtype)
    cast_b = lambda a: a.astype(f32)                # biases stay f32 (added to f32 accumulator)

    # Merged block-diagonal layer-1: audio rows -> first l1 cols, text rows -> last l1 cols.
    w1 = jnp.zeros((in_dim, 2 * l1), f32)
    w1 = w1.at[:audio_dim, :l1].set(params["aw1"])
    w1 = w1.at[audio_dim:, l1:].set(params["vw1"])
    w1 = cast_w(w1)
    b1 = cast_b(jnp.concatenate([params["ab1"], params["vb1"]], axis=1))

    # attention_mlp first-layer split (concat([audio, video]) -> first l2 rows = audio).
    mw1a = cast_w(params["mw1"][:l2, :])
    mw1v = cast_w(params["mw1"][l2:, :])

    # Fused output heads: vow|bow and aow|bow packed into disjoint lane ranges.
    def _place(w, start):
        return jnp.pad(w, ((0, 0), (start, out_lanes - start - w.shape[1])))

    hwv = cast_w(_place(params["vow"], 0) + _place(params["bow"], 2 * out))
    hwa = cast_w(_place(params["aow"], out) + _place(params["bow"], 2 * out))
    hb = cast_b(jnp.pad(
        jnp.concatenate([params["vob"], params["aob"], params["bob"]], axis=1),
        ((0, 0), (0, out_lanes - 3 * out))))

    flat_params = [
        w1, b1,
        cast_w(params["aw2"]), cast_b(params["ab2"]),
        cast_w(params["vw2"]), cast_b(params["vb2"]),
        mw1a, mw1v, cast_b(params["mb1"]),
        cast_w(params["mw2"]), cast_b(params["mb2"]),
        cast_w(params["attw"]), cast_b(params["attb"]),
        hwv, hwa, hb,
    ]

    kernel = functools.partial(_attention_kernel, l1=l1, out_dim=out, out_lanes=out_lanes)
    grid = (padded_batch // tile_b,)

    x_spec = pl.BlockSpec((tile_b, in_dim), lambda i: (i, 0))
    out_specs = pl.BlockSpec((tile_b, out_lanes), lambda i: (i, 0))
    out_shape = jax.ShapeDtypeStruct((padded_batch, out_lanes), out_dtype)

    # ---- advisory cost estimate ----
    per_row_macs = (in_dim * 2 * l1            # merged layer-1
                    + 2 * l1 * l2              # layer-2 of both MLPs
                    + 2 * l2 * l1 + l1 * l2    # attention MLP
                    + l2 * 2                   # fc_att
                    + 2 * l2 * out_lanes)      # fused heads
    weight_bytes = sum(int(p.size) * p.dtype.itemsize for p in flat_params)
    cost = pl.CostEstimate(
        flops=2 * padded_batch * per_row_macs,
        transcendentals=0,
        bytes_accessed=int(x.size * x.dtype.itemsize
                           + padded_batch * out_lanes * jnp.dtype(out_dtype).itemsize
                           + weight_bytes),
    )

    # Scoped-VMEM bump only needed for very large f32 tiles (v5e default is 16 MiB).
    vmem_limit = None
    if tile_b * (2 * l1 + in_dim + 6 * l2 + 2 * out_lanes) * 4 > 12 * (1 << 20):
        vmem_limit = 64 << 20
    cparams = pltpu.CompilerParams(
        dimension_semantics=("parallel",),
        vmem_limit_bytes=vmem_limit,
    )

    def _call(single_buffer_weights):
        if single_buffer_weights:
            # Grid-invariant weights: single-buffer them (no dead second VMEM copy).
            resident = lambda arr: pl.BlockSpec(arr.shape, lambda i: (0, 0),
                                                pipeline_mode=pl.Buffered(1))
        else:
            resident = lambda arr: pl.BlockSpec(arr.shape, lambda i: (0, 0))
        fn = pl.pallas_call(
            kernel,
            out_shape=out_shape,
            grid=grid,
            in_specs=[x_spec] + [resident(p) for p in flat_params],
            out_specs=out_specs,
            compiler_params=cparams,
            cost_estimate=cost,
        )
        return fn(x, *flat_params)

    try:
        out_all = _call(True)
    except Exception:
        # TODO(synk): fall back if this Pallas build rejects Buffered(1) resident specs;
        # default double-buffering is functionally identical (just ~1 MiB extra VMEM).
        out_all = _call(False)

    dt = audio_feat.dtype
    out_v = out_all[:batch, 0:out].astype(dt)
    out_a = out_all[:batch, out:2 * out].astype(dt)
    out_b = out_all[:batch, 2 * out:3 * out].astype(dt)
    return out_v, out_a, out_b


# --------------------------- parameter init -----------------------------------
def _init_linear(key, in_dim, out_dim):
    kw, kb = jax.random.split(key)
    # weight stored [in, out] (transposed from nn.Linear), deterministic small values
    w = jax.random.normal(kw, (in_dim, out_dim), jnp.float32) * 0.05
    b = jax.random.normal(kb, (1, out_dim), jnp.float32) * 0.05
    return w, b


def init_params(key, audio_dim, video_dim, output_dim1, layers=(256, 128)):
    keys = jax.random.split(key, 10)
    l1, l2 = layers
    p = {}
    p["aw1"], p["ab1"] = _init_linear(keys[0], audio_dim, l1)
    p["aw2"], p["ab2"] = _init_linear(keys[1], l1, l2)
    p["vw1"], p["vb1"] = _init_linear(keys[2], video_dim, l1)
    p["vw2"], p["vb2"] = _init_linear(keys[3], l1, l2)
    p["mw1"], p["mb1"] = _init_linear(keys[4], 2 * l2, l1)
    p["mw2"], p["mb2"] = _init_linear(keys[5], l1, l2)
    p["attw"], p["attb"] = _init_linear(keys[6], l2, 2)
    p["vow"], p["vob"] = _init_linear(keys[7], l2, output_dim1)
    p["aow"], p["aob"] = _init_linear(keys[8], l2, output_dim1)
    p["bow"], p["bob"] = _init_linear(keys[9], l2, output_dim1)
    return p


# ---------------------------- pure-JAX reference -------------------------------
def reference_forward(audio_feat, text_feat, p):
    lin = lambda x, w, b: x @ w + b
    lr = lambda x, w, b: jnp.maximum(lin(x, w, b), 0.0)
    a_h = lr(lr(audio_feat, p["aw1"], p["ab1"]), p["aw2"], p["ab2"])
    v_h = lr(lr(text_feat, p["vw1"], p["vb1"]), p["vw2"], p["vb2"])
    m1 = jnp.concatenate([a_h, v_h], axis=1)
    att_h = lr(lr(m1, p["mw1"], p["mb1"]), p["mw2"], p["mb2"])
    att = lin(att_h, p["attw"], p["attb"])
    m2 = jnp.stack([a_h, v_h], axis=2)                      # [B, l2, 2]
    fused = jnp.matmul(m2, att[:, :, None])[..., 0]         # [B, l2]
    return (lin(v_h, p["vow"], p["vob"]),
            lin(a_h, p["aow"], p["aob"]),
            lin(fused, p["bow"], p["bob"]))


# --------------------------------- main ----------------------------------------
if __name__ == "__main__":
    batch = 20          # deliberately not a multiple of 8 -> exercises the padding path
    audio_dim = 32
    text_dim = 32       # forward feeds text_feat into video_mlp, so video_dim == text_dim
    output_dim1 = 4

    key = jax.random.PRNGKey(0)
    k_param, k_audio, k_text = jax.random.split(key, 3)

    params = init_params(k_param, audio_dim, text_dim, output_dim1)
    audio_feat = jax.random.normal(k_audio, (batch, audio_dim), jnp.float32)
    text_feat = jax.random.normal(k_text, (batch, text_dim), jnp.float32)

    ref_v, ref_a, ref_b = reference_forward(audio_feat, text_feat, params)

    # 1) f32 weights, tiny explicit tile: exercises the multi-step batch grid + padding.
    out_v, out_a, out_b = attention_forward(
        audio_feat, text_feat, params, output_dim1,
        tile_b=8, weight_dtype=jnp.float32)
    jax.block_until_ready((out_v, out_a, out_b))
    assert jnp.allclose(out_v, ref_v, atol=2e-4, rtol=2e-3)
    assert jnp.allclose(out_a, ref_a, atol=2e-4, rtol=2e-3)
    assert jnp.allclose(out_b, ref_b, atol=2e-4, rtol=2e-3)

    # 2) production defaults: bf16 weights, bf16 output slab, one-big-tile grid=(1,).
    out_v16, out_a16, out_b16 = attention_forward(
        audio_feat, text_feat, params, output_dim1)
    jax.block_until_ready((out_v16, out_a16, out_b16))
    assert jnp.allclose(out_v16, ref_v, atol=3e-2, rtol=6e-2)
    assert jnp.allclose(out_a16, ref_a, atol=3e-2, rtol=6e-2)
    assert jnp.allclose(out_b16, ref_b, atol=3e-2, rtol=6e-2)

    print("KERNEL_OK")
</pallas_src>

<mosaic_0001>
module attributes {stable_mosaic.version = 11 : i64} {
  func.func @_attention_kernel(%arg0: i32, %arg1: memref<8x64xf32, #tpu.memory_space<vmem>>, %arg2: memref<64x512xf32, #tpu.memory_space<vmem>>, %arg3: memref<1x512xf32, #tpu.memory_space<vmem>>, %arg4: memref<256x128xf32, #tpu.memory_space<vmem>>, %arg5: memref<1x128xf32, #tpu.memory_space<vmem>>, %arg6: memref<256x128xf32, #tpu.memory_space<vmem>>, %arg7: memref<1x128xf32, #tpu.memory_space<vmem>>, %arg8: memref<128x256xf32, #tpu.memory_space<vmem>>, %arg9: memref<128x256xf32, #tpu.memory_space<vmem>>, %arg10: memref<1x256xf32, #tpu.memory_space<vmem>>, %arg11: memref<256x128xf32, #tpu.memory_space<vmem>>, %arg12: memref<1x128xf32, #tpu.memory_space<vmem>>, %arg13: memref<128x2xf32, #tpu.memory_space<vmem>>, %arg14: memref<1x2xf32, #tpu.memory_space<vmem>>, %arg15: memref<128x128xf32, #tpu.memory_space<vmem>>, %arg16: memref<128x128xf32, #tpu.memory_space<vmem>>, %arg17: memref<1x128xf32, #tpu.memory_space<vmem>>, %arg18: memref<8x128xf32, #tpu.memory_space<vmem>>) attributes {dimension_semantics = [#tpu.dimension_semantics<parallel>], iteration_bounds = array<i64: 3>, scalar_prefetch = 0 : i64, scratch_operands = 0 : i64, tpu.core_type = #tpu.core_type<tc>, window_params = [{transform_indices = @transform_0, window_bounds = array<i64: 8, 64>}, {pipeline_mode = #tpu.pipeline_mode<synchronous>, transform_indices = @transform_1, window_bounds = array<i64: 64, 512>}, {pipeline_mode = #tpu.pipeline_mode<synchronous>, transform_indices = @transform_2, window_bounds = array<i64: 1, 512>}, {pipeline_mode = #tpu.pipeline_mode<synchronous>, transform_indices = @transform_3, window_bounds = array<i64: 256, 128>}, {pipeline_mode = #tpu.pipeline_mode<synchronous>, transform_indices = @transform_4, window_bounds = array<i64: 1, 128>}, {pipeline_mode = #tpu.pipeline_mode<synchronous>, transform_indices = @transform_5, window_bounds = array<i64: 256, 128>}, {pipeline_mode = #tpu.pipeline_mode<synchronous>, transform_indices = @transform_6, window_bounds = array<i64: 1, 128>}, {pipeline_mode = #tpu.pipeline_mode<synchronous>, transform_indices = @transform_7, window_bounds = array<i64: 128, 256>}, {pipeline_mode = #tpu.pipeline_mode<synchronous>, transform_indices = @transform_8, window_bounds = array<i64: 128, 256>}, {pipeline_mode = #tpu.pipeline_mode<synchronous>, transform_indices = @transform_9, window_bounds = array<i64: 1, 256>}, {pipeline_mode = #tpu.pipeline_mode<synchronous>, transform_indices = @transform_10, window_bounds = array<i64: 256, 128>}, {pipeline_mode = #tpu.pipeline_mode<synchronous>, transform_indices = @transform_11, window_bounds = array<i64: 1, 128>}, {pipeline_mode = #tpu.pipeline_mode<synchronous>, transform_indices = @transform_12, window_bounds = array<i64: 128, 2>}, {pipeline_mode = #tpu.pipeline_mode<synchronous>, transform_indices = @transform_13, window_bounds = array<i64: 1, 2>}, {pipeline_mode = #tpu.pipeline_mode<synchronous>, transform_indices = @transform_14, window_bounds = array<i64: 128, 128>}, {pipeline_mode = #tpu.pipeline_mode<synchronous>, transform_indices = @transform_15, window_bounds = array<i64: 128, 128>}, {pipeline_mode = #tpu.pipeline_mode<synchronous>, transform_indices = @transform_16, window_bounds = array<i64: 1, 128>}, {transform_indices = @transform_17, window_bounds = array<i64: 8, 128>}]} {
    %c0 = arith.constant 0 : index
    %c0_0 = arith.constant 0 : index
    %0 = vector.load %arg1[%c0, %c0_0] : memref<8x64xf32, #tpu.memory_space<vmem>>, vector<8x64xf32>
    %c0_1 = arith.constant 0 : index
    %c0_2 = arith.constant 0 : index
    %1 = vector.load %arg2[%c0_1, %c0_2] : memref<64x512xf32, #tpu.memory_space<vmem>>, vector<64x512xf32>
    %cst = arith.constant dense<0.000000e+00> : vector<8x512xf32>
    %2 = tpu.matmul %0, %1, %cst {dimension_numbers = #tpu.dot_dimension_numbers<[1], [0], [0], [1], [0, 0, 1, 1], [], []>} : vector<8x64xf32>, vector<64x512xf32>, vector<8x512xf32> -> vector<8x512xf32>
    %c0_3 = arith.constant 0 : index
    %c0_4 = arith.constant 0 : index
    %3 = vector.load %arg3[%c0_3, %c0_4] : memref<1x512xf32, #tpu.memory_space<vmem>>, vector<1x512xf32>
    %4 = vector.broadcast %3 : vector<1x512xf32> to vector<8x512xf32>
    %5 = arith.addf %2, %4 : vector<8x512xf32>
    %cst_5 = arith.constant 0.000000e+00 : f32
    %6 = vector.broadcast %cst_5 : f32 to vector<8x512xf32>
    %7 = arith.maximumf %5, %6 : vector<8x512xf32>
    %8 = vector.extract_strided_slice %7 {offsets = [0, 0], sizes = [8, 256], strides = [1, 1]} : vector<8x512xf32> to vector<8x256xf32>
    %9 = vector.extract_strided_slice %7 {offsets = [0, 256], sizes = [8, 256], strides = [1, 1]} : vector<8x512xf32> to vector<8x256xf32>
    %c0_6 = arith.constant 0 : index
    %c0_7 = arith.constant 0 : index
    %10 = vector.load %arg4[%c0_6, %c0_7] : memref<256x128xf32, #tpu.memory_space<vmem>>, vector<256x128xf32>
    %cst_8 = arith.constant dense<0.000000e+00> : vector<8x128xf32>
    %11 = tpu.matmul %8, %10, %cst_8 {dimension_numbers = #tpu.dot_dimension_numbers<[1], [0], [0], [1], [0, 0, 1, 1], [], []>} : vector<8x256xf32>, vector<256x128xf32>, vector<8x128xf32> -> vector<8x128xf32>
    %c0_9 = arith.constant 0 : index
    %c0_10 = arith.constant 0 : index
    %12 = vector.load %arg5[%c0_9, %c0_10] : memref<1x128xf32, #tpu.memory_space<vmem>>, vector<1x128xf32>
    %13 = vector.broadcast %12 : vector<1x128xf32> to vector<8x128xf32>
    %14 = arith.addf %11, %13 : vector<8x128xf32>
    %cst_11 = arith.constant 0.000000e+00 : f32
    %15 = vector.broadcast %cst_11 : f32 to vector<8x128xf32>
    %16 = arith.maximumf %14, %15 : vector<8x128xf32>
    %c0_12 = arith.constant 0 : index
    %c0_13 = arith.constant 0 : index
    %17 = vector.load %arg6[%c0_12, %c0_13] : memref<256x128xf32, #tpu.memory_space<vmem>>, vector<256x128xf32>
    %cst_14 = arith.constant dense<0.000000e+00> : vector<8x128xf32>
    %18 = tpu.matmul %9, %17, %cst_14 {dimension_numbers = #tpu.dot_dimension_numbers<[1], [0], [0], [1], [0, 0, 1, 1], [], []>} : vector<8x256xf32>, vector<256x128xf32>, vector<8x128xf32> -> vector<8x128xf32>
    %c0_15 = arith.constant 0 : index
    %c0_16 = arith.constant 0 : index
    %19 = vector.load %arg7[%c0_15, %c0_16] : memref<1x128xf32, #tpu.memory_space<vmem>>, vector<1x128xf32>
    %20 = vector.broadcast %19 : vector<1x128xf32> to vector<8x128xf32>
    %21 = arith.addf %18, %20 : vector<8x128xf32>
    %cst_17 = arith.constant 0.000000e+00 : f32
    %22 = vector.broadcast %cst_17 : f32 to vector<8x128xf32>
    %23 = arith.maximumf %21, %22 : vector<8x128xf32>
    %c0_18 = arith.constant 0 : index
    %c0_19 = arith.constant 0 : index
    %24 = vector.load %arg8[%c0_18, %c0_19] : memref<128x256xf32, #tpu.memory_space<vmem>>, vector<128x256xf32>
    %cst_20 = arith.constant dense<0.000000e+00> : vector<8x256xf32>
    %25 = tpu.matmul %16, %24, %cst_20 {dimension_numbers = #tpu.dot_dimension_numbers<[1], [0], [0], [1], [0, 0, 1, 1], [], []>} : vector<8x128xf32>, vector<128x256xf32>, vector<8x256xf32> -> vector<8x256xf32>
    %c0_21 = arith.constant 0 : index
    %c0_22 = arith.constant 0 : index
    %26 = vector.load %arg9[%c0_21, %c0_22] : memref<128x256xf32, #tpu.memory_space<vmem>>, vector<128x256xf32>
    %cst_23 = arith.constant dense<0.000000e+00> : vector<8x256xf32>
    %27 = tpu.matmul %23, %26, %cst_23 {dimension_numbers = #tpu.dot_dimension_numbers<[1], [0], [0], [1], [0, 0, 1, 1], [], []>} : vector<8x128xf32>, vector<128x256xf32>, vector<8x256xf32> -> vector<8x256xf32>
    %28 = arith.addf %25, %27 : vector<8x256xf32>
    %c0_24 = arith.constant 0 : index
    %c0_25 = arith.constant 0 : index
    %29 = vector.load %arg10[%c0_24, %c0_25] : memref<1x256xf32, #tpu.memory_space<vmem>>, vector<1x256xf32>
    %30 = vector.broadcast %29 : vector<1x256xf32> to vector<8x256xf32>
    %31 = arith.addf %28, %30 : vector<8x256xf32>
    %cst_26 = arith.constant 0.000000e+00 : f32
    %32 = vector.broadcast %cst_26 : f32 to vector<8x256xf32>
    %33 = arith.maximumf %31, %32 : vector<8x256xf32>
    %c0_27 = arith.constant 0 : index
    %c0_28 = arith.constant 0 : index
    %34 = vector.load %arg11[%c0_27, %c0_28] : memref<256x128xf32, #tpu.memory_space<vmem>>, vector<256x128xf32>
    %cst_29 = arith.constant dense<0.000000e+00> : vector<8x128xf32>
    %35 = tpu.matmul %33, %34, %cst_29 {dimension_numbers = #tpu.dot_dimension_numbers<[1], [0], [0], [1], [0, 0, 1, 1], [], []>} : vector<8x256xf32>, vector<256x128xf32>, vector<8x128xf32> -> vector<8x128xf32>
    %c0_30 = arith.constant 0 : index
    %c0_31 = arith.constant 0 : index
    %36 = vector.load %arg12[%c0_30, %c0_31] : memref<1x128xf32, #tpu.memory_space<vmem>>, vector<1x128xf32>
    %37 = vector.broadcast %36 : vector<1x128xf32> to vector<8x128xf32>
    %38 = arith.addf %35, %37 : vector<8x128xf32>
    %cst_32 = arith.constant 0.000000e+00 : f32
    %39 = vector.broadcast %cst_32 : f32 to vector<8x128xf32>
    %40 = arith.maximumf %38, %39 : vector<8x128xf32>
    %c0_33 = arith.constant 0 : index
    %c0_34 = arith.constant 0 : index
    %41 = vector.load %arg13[%c0_33, %c0_34] : memref<128x2xf32, #tpu.memory_space<vmem>>, vector<128x2xf32>
    %cst_35 = arith.constant dense<0.000000e+00> : vector<8x2xf32>
    %42 = tpu.matmul %40, %41, %cst_35 {dimension_numbers = #tpu.dot_dimension_numbers<[1], [0], [0], [1], [0, 0, 1, 1], [], []>} : vector<8x128xf32>, vector<128x2xf32>, vector<8x2xf32> -> vector<8x2xf32>
    %c0_36 = arith.constant 0 : index
    %c0_37 = arith.constant 0 : index
    %43 = vector.load %arg14[%c0_36, %c0_37] : memref<1x2xf32, #tpu.memory_space<vmem>>, vector<1x2xf32>
    %44 = vector.broadcast %43 : vector<1x2xf32> to vector<8x2xf32>
    %45 = arith.addf %42, %44 : vector<8x2xf32>
    %46 = vector.extract_strided_slice %45 {offsets = [0, 0], sizes = [8, 1], strides = [1, 1]} : vector<8x2xf32> to vector<8x1xf32>
    %47 = vector.extract_strided_slice %45 {offsets = [0, 1], sizes = [8, 1], strides = [1, 1]} : vector<8x2xf32> to vector<8x1xf32>
    %c0_38 = arith.constant 0 : index
    %c0_39 = arith.constant 0 : index
    %48 = vector.load %arg15[%c0_38, %c0_39] : memref<128x128xf32, #tpu.memory_space<vmem>>, vector<128x128xf32>
    %cst_40 = arith.constant dense<0.000000e+00> : vector<8x128xf32>
    %49 = tpu.matmul %23, %48, %cst_40 {dimension_numbers = #tpu.dot_dimension_numbers<[1], [0], [0], [1], [0, 0, 1, 1], [], []>} : vector<8x128xf32>, vector<128x128xf32>, vector<8x128xf32> -> vector<8x128xf32>
    %c0_41 = arith.constant 0 : index
    %c0_42 = arith.constant 0 : index
    %50 = vector.load %arg16[%c0_41, %c0_42] : memref<128x128xf32, #tpu.memory_space<vmem>>, vector<128x128xf32>
    %cst_43 = arith.constant dense<0.000000e+00> : vector<8x128xf32>
    %51 = tpu.matmul %16, %50, %cst_43 {dimension_numbers = #tpu.dot_dimension_numbers<[1], [0], [0], [1], [0, 0, 1, 1], [], []>} : vector<8x128xf32>, vector<128x128xf32>, vector<8x128xf32> -> vector<8x128xf32>
    %52 = tpu.iota {dimensions = array<i32: 1>} : vector<1x128xi32>
    %c8_i32 = arith.constant 8 : i32
    %53 = vector.broadcast %c8_i32 : i32 to vector<1x128xi32>
    %54 = arith.cmpi sge, %52, %53 : vector<1x128xi32>
    %c12_i32 = arith.constant 12 : i32
    %55 = vector.broadcast %c12_i32 : i32 to vector<1x128xi32>
    %56 = arith.cmpi slt, %52, %55 : vector<1x128xi32>
    %57 = arith.andi %54, %56 : vector<1x128xi1>
    %cst_44 = arith.constant 1.000000e+00 : f32
    %58 = vector.shape_cast %57 : vector<1x128xi1> to vector<1x128xi1>
    %59 = vector.broadcast %58 : vector<1x128xi1> to vector<8x128xi1>
    %60 = vector.shape_cast %47 : vector<8x1xf32> to vector<8x1xf32>
    %61 = vector.broadcast %60 : vector<8x1xf32> to vector<8x128xf32>
    %62 = vector.broadcast %cst_44 : f32 to vector<8x128xf32>
    %63 = arith.select %59, %61, %62 : vector<8x128xi1>, vector<8x128xf32>
    %64 = arith.mulf %49, %63 : vector<8x128xf32>
    %cst_45 = arith.constant 1.000000e+00 : f32
    %65 = vector.shape_cast %57 : vector<1x128xi1> to vector<1x128xi1>
    %66 = vector.broadcast %65 : vector<1x128xi1> to vector<8x128xi1>
    %67 = vector.shape_cast %46 : vector<8x1xf32> to vector<8x1xf32>
    %68 = vector.broadcast %67 : vector<8x1xf32> to vector<8x128xf32>
    %69 = vector.broadcast %cst_45 : f32 to vector<8x128xf32>
    %70 = arith.select %66, %68, %69 : vector<8x128xi1>, vector<8x128xf32>
    %71 = arith.mulf %51, %70 : vector<8x128xf32>
    %72 = arith.addf %64, %71 : vector<8x128xf32>
    %c0_46 = arith.constant 0 : index
    %c0_47 = arith.constant 0 : index
    %73 = vector.load %arg17[%c0_46, %c0_47] : memref<1x128xf32, #tpu.memory_space<vmem>>, vector<1x128xf32>
    %74 = vector.broadcast %73 : vector<1x128xf32> to vector<8x128xf32>
    %75 = arith.addf %72, %74 : vector<8x128xf32>
    %c0_48 = arith.constant 0 : index
    %c0_49 = arith.constant 0 : index
    %76 = vector.load %arg18[%c0_48, %c0_49] : memref<8x128xf32, #tpu.memory_space<vmem>>, vector<8x128xf32>
    tpu.vector_store %arg18[%c0_48, %c0_49], %75 {strides = array<i32>} : memref<8x128xf32, #tpu.memory_space<vmem>>, vector<8x128xf32>,
    return
  }
  func.func @transform_0(%arg0: i32) -> (i32, i32) {
    %c0_i32 = arith.constant 0 : i32
    %c0_i32_0 = arith.constant 0 : i32
    return %arg0, %c0_i32 : i32, i32
  }
  func.func @transform_1(%arg0: i32) -> (i32, i32) {
    %c0_i32 = arith.constant 0 : i32
    %c0_i32_0 = arith.constant 0 : i32
    %c0_i32_1 = arith.constant 0 : i32
    return %c0_i32, %c0_i32_0 : i32, i32
  }
  func.func @transform_2(%arg0: i32) -> (i32, i32) {
    %c0_i32 = arith.constant 0 : i32
    %c0_i32_0 = arith.constant 0 : i32
    %c0_i32_1 = arith.constant 0 : i32
    return %c0_i32, %c0_i32_0 : i32, i32
  }
  func.func @transform_3(%arg0: i32) -> (i32, i32) {
    %c0_i32 = arith.constant 0 : i32
    %c0_i32_0 = arith.constant 0 : i32
    %c0_i32_1 = arith.constant 0 : i32
    return %c0_i32, %c0_i32_0 : i32, i32
  }
  func.func @transform_4(%arg0: i32) -> (i32, i32) {
    %c0_i32 = arith.constant 0 : i32
    %c0_i32_0 = arith.constant 0 : i32
    %c0_i32_1 = arith.constant 0 : i32
    return %c0_i32, %c0_i32_0 : i32, i32
  }
  func.func @transform_5(%arg0: i32) -> (i32, i32) {
    %c0_i32 = arith.constant 0 : i32
    %c0_i32_0 = arith.constant 0 : i32
    %c0_i32_1 = arith.constant 0 : i32
    return %c0_i32, %c0_i32_0 : i32, i32
  }
  func.func @transform_6(%arg0: i32) -> (i32, i32) {
    %c0_i32 = arith.constant 0 : i32
    %c0_i32_0 = arith.constant 0 : i32
    %c0_i32_1 = arith.constant 0 : i32
    return %c0_i32, %c0_i32_0 : i32, i32
  }
  func.func @transform_7(%arg0: i32) -> (i32, i32) {
    %c0_i32 = arith.constant 0 : i32
    %c0_i32_0 = arith.constant 0 : i32
    %c0_i32_1 = arith.constant 0 : i32
    return %c0_i32, %c0_i32_0 : i32, i32
  }
  func.func @transform_8(%arg0: i32) -> (i32, i32) {
    %c0_i32 = arith.constant 0 : i32
    %c0_i32_0 = arith.constant 0 : i32
    %c0_i32_1 = arith.constant 0 : i32
    return %c0_i32, %c0_i32_0 : i32, i32
  }
  func.func @transform_9(%arg0: i32) -> (i32, i32) {
    %c0_i32 = arith.constant 0 : i32
    %c0_i32_0 = arith.constant 0 : i32
    %c0_i32_1 = arith.constant 0 : i32
    return %c0_i32, %c0_i32_0 : i32, i32
  }
  func.func @transform_10(%arg0: i32) -> (i32, i32) {
    %c0_i32 = arith.constant 0 : i32
    %c0_i32_0 = arith.constant 0 : i32
    %c0_i32_1 = arith.constant 0 : i32
    return %c0_i32, %c0_i32_0 : i32, i32
  }
  func.func @transform_11(%arg0: i32) -> (i32, i32) {
    %c0_i32 = arith.constant 0 : i32
    %c0_i32_0 = arith.constant 0 : i32
    %c0_i32_1 = arith.constant 0 : i32
    return %c0_i32, %c0_i32_0 : i32, i32
  }
  func.func @transform_12(%arg0: i32) -> (i32, i32) {
    %c0_i32 = arith.constant 0 : i32
    %c0_i32_0 = arith.constant 0 : i32
    %c0_i32_1 = arith.constant 0 : i32
    return %c0_i32, %c0_i32_0 : i32, i32
  }
  func.func @transform_13(%arg0: i32) -> (i32, i32) {
    %c0_i32 = arith.constant 0 : i32
    %c0_i32_0 = arith.constant 0 : i32
    %c0_i32_1 = arith.constant 0 : i32
    return %c0_i32, %c0_i32_0 : i32, i32
  }
  func.func @transform_14(%arg0: i32) -> (i32, i32) {
    %c0_i32 = arith.constant 0 : i32
    %c0_i32_0 = arith.constant 0 : i32
    %c0_i32_1 = arith.constant 0 : i32
    return %c0_i32, %c0_i32_0 : i32, i32
  }
  func.func @transform_15(%arg0: i32) -> (i32, i32) {
    %c0_i32 = arith.constant 0 : i32
    %c0_i32_0 = arith.constant 0 : i32
    %c0_i32_1 = arith.constant 0 : i32
    return %c0_i32, %c0_i32_0 : i32, i32
  }
  func.func @transform_16(%arg0: i32) -> (i32, i32) {
    %c0_i32 = arith.constant 0 : i32
    %c0_i32_0 = arith.constant 0 : i32
    %c0_i32_1 = arith.constant 0 : i32
    return %c0_i32, %c0_i32_0 : i32, i32
  }
  func.func @transform_17(%arg0: i32) -> (i32, i32) {
    %c0_i32 = arith.constant 0 : i32
    %c0_i32_0 = arith.constant 0 : i32
    return %arg0, %c0_i32 : i32, i32
  }
}

module attributes {stable_mosaic.version = 11 : i64} {
  func.func @_attention_kernel(%arg0: i32, %arg1: memref<8x64xf32, #tpu.memory_space<vmem>>, %arg2: memref<64x512xf32, #tpu.memory_space<vmem>>, %arg3: memref<1x512xf32, #tpu.memory_space<vmem>>, %arg4: memref<256x128xf32, #tpu.memory_space<vmem>>, %arg5: memref<1x128xf32, #tpu.memory_space<vmem>>, %arg6: memref<256x128xf32, #tpu.memory_space<vmem>>, %arg7: memref<1x128xf32, #tpu.memory_space<vmem>>, %arg8: memref<128x256xf32, #tpu.memory_space<vmem>>, %arg9: memref<128x256xf32, #tpu.memory_space<vmem>>, %arg10: memref<1x256xf32, #tpu.memory_space<vmem>>, %arg11: memref<256x128xf32, #tpu.memory_space<vmem>>, %arg12: memref<1x128xf32, #tpu.memory_space<vmem>>, %arg13: memref<128x2xf32, #tpu.memory_space<vmem>>, %arg14: memref<1x2xf32, #tpu.memory_space<vmem>>, %arg15: memref<128x128xf32, #tpu.memory_space<vmem>>, %arg16: memref<128x128xf32, #tpu.memory_space<vmem>>, %arg17: memref<1x128xf32, #tpu.memory_space<vmem>>, %arg18: memref<8x128xf32, #tpu.memory_space<vmem>>) attributes {dimension_semantics = [#tpu.dimension_semantics<parallel>], iteration_bounds = array<i64: 3>, scalar_prefetch = 0 : i64, scratch_operands = 0 : i64, tpu.core_type = #tpu.core_type<tc>, window_params = [{transform_indices = @transform_0, window_bounds = array<i64: 8, 64>}, {pipeline_mode = #tpu.pipeline_mode<synchronous>, transform_indices = @transform_1, window_bounds = array<i64: 64, 512>}, {pipeline_mode = #tpu.pipeline_mode<synchronous>, transform_indices = @transform_2, window_bounds = array<i64: 1, 512>}, {pipeline_mode = #tpu.pipeline_mode<synchronous>, transform_indices = @transform_3, window_bounds = array<i64: 256, 128>}, {pipeline_mode = #tpu.pipeline_mode<synchronous>, transform_indices = @transform_4, window_bounds = array<i64: 1, 128>}, {pipeline_mode = #tpu.pipeline_mode<synchronous>, transform_indices = @transform_5, window_bounds = array<i64: 256, 128>}, {pipeline_mode = #tpu.pipeline_mode<synchronous>, transform_indices = @transform_6, window_bounds = array<i64: 1, 128>}, {pipeline_mode = #tpu.pipeline_mode<synchronous>, transform_indices = @transform_7, window_bounds = array<i64: 128, 256>}, {pipeline_mode = #tpu.pipeline_mode<synchronous>, transform_indices = @transform_8, window_bounds = array<i64: 128, 256>}, {pipeline_mode = #tpu.pipeline_mode<synchronous>, transform_indices = @transform_9, window_bounds = array<i64: 1, 256>}, {pipeline_mode = #tpu.pipeline_mode<synchronous>, transform_indices = @transform_10, window_bounds = array<i64: 256, 128>}, {pipeline_mode = #tpu.pipeline_mode<synchronous>, transform_indices = @transform_11, window_bounds = array<i64: 1, 128>}, {pipeline_mode = #tpu.pipeline_mode<synchronous>, transform_indices = @transform_12, window_bounds = array<i64: 128, 2>}, {pipeline_mode = #tpu.pipeline_mode<synchronous>, transform_indices = @transform_13, window_bounds = array<i64: 1, 2>}, {pipeline_mode = #tpu.pipeline_mode<synchronous>, transform_indices = @transform_14, window_bounds = array<i64: 128, 128>}, {pipeline_mode = #tpu.pipeline_mode<synchronous>, transform_indices = @transform_15, window_bounds = array<i64: 128, 128>}, {pipeline_mode = #tpu.pipeline_mode<synchronous>, transform_indices = @transform_16, window_bounds = array<i64: 1, 128>}, {transform_indices = @transform_17, window_bounds = array<i64: 8, 128>}]} {
    %c0 = arith.constant 0 : index
    %c0_0 = arith.constant 0 : index
    %0 = vector.load %arg1[%c0, %c0_0] : memref<8x64xf32, #tpu.memory_space<vmem>>, vector<8x64xf32>
    %c0_1 = arith.constant 0 : index
    %c0_2 = arith.constant 0 : index
    %1 = vector.load %arg2[%c0_1, %c0_2] : memref<64x512xf32, #tpu.memory_space<vmem>>, vector<64x512xf32>
    %cst = arith.constant dense<0.000000e+00> : vector<8x512xf32>
    %2 = tpu.matmul %0, %1, %cst {dimension_numbers = #tpu.dot_dimension_numbers<[1], [0], [0], [1], [0, 0, 1, 1], [], []>} : vector<8x64xf32>, vector<64x512xf32>, vector<8x512xf32> -> vector<8x512xf32>
    %c0_3 = arith.constant 0 : index
    %c0_4 = arith.constant 0 : index
    %3 = vector.load %arg3[%c0_3, %c0_4] : memref<1x512xf32, #tpu.memory_space<vmem>>, vector<1x512xf32>
    %4 = vector.broadcast %3 : vector<1x512xf32> to vector<8x512xf32>
    %5 = arith.addf %2, %4 : vector<8x512xf32>
    %cst_5 = arith.constant 0.000000e+00 : f32
    %6 = vector.broadcast %cst_5 : f32 to vector<8x512xf32>
    %7 = arith.maximumf %5, %6 : vector<8x512xf32>
    %8 = vector.extract_strided_slice %7 {offsets = [0, 0], sizes = [8, 256], strides = [1, 1]} : vector<8x512xf32> to vector<8x256xf32>
    %9 = vector.extract_strided_slice %7 {offsets = [0, 256], sizes = [8, 256], strides = [1, 1]} : vector<8x512xf32> to vector<8x256xf32>
    %c0_6 = arith.constant 0 : index
    %c0_7 = arith.constant 0 : index
    %10 = vector.load %arg4[%c0_6, %c0_7] : memref<256x128xf32, #tpu.memory_space<vmem>>, vector<256x128xf32>
    %cst_8 = arith.constant dense<0.000000e+00> : vector<8x128xf32>
    %11 = tpu.matmul %8, %10, %cst_8 {dimension_numbers = #tpu.dot_dimension_numbers<[1], [0], [0], [1], [0, 0, 1, 1], [], []>} : vector<8x256xf32>, vector<256x128xf32>, vector<8x128xf32> -> vector<8x128xf32>
    %c0_9 = arith.constant 0 : index
    %c0_10 = arith.constant 0 : index
    %12 = vector.load %arg5[%c0_9, %c0_10] : memref<1x128xf32, #tpu.memory_space<vmem>>, vector<1x128xf32>
    %13 = vector.broadcast %12 : vector<1x128xf32> to vector<8x128xf32>
    %14 = arith.addf %11, %13 : vector<8x128xf32>
    %cst_11 = arith.constant 0.000000e+00 : f32
    %15 = vector.broadcast %cst_11 : f32 to vector<8x128xf32>
    %16 = arith.maximumf %14, %15 : vector<8x128xf32>
    %c0_12 = arith.constant 0 : index
    %c0_13 = arith.constant 0 : index
    %17 = vector.load %arg6[%c0_12, %c0_13] : memref<256x128xf32, #tpu.memory_space<vmem>>, vector<256x128xf32>
    %cst_14 = arith.constant dense<0.000000e+00> : vector<8x128xf32>
    %18 = tpu.matmul %9, %17, %cst_14 {dimension_numbers = #tpu.dot_dimension_numbers<[1], [0], [0], [1], [0, 0, 1, 1], [], []>} : vector<8x256xf32>, vector<256x128xf32>, vector<8x128xf32> -> vector<8x128xf32>
    %c0_15 = arith.constant 0 : index
    %c0_16 = arith.constant 0 : index
    %19 = vector.load %arg7[%c0_15, %c0_16] : memref<1x128xf32, #tpu.memory_space<vmem>>, vector<1x128xf32>
    %20 = vector.broadcast %19 : vector<1x128xf32> to vector<8x128xf32>
    %21 = arith.addf %18, %20 : vector<8x128xf32>
    %cst_17 = arith.constant 0.000000e+00 : f32
    %22 = vector.broadcast %cst_17 : f32 to vector<8x128xf32>
    %23 = arith.maximumf %21, %22 : vector<8x128xf32>
    %c0_18 = arith.constant 0 : index
    %c0_19 = arith.constant 0 : index
    %24 = vector.load %arg8[%c0_18, %c0_19] : memref<128x256xf32, #tpu.memory_space<vmem>>, vector<128x256xf32>
    %cst_20 = arith.constant dense<0.000000e+00> : vector<8x256xf32>
    %25 = tpu.matmul %16, %24, %cst_20 {dimension_numbers = #tpu.dot_dimension_numbers<[1], [0], [0], [1], [0, 0, 1, 1], [], []>} : vector<8x128xf32>, vector<128x256xf32>, vector<8x256xf32> -> vector<8x256xf32>
    %c0_21 = arith.constant 0 : index
    %c0_22 = arith.constant 0 : index
    %26 = vector.load %arg9[%c0_21, %c0_22] : memref<128x256xf32, #tpu.memory_space<vmem>>, vector<128x256xf32>
    %cst_23 = arith.constant dense<0.000000e+00> : vector<8x256xf32>
    %27 = tpu.matmul %23, %26, %cst_23 {dimension_numbers = #tpu.dot_dimension_numbers<[1], [0], [0], [1], [0, 0, 1, 1], [], []>} : vector<8x128xf32>, vector<128x256xf32>, vector<8x256xf32> -> vector<8x256xf32>
    %28 = arith.addf %25, %27 : vector<8x256xf32>
    %c0_24 = arith.constant 0 : index
    %c0_25 = arith.constant 0 : index
    %29 = vector.load %arg10[%c0_24, %c0_25] : memref<1x256xf32, #tpu.memory_space<vmem>>, vector<1x256xf32>
    %30 = vector.broadcast %29 : vector<1x256xf32> to vector<8x256xf32>
    %31 = arith.addf %28, %30 : vector<8x256xf32>
    %cst_26 = arith.constant 0.000000e+00 : f32
    %32 = vector.broadcast %cst_26 : f32 to vector<8x256xf32>
    %33 = arith.maximumf %31, %32 : vector<8x256xf32>
    %c0_27 = arith.constant 0 : index
    %c0_28 = arith.constant 0 : index
    %34 = vector.load %arg11[%c0_27, %c0_28] : memref<256x128xf32, #tpu.memory_space<vmem>>, vector<256x128xf32>
    %cst_29 = arith.constant dense<0.000000e+00> : vector<8x128xf32>
    %35 = tpu.matmul %33, %34, %cst_29 {dimension_numbers = #tpu.dot_dimension_numbers<[1], [0], [0], [1], [0, 0, 1, 1], [], []>} : vector<8x256xf32>, vector<256x128xf32>, vector<8x128xf32> -> vector<8x128xf32>
    %c0_30 = arith.constant 0 : index
    %c0_31 = arith.constant 0 : index
    %36 = vector.load %arg12[%c0_30, %c0_31] : memref<1x128xf32, #tpu.memory_space<vmem>>, vector<1x128xf32>
    %37 = vector.broadcast %36 : vector<1x128xf32> to vector<8x128xf32>
    %38 = arith.addf %35, %37 : vector<8x128xf32>
    %cst_32 = arith.constant 0.000000e+00 : f32
    %39 = vector.broadcast %cst_32 : f32 to vector<8x128xf32>
    %40 = arith.maximumf %38, %39 : vector<8x128xf32>
    %c0_33 = arith.constant 0 : index
    %c0_34 = arith.constant 0 : index
    %41 = vector.load %arg13[%c0_33, %c0_34] : memref<128x2xf32, #tpu.memory_space<vmem>>, vector<128x2xf32>
    %cst_35 = arith.constant dense<0.000000e+00> : vector<8x2xf32>
    %42 = tpu.matmul %40, %41, %cst_35 {dimension_numbers = #tpu.dot_dimension_numbers<[1], [0], [0], [1], [0, 0, 1, 1], [], []>} : vector<8x128xf32>, vector<128x2xf32>, vector<8x2xf32> -> vector<8x2xf32>
    %c0_36 = arith.constant 0 : index
    %c0_37 = arith.constant 0 : index
    %43 = vector.load %arg14[%c0_36, %c0_37] : memref<1x2xf32, #tpu.memory_space<vmem>>, vector<1x2xf32>
    %44 = vector.broadcast %43 : vector<1x2xf32> to vector<8x2xf32>
    %45 = arith.addf %42, %44 : vector<8x2xf32>
    %46 = vector.extract_strided_slice %45 {offsets = [0, 0], sizes = [8, 1], strides = [1, 1]} : vector<8x2xf32> to vector<8x1xf32>
    %47 = vector.extract_strided_slice %45 {offsets = [0, 1], sizes = [8, 1], strides = [1, 1]} : vector<8x2xf32> to vector<8x1xf32>
    %c0_38 = arith.constant 0 : index
    %c0_39 = arith.constant 0 : index
    %48 = vector.load %arg15[%c0_38, %c0_39] : memref<128x128xf32, #tpu.memory_space<vmem>>, vector<128x128xf32>
    %cst_40 = arith.constant dense<0.000000e+00> : vector<8x128xf32>
    %49 = tpu.matmul %23, %48, %cst_40 {dimension_numbers = #tpu.dot_dimension_numbers<[1], [0], [0], [1], [0, 0, 1, 1], [], []>} : vector<8x128xf32>, vector<128x128xf32>, vector<8x128xf32> -> vector<8x128xf32>
    %c0_41 = arith.constant 0 : index
    %c0_42 = arith.constant 0 : index
    %50 = vector.load %arg16[%c0_41, %c0_42] : memref<128x128xf32, #tpu.memory_space<vmem>>, vector<128x128xf32>
    %cst_43 = arith.constant dense<0.000000e+00> : vector<8x128xf32>
    %51 = tpu.matmul %16, %50, %cst_43 {dimension_numbers = #tpu.dot_dimension_numbers<[1], [0], [0], [1], [0, 0, 1, 1], [], []>} : vector<8x128xf32>, vector<128x128xf32>, vector<8x128xf32> -> vector<8x128xf32>
    %52 = tpu.iota {dimensions = array<i32: 1>} : vector<1x128xi32>
    %c8_i32 = arith.constant 8 : i32
    %53 = vector.broadcast %c8_i32 : i32 to vector<1x128xi32>
    %54 = arith.cmpi sge, %52, %53 : vector<1x128xi32>
    %c12_i32 = arith.constant 12 : i32
    %55 = vector.broadcast %c12_i32 : i32 to vector<1x128xi32>
    %56 = arith.cmpi slt, %52, %55 : vector<1x128xi32>
    %57 = arith.andi %54, %56 : vector<1x128xi1>
    %cst_44 = arith.constant 1.000000e+00 : f32
    %58 = vector.shape_cast %57 : vector<1x128xi1> to vector<1x128xi1>
    %59 = vector.broadcast %58 : vector<1x128xi1> to vector<8x128xi1>
    %60 = vector.shape_cast %47 : vector<8x1xf32> to vector<8x1xf32>
    %61 = vector.broadcast %60 : vector<8x1xf32> to vector<8x128xf32>
    %62 = vector.broadcast %cst_44 : f32 to vector<8x128xf32>
    %63 = arith.select %59, %61, %62 : vector<8x128xi1>, vector<8x128xf32>
    %64 = arith.mulf %49, %63 : vector<8x128xf32>
    %cst_45 = arith.constant 1.000000e+00 : f32
    %65 = vector.shape_cast %57 : vector<1x128xi1> to vector<1x128xi1>
    %66 = vector.broadcast %65 : vector<1x128xi1> to vector<8x128xi1>
    %67 = vector.shape_cast %46 : vector<8x1xf32> to vector<8x1xf32>
    %68 = vector.broadcast %67 : vector<8x1xf32> to vector<8x128xf32>
    %69 = vector.broadcast %cst_45 : f32 to vector<8x128xf32>
    %70 = arith.select %66, %68, %69 : vector<8x128xi1>, vector<8x128xf32>
    %71 = arith.mulf %51, %70 : vector<8x128xf32>
    %72 = arith.addf %64, %71 : vector<8x128xf32>
    %c0_46 = arith.constant 0 : index
    %c0_47 = arith.constant 0 : index
    %73 = vector.load %arg17[%c0_46, %c0_47] : memref<1x128xf32, #tpu.memory_space<vmem>>, vector<1x128xf32>
    %74 = vector.broadcast %73 : vector<1x128xf32> to vector<8x128xf32>
    %75 = arith.addf %72, %74 : vector<8x128xf32>
    %c0_48 = arith.constant 0 : index
    %c0_49 = arith.constant 0 : index
    %76 = vector.load %arg18[%c0_48, %c0_49] : memref<8x128xf32, #tpu.memory_space<vmem>>, vector<8x128xf32>
    tpu.vector_store %arg18[%c0_48, %c0_49], %75 {strides = array<i32>} : memref<8x128xf32, #tpu.memory_space<vmem>>, vector<8x128xf32>,
    return
  }
  func.func @transform_0(%arg0: i32) -> (i32, i32) {
    %c0_i32 = arith.constant 0 : i32
    %c0_i32_0 = arith.constant 0 : i32
    return %arg0, %c0_i32 : i32, i32
  }
  func.func @transform_1(%arg0: i32) -> (i32, i32) {
    %c0_i32 = arith.constant 0 : i32
    %c0_i32_0 = arith.constant 0 : i32
    %c0_i32_1 = arith.constant 0 : i32
    return %c0_i32, %c0_i32_0 : i32, i32
  }
  func.func @transform_2(%arg0: i32) -> (i32, i32) {
    %c0_i32 = arith.constant 0 : i32
    %c0_i32_0 = arith.constant 0 : i32
    %c0_i32_1 = arith.constant 0 : i32
    return %c0_i32, %c0_i32_0 : i32, i32
  }
  func.func @transform_3(%arg0: i32) -> (i32, i32) {
    %c0_i32 = arith.constant 0 : i32
    %c0_i32_0 = arith.constant 0 : i32
    %c0_i32_1 = arith.constant 0 : i32
    return %c0_i32, %c0_i32_0 : i32, i32
  }
  func.func @transform_4(%arg0: i32) -> (i32, i32) {
    %c0_i32 = arith.constant 0 : i32
    %c0_i32_0 = arith.constant 0 : i32
    %c0_i32_1 = arith.constant 0 : i32
    return %c0_i32, %c0_i32_0 : i32, i32
  }
  func.func @transform_5(%arg0: i32) -> (i32, i32) {
    %c0_i32 = arith.constant 0 : i32
    %c0_i32_0 = arith.constant 0 : i32
    %c0_i32_1 = arith.constant 0 : i32
    return %c0_i32, %c0_i32_0 : i32, i32
  }
  func.func @transform_6(%arg0: i32) -> (i32, i32) {
    %c0_i32 = arith.constant 0 : i32
    %c0_i32_0 = arith.constant 0 : i32
    %c0_i32_1 = arith.constant 0 : i32
    return %c0_i32, %c0_i32_0 : i32, i32
  }
  func.func @transform_7(%arg0: i32) -> (i32, i32) {
    %c0_i32 = arith.constant 0 : i32
    %c0_i32_0 = arith.constant 0 : i32
    %c0_i32_1 = arith.constant 0 : i32
    return %c0_i32, %c0_i32_0 : i32, i32
  }
  func.func @transform_8(%arg0: i32) -> (i32, i32) {
    %c0_i32 = arith.constant 0 : i32
    %c0_i32_0 = arith.constant 0 : i32
    %c0_i32_1 = arith.constant 0 : i32
    return %c0_i32, %c0_i32_0 : i32, i32
  }
  func.func @transform_9(%arg0: i32) -> (i32, i32) {
    %c0_i32 = arith.constant 0 : i32
    %c0_i32_0 = arith.constant 0 : i32
    %c0_i32_1 = arith.constant 0 : i32
    return %c0_i32, %c0_i32_0 : i32, i32
  }
  func.func @transform_10(%arg0: i32) -> (i32, i32) {
    %c0_i32 = arith.constant 0 : i32
    %c0_i32_0 = arith.constant 0 : i32
    %c0_i32_1 = arith.constant 0 : i32
    return %c0_i32, %c0_i32_0 : i32, i32
  }
  func.func @transform_11(%arg0: i32) -> (i32, i32) {
    %c0_i32 = arith.constant 0 : i32
    %c0_i32_0 = arith.constant 0 : i32
    %c0_i32_1 = arith.constant 0 : i32
    return %c0_i32, %c0_i32_0 : i32, i32
  }
  func.func @transform_12(%arg0: i32) -> (i32, i32) {
    %c0_i32 = arith.constant 0 : i32
    %c0_i32_0 = arith.constant 0 : i32
    %c0_i32_1 = arith.constant 0 : i32
    return %c0_i32, %c0_i32_0 : i32, i32
  }
  func.func @transform_13(%arg0: i32) -> (i32, i32) {
    %c0_i32 = arith.constant 0 : i32
    %c0_i32_0 = arith.constant 0 : i32
    %c0_i32_1 = arith.constant 0 : i32
    return %c0_i32, %c0_i32_0 : i32, i32
  }
  func.func @transform_14(%arg0: i32) -> (i32, i32) {
    %c0_i32 = arith.constant 0 : i32
    %c0_i32_0 = arith.constant 0 : i32
    %c0_i32_1 = arith.constant 0 : i32
    return %c0_i32, %c0_i32_0 : i32, i32
  }
  func.func @transform_15(%arg0: i32) -> (i32, i32) {
    %c0_i32 = arith.constant 0 : i32
    %c0_i32_0 = arith.constant 0 : i32
    %c0_i32_1 = arith.constant 0 : i32
    return %c0_i32, %c0_i32_0 : i32, i32
  }
  func.func @transform_16(%arg0: i32) -> (i32, i32) {
    %c0_i32 = arith.constant 0 : i32
    %c0_i32_0 = arith.constant 0 : i32
    %c0_i32_1 = arith.constant 0 : i32
    return %c0_i32, %c0_i32_0 : i32, i32
  }
  func.func @transform_17(%arg0: i32) -> (i32, i32) {
    %c0_i32 = arith.constant 0 : i32
    %c0_i32_0 = arith.constant 0 : i32
    return %arg0, %c0_i32 : i32, i32
  }
}

</mosaic_0001>

<llo_original>
// kernel: tpu_custom_call.1
$region0: #{tpu_custom_call.1}
  #allocation0 [shape = 'u32[]', space=smem, size = 0x4, offset = 0x4, fixed_abs, tag = 'smem constant byte address 0x4 - core index']
  #allocation1 [shape = 'u32[144,128]{1,0:T(1,128)}', space=vmem, size = 0x12000, scoped, tag = 'internal scratch']
  %s0 = inlined_call_operand.vmem [shape: f32[24,64], index: 0, kind: input, shape index: {}]
  %s1 = inlined_call_operand.hbm [shape: f32[64,512], index: 1, kind: input, shape index: {}]
  %s2 = inlined_call_operand.vmem [shape: f32[1,512], index: 2, kind: input, shape index: {}]
  %s3 = inlined_call_operand.hbm [shape: f32[256,128], index: 3, kind: input, shape index: {}]
  %s4 = inlined_call_operand.vmem [shape: f32[1,128], index: 4, kind: input, shape index: {}]
  %s5 = inlined_call_operand.hbm [shape: f32[256,128], index: 5, kind: input, shape index: {}]
  %s6 = inlined_call_operand.vmem [shape: f32[1,128], index: 6, kind: input, shape index: {}]
  %s7 = inlined_call_operand.hbm [shape: f32[128,256], index: 7, kind: input, shape index: {}]
  %s8 = inlined_call_operand.hbm [shape: f32[128,256], index: 8, kind: input, shape index: {}]
  %s9 = inlined_call_operand.vmem [shape: f32[1,256], index: 9, kind: input, shape index: {}]
  %s10 = inlined_call_operand.hbm [shape: f32[256,128], index: 10, kind: input, shape index: {}]
  %s11 = inlined_call_operand.vmem [shape: f32[1,128], index: 11, kind: input, shape index: {}]
  %s12 = inlined_call_operand.vmem [shape: f32[128,2], index: 12, kind: input, shape index: {}]
  %s13 = inlined_call_operand.vmem [shape: f32[1,2], index: 13, kind: input, shape index: {}]
  %s14 = inlined_call_operand.vmem [shape: f32[128,128], index: 14, kind: input, shape index: {}]
  %s15 = inlined_call_operand.hbm [shape: f32[128,128], index: 15, kind: input, shape index: {}]
  %s16 = inlined_call_operand.vmem [shape: f32[1,128], index: 16, kind: input, shape index: {}]
  %s17 = inlined_call_operand.hbm [shape: f32[24,128], index: 17, kind: output, shape index: {}]
  %s18 = sld [smem:[#allocation0]]
  $region129: #{tpu_custom_call.1} parent=0
    _
  %s20 = ssub.s32 1, %s18
  %s21 = scalar_select 0, %s20, %s18
  $region1: #{tpu_custom_call.1} parent=0
    #allocation2 [shape = 'u8[131072]{0}', space=vmem, size = 0x20000, scoped, tag = 'input window, operand 1, single buffered']
    #allocation3 [shape = 's32[2]{0}', space=sflag, size = 0x8, scoped, tag = 'scoped memory for tpu_custom_call.1']
    #allocation4 [shape = 's32[2]{0}', space=sflag, size = 0x8, scoped, tag = 'scoped memory for tpu_custom_call.1']
    #allocation5 [shape = 'u8[131072]{0}', space=vmem, size = 0x20000, scoped, tag = 'input window, operand 3, single buffered']
    #allocation6 [shape = 's32[1]{0}', space=sflag, size = 0x4, scoped, tag = 'scoped memory for tpu_custom_call.1']
    #allocation7 [shape = 'u8[131072]{0}', space=vmem, size = 0x20000, scoped, tag = 'input window, operand 5, single buffered']
    #allocation8 [shape = 'u8[131072]{0}', space=vmem, size = 0x20000, scoped, tag = 'input window, operand 7, single buffered']
    #allocation9 [shape = 's32[1]{0}', space=sflag, size = 0x4, scoped, tag = 'scoped memory for tpu_custom_call.1']
    #allocation10 [shape = 'u8[131072]{0}', space=vmem, size = 0x20000, scoped, tag = 'input window, operand 8, single buffered']
    #allocation11 [shape = 'u8[131072]{0}', space=vmem, size = 0x20000, scoped, tag = 'input window, operand 10, single buffered']
    #allocation12 [shape = 's32[1]{0}', space=sflag, size = 0x4, scoped, tag = 'scoped memory for tpu_custom_call.1']
    #allocation13 [shape = 'u8[65536]{0}', space=vmem, size = 0x10000, scoped, tag = 'input window, operand 15, single buffered']
    #allocation14 [shape = 'u8[8192]{0}', space=vmem, size = 0x2000, scoped, tag = 'output window, operand 0']
    %22 = vsyncpa [#allocation3], 0
    %23 = vsyncpa [#allocation6], 0
    %24 = vsyncpa [#allocation9], 0
    %25 = vsyncpa [#allocation12], 0
    %26 = vsyncpa [#allocation4], 0
    %s27 = scalar_lea.sflag [#allocation4], 1
    %28 = vsyncpa %s27, 0
    loop: start=0, step=1, limit=5
    $region2: #{tpu_custom_call.1} parent=1 // loop_pre_header
      _
    $region3: #{tpu_custom_call.1} parent=1 // loop_header
      %s30 = sphi 0, %s34
      %p31 = scmp.ge.s32.totalorder %s30, 5
      %s40 = sphi 0, %s42
      %s43 = sphi 0, %s40
      %s44 = sphi 0, %s43
      %s60 = sphi 0, %s44
      %s64 = sphi 0, %s64
      %s66 = sphi 0, %s64
      %s67 = sphi 0, %s66
      %s81 = sphi 0, %s67
      %s85 = sphi 0, %s85
      %s87 = sphi 0, %s85
      %s88 = sphi 0, %s87
      %s102 = sphi 0, %s88
      %s106 = sphi 0, %s106
      %s108 = sphi 0, %s106
      %s109 = sphi 0, %s108
      %s123 = sphi 0, %s109
      %s127 = sphi 0, %s127
      %s129 = sphi 0, %s127
      %s130 = sphi 0, %s129
      %s144 = sphi 0, %s130
      %s148 = sphi 0, %s148
      %s150 = sphi 0, %s148
      %s151 = sphi 0, %s150
      %s165 = sphi 0, %s151
      %s169 = sphi 0, %s169
      %s171 = sphi 0, %s169
      %s172 = sphi 0, %s171
      %s186 = sphi 0, %s172
      %s190 = sphi 0, %s190
      %s192 = sphi 0, %s190
      %s193 = sphi 0, %s192
      %s207 = sphi 0, %s193
      %s211 = sphi 0, %s211
      %s213 = sphi 0, %s211
      %s214 = sphi 0, %s213
      %s228 = sphi 0, %s214
      %s232 = sphi 0, %s232
      %s234 = sphi 0, %s232
      %s235 = sphi 0, %s234
      %s249 = sphi 0, %s235
      %s253 = sphi 0, %s253
      %s255 = sphi 0, %s253
      %s256 = sphi 0, %s255
      %s270 = sphi 0, %s256
      %s274 = sphi 0, %s274
      %s276 = sphi 0, %s274
      %s277 = sphi 0, %s276
      %s291 = sphi 0, %s277
      %s295 = sphi 0, %s295
      %s297 = sphi 0, %s295
      %s298 = sphi 0, %s297
      %s312 = sphi 0, %s298
      %s316 = sphi 0, %s316
      %s318 = sphi 0, %s316
      %s319 = sphi 0, %s318
      %s333 = sphi 0, %s319
      %s337 = sphi 0, %s337
      %s339 = sphi 0, %s337
      %s340 = sphi 0, %s339
      %s354 = sphi 0, %s340
      %s358 = sphi 0, %s358
      %s360 = sphi 0, %s358
      %s361 = sphi 0, %s360
      %s375 = sphi 0, %s361
      %s379 = sphi 0, %s379
      %s381 = sphi 0, %s379
      %s382 = sphi 0, %s381
      %s396 = sphi 0, %s382
      %s402 = sphi 0, %s404
      %s405 = sphi 0, %s402
      %s406 = sphi 0, %s405
      %s422 = sphi 0, %s406
    $region4: #{tpu_custom_call.1} parent=1 // loop_header_branch
      %33 = sbr.rel (%p31) target = $region8
    $region5: #{tpu_custom_call.1} parent=1 // loop_body
      %s35 = ssub.s32 %s30, 1
      %s36 = ssub.s32 %s30, 2
      %s37 = sadd.s32 %s30, 1
      %s38 = ssub.s32 %s30, %s37
      %p39 = scmp.eq.s32.totalorder %s38, 0
      %s41 = sadd.s32 %s40, 1
      %s42 = scalar_select %p39, %s40, %s41
      %p45 = pneg %p39
      %p46 = scmp.eq.s32.totalorder %s30, 2
      %p47 = por %p45, %p46
      %p48 = scmp.ne.s32.totalorder %s40, %s43
      %p49 = scmp.eq.s32.totalorder %s30, 0
      %p50 = por %p48, %p49
      %p51 = scmp.ne.s32.totalorder %s40, %s43
      %p52 = scmp.eq.s32.totalorder %s35, 2
      %p53 = por %p51, %p52
      %p54 = scmp.ne.s32.totalorder %s43, %s44
      %p55 = scmp.eq.s32.totalorder %s35, 0
      %p56 = por %p54, %p55
      %p57 = scmp.ne.s32.totalorder %s43, %s44
      %p58 = scmp.eq.s32.totalorder %s36, 2
      %p59 = por %p57, %p58
      %p61 = scmp.ne.s32.totalorder %s44, %s60
      %p62 = scmp.eq.s32.totalorder %s36, 0
      %p63 = por %p61, %p62
      %s65 = sadd.s32 %s64, 1
      %p68 = scmp.eq.s32.totalorder %s30, 2
      %p69 = scmp.ne.s32.totalorder %s64, %s66
      %p70 = scmp.eq.s32.totalorder %s30, 0
      %p71 = por %p69, %p70
      %p72 = scmp.ne.s32.totalorder %s64, %s66
      %p73 = scmp.eq.s32.totalorder %s35, 2
      %p74 = por %p72, %p73
      %p75 = scmp.ne.s32.totalorder %s66, %s67
      %p76 = scmp.eq.s32.totalorder %s35, 0
      %p77 = por %p75, %p76
      %p78 = scmp.ne.s32.totalorder %s66, %s67
      %p79 = scmp.eq.s32.totalorder %s36, 2
      %p80 = por %p78, %p79
      %p82 = scmp.ne.s32.totalorder %s67, %s81
      %p83 = scmp.eq.s32.totalorder %s36, 0
      %p84 = por %p82, %p83
      %s86 = sadd.s32 %s85, 1
      %p89 = scmp.eq.s32.totalorder %s30, 2
      %p90 = scmp.ne.s32.totalorder %s85, %s87
      %p91 = scmp.eq.s32.totalorder %s30, 0
      %p92 = por %p90, %p91
      %p93 = scmp.ne.s32.totalorder %s85, %s87
      %p94 = scmp.eq.s32.totalorder %s35, 2
      %p95 = por %p93, %p94
      %p96 = scmp.ne.s32.totalorder %s87, %s88
      %p97 = scmp.eq.s32.totalorder %s35, 0
      %p98 = por %p96, %p97
      %p99 = scmp.ne.s32.totalorder %s87, %s88
      %p100 = scmp.eq.s32.totalorder %s36, 2
      %p101 = por %p99, %p100
      %p103 = scmp.ne.s32.totalorder %s88, %s102
      %p104 = scmp.eq.s32.totalorder %s36, 0
      %p105 = por %p103, %p104
      %s107 = sadd.s32 %s106, 1
      %p110 = scmp.eq.s32.totalorder %s30, 2
      %p111 = scmp.ne.s32.totalorder %s106, %s108
      %p112 = scmp.eq.s32.totalorder %s30, 0
      %p113 = por %p111, %p112
      %p114 = scmp.ne.s32.totalorder %s106, %s108
      %p115 = scmp.eq.s32.totalorder %s35, 2
      %p116 = por %p114, %p115
      %p117 = scmp.ne.s32.totalorder %s108, %s109
      %p118 = scmp.eq.s32.totalorder %s35, 0
      %p119 = por %p117, %p118
      %p120 = scmp.ne.s32.totalorder %s108, %s109
      %p121 = scmp.eq.s32.totalorder %s36, 2
      %p122 = por %p120, %p121
      %p124 = scmp.ne.s32.totalorder %s109, %s123
      %p125 = scmp.eq.s32.totalorder %s36, 0
      %p126 = por %p124, %p125
      %s128 = sadd.s32 %s127, 1
      %p131 = scmp.eq.s32.totalorder %s30, 2
      %p132 = scmp.ne.s32.totalorder %s127, %s129
      %p133 = scmp.eq.s32.totalorder %s30, 0
      %p134 = por %p132, %p133
      %p135 = scmp.ne.s32.totalorder %s127, %s129
      %p136 = scmp.eq.s32.totalorder %s35, 2
      %p137 = por %p135, %p136
      %p138 = scmp.ne.s32.totalorder %s129, %s130
      %p139 = scmp.eq.s32.totalorder %s35, 0
      %p140 = por %p138, %p139
      %p141 = scmp.ne.s32.totalorder %s129, %s130
      %p142 = scmp.eq.s32.totalorder %s36, 2
      %p143 = por %p141, %p142
      %p145 = scmp.ne.s32.totalorder %s130, %s144
      %p146 = scmp.eq.s32.totalorder %s36, 0
      %p147 = por %p145, %p146
      %s149 = sadd.s32 %s148, 1
      %p152 = scmp.eq.s32.totalorder %s30, 2
      %p153 = scmp.ne.s32.totalorder %s148, %s150
      %p154 = scmp.eq.s32.totalorder %s30, 0
      %p155 = por %p153, %p154
      %p156 = scmp.ne.s32.totalorder %s148, %s150
      %p157 = scmp.eq.s32.totalorder %s35, 2
      %p158 = por %p156, %p157
      %p159 = scmp.ne.s32.totalorder %s150, %s151
      %p160 = scmp.eq.s32.totalorder %s35, 0
      %p161 = por %p159, %p160
      %p162 = scmp.ne.s32.totalorder %s150, %s151
      %p163 = scmp.eq.s32.totalorder %s36, 2
      %p164 = por %p162, %p163
      %p166 = scmp.ne.s32.totalorder %s151, %s165
      %p167 = scmp.eq.s32.totalorder %s36, 0
      %p168 = por %p166, %p167
      %s170 = sadd.s32 %s169, 1
      %p173 = scmp.eq.s32.totalorder %s30, 2
      %p174 = scmp.ne.s32.totalorder %s169, %s171
      %p175 = scmp.eq.s32.totalorder %s30, 0
      %p176 = por %p174, %p175
      %p177 = scmp.ne.s32.totalorder %s169, %s171
      %p178 = scmp.eq.s32.totalorder %s35, 2
      %p179 = por %p177, %p178
      %p180 = scmp.ne.s32.totalorder %s171, %s172
      %p181 = scmp.eq.s32.totalorder %s35, 0
      %p182 = por %p180, %p181
      %p183 = scmp.ne.s32.totalorder %s171, %s172
      %p184 = scmp.eq.s32.totalorder %s36, 2
      %p185 = por %p183, %p184
      %p187 = scmp.ne.s32.totalorder %s172, %s186
      %p188 = scmp.eq.s32.totalorder %s36, 0
      %p189 = por %p187, %p188
      %s191 = sadd.s32 %s190, 1
      %p194 = scmp.eq.s32.totalorder %s30, 2
      %p195 = scmp.ne.s32.totalorder %s190, %s192
      %p196 = scmp.eq.s32.totalorder %s30, 0
      %p197 = por %p195, %p196
      %p198 = scmp.ne.s32.totalorder %s190, %s192
      %p199 = scmp.eq.s32.totalorder %s35, 2
      %p200 = por %p198, %p199
      %p201 = scmp.ne.s32.totalorder %s192, %s193
      %p202 = scmp.eq.s32.totalorder %s35, 0
      %p203 = por %p201, %p202
      %p204 = scmp.ne.s32.totalorder %s192, %s193
      %p205 = scmp.eq.s32.totalorder %s36, 2
      %p206 = por %p204, %p205
      %p208 = scmp.ne.s32.totalorder %s193, %s207
      %p209 = scmp.eq.s32.totalorder %s36, 0
      %p210 = por %p208, %p209
      %s212 = sadd.s32 %s211, 1
      %p215 = scmp.eq.s32.totalorder %s30, 2
      %p216 = scmp.ne.s32.totalorder %s211, %s213
      %p217 = scmp.eq.s32.totalorder %s30, 0
      %p218 = por %p216, %p217
      %p219 = scmp.ne.s32.totalorder %s211, %s213
      %p220 = scmp.eq.s32.totalorder %s35, 2
      %p221 = por %p219, %p220
      %p222 = scmp.ne.s32.totalorder %s213, %s214
      %p223 = scmp.eq.s32.totalorder %s35, 0
      %p224 = por %p222, %p223
      %p225 = scmp.ne.s32.totalorder %s213, %s214
      %p226 = scmp.eq.s32.totalorder %s36, 2
      %p227 = por %p225, %p226
      %p229 = scmp.ne.s32.totalorder %s214, %s228
      %p230 = scmp.eq.s32.totalorder %s36, 0
      %p231 = por %p229, %p230
      %s233 = sadd.s32 %s232, 1
      %p236 = scmp.eq.s32.totalorder %s30, 2
      %p237 = scmp.ne.s32.totalorder %s232, %s234
      %p238 = scmp.eq.s32.totalorder %s30, 0
      %p239 = por %p237, %p238
      %p240 = scmp.ne.s32.totalorder %s232, %s234
      %p241 = scmp.eq.s32.totalorder %s35, 2
      %p242 = por %p240, %p241
      %p243 = scmp.ne.s32.totalorder %s234, %s235
      %p244 = scmp.eq.s32.totalorder %s35, 0
      %p245 = por %p243, %p244
      %p246 = scmp.ne.s32.totalorder %s234, %s235
      %p247 = scmp.eq.s32.totalorder %s36, 2
      %p248 = por %p246, %p247
      %p250 = scmp.ne.s32.totalorder %s235, %s249
      %p251 = scmp.eq.s32.totalorder %s36, 0
      %p252 = por %p250, %p251
      %s254 = sadd.s32 %s253, 1
      %p257 = scmp.eq.s32.totalorder %s30, 2
      %p258 = scmp.ne.s32.totalorder %s253, %s255
      %p259 = scmp.eq.s32.totalorder %s30, 0
      %p260 = por %p258, %p259
      %p261 = scmp.ne.s32.totalorder %s253, %s255
      %p262 = scmp.eq.s32.totalorder %s35, 2
      %p263 = por %p261, %p262
      %p264 = scmp.ne.s32.totalorder %s255, %s256
      %p265 = scmp.eq.s32.totalorder %s35, 0
      %p266 = por %p264, %p265
      %p267 = scmp.ne.s32.totalorder %s255, %s256
      %p268 = scmp.eq.s32.totalorder %s36, 2
      %p269 = por %p267, %p268
      %p271 = scmp.ne.s32.totalorder %s256, %s270
      %p272 = scmp.eq.s32.totalorder %s36, 0
      %p273 = por %p271, %p272
      %s275 = sadd.s32 %s274, 1
      %p278 = scmp.eq.s32.totalorder %s30, 2
      %p279 = scmp.ne.s32.totalorder %s274, %s276
      %p280 = scmp.eq.s32.totalorder %s30, 0
      %p281 = por %p279, %p280
      %p282 = scmp.ne.s32.totalorder %s274, %s276
      %p283 = scmp.eq.s32.totalorder %s35, 2
      %p284 = por %p282, %p283
      %p285 = scmp.ne.s32.totalorder %s276, %s277
      %p286 = scmp.eq.s32.totalorder %s35, 0
      %p287 = por %p285, %p286
      %p288 = scmp.ne.s32.totalorder %s276, %s277
      %p289 = scmp.eq.s32.totalorder %s36, 2
      %p290 = por %p288, %p289
      %p292 = scmp.ne.s32.totalorder %s277, %s291
      %p293 = scmp.eq.s32.totalorder %s36, 0
      %p294 = por %p292, %p293
      %s296 = sadd.s32 %s295, 1
      %p299 = scmp.eq.s32.totalorder %s30, 2
      %p300 = scmp.ne.s32.totalorder %s295, %s297
      %p301 = scmp.eq.s32.totalorder %s30, 0
      %p302 = por %p300, %p301
      %p303 = scmp.ne.s32.totalorder %s295, %s297
      %p304 = scmp.eq.s32.totalorder %s35, 2
      %p305 = por %p303, %p304
      %p306 = scmp.ne.s32.totalorder %s297, %s298
      %p307 = scmp.eq.s32.totalorder %s35, 0
      %p308 = por %p306, %p307
      %p309 = scmp.ne.s32.totalorder %s297, %s298
      %p310 = scmp.eq.s32.totalorder %s36, 2
      %p311 = por %p309, %p310
      %p313 = scmp.ne.s32.totalorder %s298, %s312
      %p314 = scmp.eq.s32.totalorder %s36, 0
      %p315 = por %p313, %p314
      %s317 = sadd.s32 %s316, 1
      %p320 = scmp.eq.s32.totalorder %s30, 2
      %p321 = scmp.ne.s32.totalorder %s316, %s318
      %p322 = scmp.eq.s32.totalorder %s30, 0
      %p323 = por %p321, %p322
      %p324 = scmp.ne.s32.totalorder %s316, %s318
      %p325 = scmp.eq.s32.totalorder %s35, 2
      %p326 = por %p324, %p325
      %p327 = scmp.ne.s32.totalorder %s318, %s319
      %p328 = scmp.eq.s32.totalorder %s35, 0
      %p329 = por %p327, %p328
      %p330 = scmp.ne.s32.totalorder %s318, %s319
      %p331 = scmp.eq.s32.totalorder %s36, 2
      %p332 = por %p330, %p331
      %p334 = scmp.ne.s32.totalorder %s319, %s333
      %p335 = scmp.eq.s32.totalorder %s36, 0
      %p336 = por %p334, %p335
      %s338 = sadd.s32 %s337, 1
      %p341 = scmp.eq.s32.totalorder %s30, 2
      %p342 = scmp.ne.s32.totalorder %s337, %s339
      %p343 = scmp.eq.s32.totalorder %s30, 0
      %p344 = por %p342, %p343
      %p345 = scmp.ne.s32.totalorder %s337, %s339
      %p346 = scmp.eq.s32.totalorder %s35, 2
      %p347 = por %p345, %p346
      %p348 = scmp.ne.s32.totalorder %s339, %s340
      %p349 = scmp.eq.s32.totalorder %s35, 0
      %p350 = por %p348, %p349
      %p351 = scmp.ne.s32.totalorder %s339, %s340
      %p352 = scmp.eq.s32.totalorder %s36, 2
      %p353 = por %p351, %p352
      %p355 = scmp.ne.s32.totalorder %s340, %s354
      %p356 = scmp.eq.s32.totalorder %s36, 0
      %p357 = por %p355, %p356
      %s359 = sadd.s32 %s358, 1
      %p362 = scmp.eq.s32.totalorder %s30, 2
      %p363 = scmp.ne.s32.totalorder %s358, %s360
      %p364 = scmp.eq.s32.totalorder %s30, 0
      %p365 = por %p363, %p364
      %p366 = scmp.ne.s32.totalorder %s358, %s360
      %p367 = scmp.eq.s32.totalorder %s35, 2
      %p368 = por %p366, %p367
      %p369 = scmp.ne.s32.totalorder %s360, %s361
      %p370 = scmp.eq.s32.totalorder %s35, 0
      %p371 = por %p369, %p370
      %p372 = scmp.ne.s32.totalorder %s360, %s361
      %p373 = scmp.eq.s32.totalorder %s36, 2
      %p374 = por %p372, %p373
      %p376 = scmp.ne.s32.totalorder %s361, %s375
      %p377 = scmp.eq.s32.totalorder %s36, 0
      %p378 = por %p376, %p377
      %s380 = sadd.s32 %s379, 1
      %p383 = scmp.eq.s32.totalorder %s30, 2
      %p384 = scmp.ne.s32.totalorder %s379, %s381
      %p385 = scmp.eq.s32.totalorder %s30, 0
      %p386 = por %p384, %p385
      %p387 = scmp.ne.s32.totalorder %s379, %s381
      %p388 = scmp.eq.s32.totalorder %s35, 2
      %p389 = por %p387, %p388
      %p390 = scmp.ne.s32.totalorder %s381, %s382
      %p391 = scmp.eq.s32.totalorder %s35, 0
      %p392 = por %p390, %p391
      %p393 = scmp.ne.s32.totalorder %s381, %s382
      %p394 = scmp.eq.s32.totalorder %s36, 2
      %p395 = por %p393, %p394
      %p397 = scmp.ne.s32.totalorder %s382, %s396
      %p398 = scmp.eq.s32.totalorder %s36, 0
      %p399 = por %p397, %p398
      %s400 = ssub.s32 %s30, %s37
      %p401 = scmp.eq.s32.totalorder %s400, 0
      %s403 = sadd.s32 %s402, 1
      %s404 = scalar_select %p401, %s402, %s403
      %p407 = pneg %p401
      %p408 = scmp.eq.s32.totalorder %s30, 2
      %p409 = por %p407, %p408
      %p410 = scmp.ne.s32.totalorder %s402, %s405
      %p411 = scmp.eq.s32.totalorder %s30, 0
      %p412 = por %p410, %p411
      %p413 = scmp.ne.s32.totalorder %s402, %s405
      %p414 = scmp.eq.s32.totalorder %s35, 2
      %p415 = por %p413, %p414
      %p416 = scmp.ne.s32.totalorder %s405, %s406
      %p417 = scmp.eq.s32.totalorder %s35, 0
      %p418 = por %p416, %p417
      %p419 = scmp.ne.s32.totalorder %s405, %s406
      %p420 = scmp.eq.s32.totalorder %s36, 2
      %p421 = por %p419, %p420
      %p423 = scmp.ne.s32.totalorder %s406, %s422
      %p424 = scmp.eq.s32.totalorder %s36, 0
      %p425 = por %p423, %p424
      %p426 = scmp.le.s32.totalorder 1, %s30
      %p427 = scmp.lt.s32.totalorder %s30, 4
      %p428 = pnand %p426, %p427
      %p429 = pneg %p428
      // Predicated region
      $region9: #{tpu_custom_call.1} parent=5 // pred_check
        _
      $region10: #{tpu_custom_call.1} parent=5 // pred_check_branch
        %431 = sbr.rel (%p428) target = $region12
      $region11: #{tpu_custom_call.1} parent=5 // pred_region
        %s432 = ssub.s32 %s30, 1
        // Predicated region
        $region13: #{tpu_custom_call.1} parent=11 // pred_check
          %p433 = pneg %p77
        $region14: #{tpu_custom_call.1} parent=11 // pred_check_branch
          %435 = sbr.rel (%p433) target = $region16
        $region15: #{tpu_custom_call.1} parent=11 // pred_region
          %s437 = ssub.s32 4096, 4096
          %438 = vsyncadd [#allocation3], %s437
          %s439 = sshll.u32 [#allocation2], 4
          %s440 = int_to_ptr.vmem [resolvable:$true] %s439
          %445 = dma.hbm_to_vmem [thread:$0]  %s1, 4096, %s440, [#allocation3], 512, 512, 32
        $region16: #{tpu_custom_call.1} parent=11 // pred_fallthru
          _
        // Predicated region
        $region17: #{tpu_custom_call.1} parent=11 // pred_check
          %p446 = pneg %p98
        $region18: #{tpu_custom_call.1} parent=11 // pred_check_branch
          %448 = sbr.rel (%p446) target = $region20
        $region19: #{tpu_custom_call.1} parent=11 // pred_region
          _
        $region20: #{tpu_custom_call.1} parent=11 // pred_fallthru
          _
        // Predicated region
        $region21: #{tpu_custom_call.1} parent=11 // pred_check
          %p449 = pneg %p119
        $region22: #{tpu_custom_call.1} parent=11 // pred_check_branch
          %451 = sbr.rel (%p449) target = $region24
        $region23: #{tpu_custom_call.1} parent=11 // pred_region
          %s453 = ssub.s32 4096, 4096
          %454 = vsyncadd [#allocation6], %s453
          %s455 = sshll.u32 [#allocation5], 4
          %s456 = int_to_ptr.vmem [resolvable:$true] %s455
          %461 = dma.hbm_to_vmem [thread:$0]  %s3, 4096, %s456, [#allocation6], 128, 128, 8
        $region24: #{tpu_custom_call.1} parent=11 // pred_fallthru
          _
        // Predicated region
        $region25: #{tpu_custom_call.1} parent=11 // pred_check
          %p462 = pneg %p140
        $region26: #{tpu_custom_call.1} parent=11 // pred_check_branch
          %464 = sbr.rel (%p462) target = $region28
        $region27: #{tpu_custom_call.1} parent=11 // pred_region
          _
        $region28: #{tpu_custom_call.1} parent=11 // pred_fallthru
          _
        // Predicated region
        $region29: #{tpu_custom_call.1} parent=11 // pred_check
          %p465 = pneg %p161
        $region30: #{tpu_custom_call.1} parent=11 // pred_check_branch
          %467 = sbr.rel (%p465) target = $region32
        $region31: #{tpu_custom_call.1} parent=11 // pred_region
          %s469 = ssub.s32 4096, 4096
          %470 = vsyncadd [#allocation6], %s469
          %s471 = sshll.u32 [#allocation7], 4
          %s472 = int_to_ptr.vmem [resolvable:$true] %s471
          %477 = dma.hbm_to_vmem [thread:$0]  %s5, 4096, %s472, [#allocation6], 128, 128, 8
        $region32: #{tpu_custom_call.1} parent=11 // pred_fallthru
          _
        // Predicated region
        $region33: #{tpu_custom_call.1} parent=11 // pred_check
          %p478 = pneg %p182
        $region34: #{tpu_custom_call.1} parent=11 // pred_check_branch
          %480 = sbr.rel (%p478) target = $region36
        $region35: #{tpu_custom_call.1} parent=11 // pred_region
          _
        $region36: #{tpu_custom_call.1} parent=11 // pred_fallthru
          _
        // Predicated region
        $region37: #{tpu_custom_call.1} parent=11 // pred_check
          %p481 = pneg %p203
        $region38: #{tpu_custom_call.1} parent=11 // pred_check_branch
          %483 = sbr.rel (%p481) target = $region40
        $region39: #{tpu_custom_call.1} parent=11 // pred_region
          %s485 = ssub.s32 4096, 4096
          %486 = vsyncadd [#allocation9], %s485
          %s487 = sshll.u32 [#allocation8], 4
          %s488 = int_to_ptr.vmem [resolvable:$true] %s487
          %493 = dma.hbm_to_vmem [thread:$0]  %s7, 4096, %s488, [#allocation9], 256, 256, 16
        $region40: #{tpu_custom_call.1} parent=11 // pred_fallthru
          _
        // Predicated region
        $region41: #{tpu_custom_call.1} parent=11 // pred_check
          %p494 = pneg %p224
        $region42: #{tpu_custom_call.1} parent=11 // pred_check_branch
          %496 = sbr.rel (%p494) target = $region44
        $region43: #{tpu_custom_call.1} parent=11 // pred_region
          %s498 = ssub.s32 4096, 4096
          %499 = vsyncadd [#allocation9], %s498
          %s500 = sshll.u32 [#allocation10], 4
          %s501 = int_to_ptr.vmem [resolvable:$true] %s500
          %506 = dma.hbm_to_vmem [thread:$0]  %s8, 4096, %s501, [#allocation9], 256, 256, 16
        $region44: #{tpu_custom_call.1} parent=11 // pred_fallthru
          _
        // Predicated region
        $region45: #{tpu_custom_call.1} parent=11 // pred_check
          %p507 = pneg %p245
        $region46: #{tpu_custom_call.1} parent=11 // pred_check_branch
          %509 = sbr.rel (%p507) target = $region48
        $region47: #{tpu_custom_call.1} parent=11 // pred_region
          _
        $region48: #{tpu_custom_call.1} parent=11 // pred_fallthru
          _
        // Predicated region
        $region49: #{tpu_custom_call.1} parent=11 // pred_check
          %p510 = pneg %p266
        $region50: #{tpu_custom_call.1} parent=11 // pred_check_branch
          %512 = sbr.rel (%p510) target = $region52
        $region51: #{tpu_custom_call.1} parent=11 // pred_region
          %s514 = ssub.s32 4096, 4096
          %515 = vsyncadd [#allocation12], %s514
          %s516 = sshll.u32 [#allocation11], 4
          %s517 = int_to_ptr.vmem [resolvable:$true] %s516
          %522 = dma.hbm_to_vmem [thread:$0]  %s10, 4096, %s517, [#allocation12], 128, 128, 8
        $region52: #{tpu_custom_call.1} parent=11 // pred_fallthru
          _
        // Predicated region
        $region53: #{tpu_custom_call.1} parent=11 // pred_check
          %p523 = pneg %p287
        $region54: #{tpu_custom_call.1} parent=11 // pred_check_branch
          %525 = sbr.rel (%p523) target = $region56
        $region55: #{tpu_custom_call.1} parent=11 // pred_region
          _
        $region56: #{tpu_custom_call.1} parent=11 // pred_fallthru
          _
        // Predicated region
        $region57: #{tpu_custom_call.1} parent=11 // pred_check
          %p526 = pneg %p308
        $region58: #{tpu_custom_call.1} parent=11 // pred_check_branch
          %528 = sbr.rel (%p526) target = $region60
        $region59: #{tpu_custom_call.1} parent=11 // pred_region
          _
        $region60: #{tpu_custom_call.1} parent=11 // pred_fallthru
          _
        // Predicated region
        $region61: #{tpu_custom_call.1} parent=11 // pred_check
          %p529 = pneg %p329
        $region62: #{tpu_custom_call.1} parent=11 // pred_check_branch
          %531 = sbr.rel (%p529) target = $region64
        $region63: #{tpu_custom_call.1} parent=11 // pred_region
          _
        $region64: #{tpu_custom_call.1} parent=11 // pred_fallthru
          _
        // Predicated region
        $region65: #{tpu_custom_call.1} parent=11 // pred_check
          %p532 = pneg %p350
        $region66: #{tpu_custom_call.1} parent=11 // pred_check_branch
          %534 = sbr.rel (%p532) target = $region68
        $region67: #{tpu_custom_call.1} parent=11 // pred_region
          _
        $region68: #{tpu_custom_call.1} parent=11 // pred_fallthru
          _
        // Predicated region
        $region69: #{tpu_custom_call.1} parent=11 // pred_check
          %p535 = pneg %p371
        $region70: #{tpu_custom_call.1} parent=11 // pred_check_branch
          %537 = sbr.rel (%p535) target = $region72
        $region71: #{tpu_custom_call.1} parent=11 // pred_region
          %s539 = ssub.s32 2048, 2048
          %540 = vsyncadd [#allocation12], %s539
          %s541 = sshll.u32 [#allocation13], 4
          %s542 = int_to_ptr.vmem [resolvable:$true] %s541
          %547 = dma.hbm_to_vmem [thread:$0]  %s15, 2048, %s542, [#allocation12], 128, 128, 8
        $region72: #{tpu_custom_call.1} parent=11 // pred_fallthru
          _
        // Predicated region
        $region73: #{tpu_custom_call.1} parent=11 // pred_check
          %p548 = pneg %p392
        $region74: #{tpu_custom_call.1} parent=11 // pred_check_branch
          %550 = sbr.rel (%p548) target = $region76
        $region75: #{tpu_custom_call.1} parent=11 // pred_region
          _
        $region76: #{tpu_custom_call.1} parent=11 // pred_fallthru
          _
      $region12: #{tpu_custom_call.1} parent=5 // pred_fallthru
        _
      %p551 = scmp.lt.s32.totalorder %s30, 3
      // Predicated region
      $region77: #{tpu_custom_call.1} parent=5 // pred_check
        %p552 = pneg %p551
      $region78: #{tpu_custom_call.1} parent=5 // pred_check_branch
        %554 = sbr.rel (%p552) target = $region80
      $region79: #{tpu_custom_call.1} parent=5 // pred_region
        // Predicated region
        $region81: #{tpu_custom_call.1} parent=79 // pred_check
          %p555 = pneg %p50
        $region82: #{tpu_custom_call.1} parent=79 // pred_check_branch
          %557 = sbr.rel (%p555) target = $region84
        $region83: #{tpu_custom_call.1} parent=79 // pred_region
          %p558 = scmp.lt.s32.totalorder %s30, 2
          %s559 = scalar_select %p558, %s30, 2
          %s560 = smul.addr %s559, 8
          %s561 = scalar_lea.vmem %s0, %s560
        $region84: #{tpu_custom_call.1} parent=79 // pred_fallthru
          _
      $region80: #{tpu_custom_call.1} parent=5 // pred_fallthru
        _
      %p562 = scmp.le.s32.totalorder 1, %s30
      %p563 = scmp.lt.s32.totalorder %s30, 4
      %p564 = pnand %p562, %p563
      %p565 = pneg %p564
      // Predicated region
      $region85: #{tpu_custom_call.1} parent=5 // pred_check
        _
      $region86: #{tpu_custom_call.1} parent=5 // pred_check_branch
        %567 = sbr.rel (%p564) target = $region88
      $region87: #{tpu_custom_call.1} parent=5 // pred_region
        %s568 = ssub.s32 %s30, 1
        // Predicated region
        $region89: #{tpu_custom_call.1} parent=87 // pred_check
          %p569 = pneg %p77
        $region90: #{tpu_custom_call.1} parent=87 // pred_check_branch
          %571 = sbr.rel (%p569) target = $region92
        $region91: #{tpu_custom_call.1} parent=87 // pred_region
          %572 = dma.done [#allocation3], 4096
        $region92: #{tpu_custom_call.1} parent=87 // pred_fallthru
          _
        // Predicated region
        $region93: #{tpu_custom_call.1} parent=87 // pred_check
          %p573 = pneg %p119
        $region94: #{tpu_custom_call.1} parent=87 // pred_check_branch
          %575 = sbr.rel (%p573) target = $region96
        $region95: #{tpu_custom_call.1} parent=87 // pred_region
          %576 = dma.done [#allocation6], 4096
        $region96: #{tpu_custom_call.1} parent=87 // pred_fallthru
          _
        // Predicated region
        $region97: #{tpu_custom_call.1} parent=87 // pred_check
          %p577 = pneg %p161
        $region98: #{tpu_custom_call.1} parent=87 // pred_check_branch
          %579 = sbr.rel (%p577) target = $region100
        $region99: #{tpu_custom_call.1} parent=87 // pred_region
          %580 = dma.done [#allocation6], 4096
        $region100: #{tpu_custom_call.1} parent=87 // pred_fallthru
          _
        // Predicated region
        $region101: #{tpu_custom_call.1} parent=87 // pred_check
          %p581 = pneg %p203
        $region102: #{tpu_custom_call.1} parent=87 // pred_check_branch
          %583 = sbr.rel (%p581) target = $region104
        $region103: #{tpu_custom_call.1} parent=87 // pred_region
          %584 = dma.done [#allocation9], 4096
        $region104: #{tpu_custom_call.1} parent=87 // pred_fallthru
          _
        // Predicated region
        $region105: #{tpu_custom_call.1} parent=87 // pred_check
          %p585 = pneg %p224
        $region106: #{tpu_custom_call.1} parent=87 // pred_check_branch
          %587 = sbr.rel (%p585) target = $region108
        $region107: #{tpu_custom_call.1} parent=87 // pred_region
          %588 = dma.done [#allocation9], 4096
        $region108: #{tpu_custom_call.1} parent=87 // pred_fallthru
          _
        // Predicated region
        $region109: #{tpu_custom_call.1} parent=87 // pred_check
          %p589 = pneg %p266
        $region110: #{tpu_custom_call.1} parent=87 // pred_check_branch
          %591 = sbr.rel (%p589) target = $region112
        $region111: #{tpu_custom_call.1} parent=87 // pred_region
          %592 = dma.done [#allocation12], 4096
        $region112: #{tpu_custom_call.1} parent=87 // pred_fallthru
          _
        // Predicated region
        $region113: #{tpu_custom_call.1} parent=87 // pred_check
          %p593 = pneg %p371
        $region114: #{tpu_custom_call.1} parent=87 // pred_check_branch
          %595 = sbr.rel (%p593) target = $region116
        $region115: #{tpu_custom_call.1} parent=87 // pred_region
          %596 = dma.done [#allocation12], 2048
        $region116: #{tpu_custom_call.1} parent=87 // pred_fallthru
          _
        %p597 = scmp.lt.s32.totalorder %s35, 2
        %s598 = scalar_select %p597, %s35, 2
        %s599 = smul.addr %s598, 8
        %s600 = scalar_lea.vmem %s0, %s599
        %p601 = pneg %p56
        %p602 = pneg %p53
        %p603 = pneg %p77
        %p604 = pneg %p74
        %p605 = pneg %p98
        %p606 = pneg %p95
        %p607 = pneg %p119
        %p608 = pneg %p116
        %p609 = pneg %p140
        %p610 = pneg %p137
        %p611 = pneg %p161
        %p612 = pneg %p158
        %p613 = pneg %p182
        %p614 = pneg %p179
        %p615 = pneg %p203
        %p616 = pneg %p200
        %p617 = pneg %p224
        %p618 = pneg %p221
        %p619 = pneg %p245
        %p620 = pneg %p242
        %p621 = pneg %p266
        %p622 = pneg %p263
        %p623 = pneg %p287
        %p624 = pneg %p284
        %p625 = pneg %p308
        %p626 = pneg %p305
        %p627 = pneg %p329
        %p628 = pneg %p326
        %p629 = pneg %p350
        %p630 = pneg %p347
        %p631 = pneg %p371
        %p632 = pneg %p368
        %p633 = pneg %p392
        %p634 = pneg %p389
        %p635 = pneg %p418
        %p636 = pneg %p415
        %s637 = sand.u32 %s405, 1
        %s638 = scalar_lea.sflag [#allocation4], %s637
        %s639 = sand.u32 %s405, 1
        %s640 = smul.addr %s639, 8
        %s641 = scalar_lea.vmem [#allocation14], %s640
        %p642 = scmp.lt.s32.totalorder %s35, 2
        %s643 = scalar_select %p642, %s35, 2
        %s644 = smul.addr %s643, 8
        %s645 = scalar_lea.vmem %s0, %s644
        %v646 = vld [vmem:[%s645] sm:$0xff]
        %v647 = vld [vmem:[#allocation2] sm:$0xff]
        %v648 = vld [vmem:[#allocation2 + $0x8] sm:$0xff]
        %v649 = vld [vmem:[#allocation2 + $0x10] sm:$0xff]
        %v650 = vld [vmem:[#allocation2 + $0x18] sm:$0xff]
        %v651 = vld [vmem:[#allocation2 + $0x20] sm:$0xff]
        %v652 = vld [vmem:[#allocation2 + $0x28] sm:$0xff]
        %v653 = vld [vmem:[#allocation2 + $0x30] sm:$0xff]
        %v654 = vld [vmem:[#allocation2 + $0x38] sm:$0xff]
        %v655 = vld [vmem:[#allocation2 + $0x40] sm:$0xff]
        %v656 = vld [vmem:[#allocation2 + $0x48] sm:$0xff]
        %v657 = vld [vmem:[#allocation2 + $0x50] sm:$0xff]
        %v658 = vld [vmem:[#allocation2 + $0x58] sm:$0xff]
        %v659 = vld [vmem:[#allocation2 + $0x60] sm:$0xff]
        %v660 = vld [vmem:[#allocation2 + $0x68] sm:$0xff]
        %v661 = vld [vmem:[#allocation2 + $0x70] sm:$0xff]
        %v662 = vld [vmem:[#allocation2 + $0x78] sm:$0xff]
        %v663 = vld [vmem:[#allocation2 + $0x80] sm:$0xff]
        %v664 = vld [vmem:[#allocation2 + $0x88] sm:$0xff]
        %v665 = vld [vmem:[#allocation2 + $0x90] sm:$0xff]
        %v666 = vld [vmem:[#allocation2 + $0x98] sm:$0xff]
        %v667 = vld [vmem:[#allocation2 + $0xa0] sm:$0xff]
        %v668 = vld [vmem:[#allocation2 + $0xa8] sm:$0xff]
        %v669 = vld [vmem:[#allocation2 + $0xb0] sm:$0xff]
        %v670 = vld [vmem:[#allocation2 + $0xb8] sm:$0xff]
        %v671 = vld [vmem:[#allocation2 + $0xc0] sm:$0xff]
        %v672 = vld [vmem:[#allocation2 + $0xc8] sm:$0xff]
        %v673 = vld [vmem:[#allocation2 + $0xd0] sm:$0xff]
        %v674 = vld [vmem:[#allocation2 + $0xd8] sm:$0xff]
        %v675 = vld [vmem:[#allocation2 + $0xe0] sm:$0xff]
        %v676 = vld [vmem:[#allocation2 + $0xe8] sm:$0xff]
        %v677 = vld [vmem:[#allocation2 + $0xf0] sm:$0xff]
        %v678 = vld [vmem:[#allocation2 + $0xf8] sm:$0xff]
        %v679 = vld [vmem:[%s2] sm:$0xf]
        %v681 = vlaneseq
        %v682 = vshrl.u32 %v681, 7
        %v683 = vsub.s32 0, %v682
        %v684 = vrot.slane %v679, %v683
        %v685 = vlaneseq
        %v686 = vshrl.u32 %v685, 7
        %v687 = vsub.s32 1, %v686
        %v688 = vrot.slane %v679, %v687
        %v689 = vlaneseq
        %v690 = vshrl.u32 %v689, 7
        %v691 = vsub.s32 2, %v690
        %v692 = vrot.slane %v679, %v691
        %v693 = vlaneseq
        %v694 = vshrl.u32 %v693, 7
        %v695 = vsub.s32 3, %v694
        %v696 = vrot.slane %v679, %v695
        %vm701 = vcmask 523264
        %v703 = vsel %vm701, %v646, 0
        %705 = vmatprep.subr.mxu0 %v648
        %706 = vmatpush1.msra.mxu0 %v647
        %707 = vmatprep.subr.mxu0 %v652
        %708 = vmatpush1.msra.mxu0 %v651
        %709 = vmatprep.subr.mxu0 %v656
        %710 = vmatpush1.msra.mxu0 %v655
        %711 = vmatprep.subr.mxu0 %v660
        %712 = vmatpush1.msra.mxu0 %v659
        %713 = vmatprep.subr.mxu0 %v664
        %714 = vmatpush1.msra.mxu0 %v663
        %715 = vmatprep.subr.mxu0 %v668
        %716 = vmatpush1.msra.mxu0 %v667
        %717 = vmatprep.subr.mxu0 %v672
        %718 = vmatpush1.msra.mxu0 %v671
        %719 = vmatprep.subr.mxu0 %v676
        %720 = vmatpush1.msra.mxu0 %v675
        %721 = vmatprep.subr.mxu0 0.0
        %722 = vmatpush1.msra.mxu0 0.0
        %723 = vmatprep.subr.mxu0 0.0
        %724 = vmatpush1.msra.mxu0 0.0
        %725 = vmatprep.subr.mxu0 0.0
        %726 = vmatpush1.msra.mxu0 0.0
        %727 = vmatprep.subr.mxu0 0.0
        %728 = vmatpush1.msra.mxu0 0.0
        %729 = vmatprep.subr.mxu0 0.0
        %730 = vmatpush1.msra.mxu0 0.0
        %731 = vmatprep.subr.mxu0 0.0
        %732 = vmatpush1.msra.mxu0 0.0
        %733 = vmatprep.subr.mxu0 0.0
        %734 = vmatpush1.msra.mxu0 0.0
        %735 = vmatprep.subr.mxu0 0.0
        %736 = vmatpush1.msra.mxu0 0.0
        %737 = vmatprep.subr.mxu0 0.0
        %738 = vmatpush1.msra.mxu0 0.0
        %739 = vmatprep.subr.mxu0 0.0
        %740 = vmatpush1.msra.mxu0 0.0
        %741 = vmatprep.subr.mxu0 0.0
        %742 = vmatpush1.msra.mxu0 0.0
        %743 = vmatprep.subr.mxu0 0.0
        %744 = vmatpush1.msra.mxu0 0.0
        %745 = vmatprep.subr.mxu0 0.0
        %746 = vmatpush1.msra.mxu0 0.0
        %747 = vmatprep.subr.mxu0 0.0
        %748 = vmatpush1.msra.mxu0 0.0
        %749 = vmatprep.subr.mxu0 0.0
        %750 = vmatpush1.msra.mxu0 0.0
        %751 = vmatprep.subr.mxu0 0.0
        %752 = vmatpush1.msra.mxu0 0.0
        %753 = vmatprep.subr.mxu0 0.0
        %754 = vmatpush1.msra.mxu0 0.0
        %755 = vmatprep.subr.mxu0 0.0
        %756 = vmatpush1.msra.mxu0 0.0
        %757 = vmatprep.subr.mxu0 0.0
        %758 = vmatpush1.msra.mxu0 0.0
        %759 = vmatprep.subr.mxu0 0.0
        %760 = vmatpush1.msra.mxu0 0.0
        %761 = vmatprep.subr.mxu0 0.0
        %762 = vmatpush1.msra.mxu0 0.0
        %763 = vmatprep.subr.mxu0 0.0
        %764 = vmatpush1.msra.mxu0 0.0
        %765 = vmatprep.subr.mxu0 0.0
        %766 = vmatpush1.msra.mxu0 0.0
        %767 = vmatprep.subr.mxu0 0.0
        %768 = vmatpush1.msra.mxu0 0.0
        %769 = vmatprep.mubr.f32.mxu0 0.0
        %770 = vmatmul.mubr.f32.gmra.mrb[0].mxu0 %v703
        %v771 = vpop.f32.mrb[0].mxu0
        %v772 = vadd.f32 %v684, %v771
        %v773 = vpop.f32.mrb[0].mxu0
        %v774 = vadd.f32 %v688, %v773
        %775 = vdwg.mxu0
        %776 = vmatprep.subr.mxu0 %v650
        %777 = vmatpush1.msra.mxu0 %v649
        %778 = vmatprep.subr.mxu0 %v654
        %779 = vmatpush1.msra.mxu0 %v653
        %780 = vmatprep.subr.mxu0 %v658
        %781 = vmatpush1.msra.mxu0 %v657
        %782 = vmatprep.subr.mxu0 %v662
        %783 = vmatpush1.msra.mxu0 %v661
        %784 = vmatprep.subr.mxu0 %v666
        %785 = vmatpush1.msra.mxu0 %v665
        %786 = vmatprep.subr.mxu0 %v670
        %787 = vmatpush1.msra.mxu0 %v669
        %788 = vmatprep.subr.mxu0 %v674
        %789 = vmatpush1.msra.mxu0 %v673
        %790 = vmatprep.subr.mxu0 %v678
        %791 = vmatpush1.msra.mxu0 %v677
        %792 = vmatprep.subr.mxu0 0.0
        %793 = vmatpush1.msra.mxu0 0.0
        %794 = vmatprep.subr.mxu0 0.0
        %795 = vmatpush1.msra.mxu0 0.0
        %796 = vmatprep.subr.mxu0 0.0
        %797 = vmatpush1.msra.mxu0 0.0
        %798 = vmatprep.subr.mxu0 0.0
        %799 = vmatpush1.msra.mxu0 0.0
        %800 = vmatprep.subr.mxu0 0.0
        %801 = vmatpush1.msra.mxu0 0.0
        %802 = vmatprep.subr.mxu0 0.0
        %803 = vmatpush1.msra.mxu0 0.0
        %804 = vmatprep.subr.mxu0 0.0
        %805 = vmatpush1.msra.mxu0 0.0
        %806 = vmatprep.subr.mxu0 0.0
        %807 = vmatpush1.msra.mxu0 0.0
        %808 = vmatprep.subr.mxu0 0.0
        %809 = vmatpush1.msra.mxu0 0.0
        %810 = vmatprep.subr.mxu0 0.0
        %811 = vmatpush1.msra.mxu0 0.0
        %812 = vmatprep.subr.mxu0 0.0
        %813 = vmatpush1.msra.mxu0 0.0
        %814 = vmatprep.subr.mxu0 0.0
        %815 = vmatpush1.msra.mxu0 0.0
        %816 = vmatprep.subr.mxu0 0.0
        %817 = vmatpush1.msra.mxu0 0.0
        %818 = vmatprep.subr.mxu0 0.0
        %819 = vmatpush1.msra.mxu0 0.0
        %820 = vmatprep.subr.mxu0 0.0
        %821 = vmatpush1.msra.mxu0 0.0
        %822 = vmatprep.subr.mxu0 0.0
        %823 = vmatpush1.msra.mxu0 0.0
        %824 = vmatprep.subr.mxu0 0.0
        %825 = vmatpush1.msra.mxu0 0.0
        %826 = vmatprep.subr.mxu0 0.0
        %827 = vmatpush1.msra.mxu0 0.0
        %828 = vmatprep.subr.mxu0 0.0
        %829 = vmatpush1.msra.mxu0 0.0
        %830 = vmatprep.subr.mxu0 0.0
        %831 = vmatpush1.msra.mxu0 0.0
        %832 = vmatprep.subr.mxu0 0.0
        %833 = vmatpush1.msra.mxu0 0.0
        %834 = vmatprep.subr.mxu0 0.0
        %835 = vmatpush1.msra.mxu0 0.0
        %836 = vmatprep.subr.mxu0 0.0
        %837 = vmatpush1.msra.mxu0 0.0
        %838 = vmatprep.subr.mxu0 0.0
        %839 = vmatpush1.msra.mxu0 0.0
        %840 = vmatprep.mubr.f32.mxu0 0.0
        %841 = vmatmul.mubr.f32.gmra.mrb[0].mxu0 %v703
        %v842 = vpop.f32.mrb[0].mxu0
        %v843 = vadd.f32 %v692, %v842
        %v844 = vpop.f32.mrb[0].mxu0
        %v845 = vadd.f32 %v696, %v844
        %846 = vdwg.mxu0
        %v847 = vmax.f32 %v772, 0.0
        %v848 = vmax.f32 %v774, 0.0
        %v849 = vmax.f32 %v843, 0.0
        %v850 = vmax.f32 %v845, 0.0
        %v851 = vld [vmem:[#allocation5] sm:$0xff]
        %v852 = vld [vmem:[#allocation5 + $0x8] sm:$0xff]
        %v853 = vld [vmem:[#allocation5 + $0x10] sm:$0xff]
        %v854 = vld [vmem:[#allocation5 + $0x18] sm:$0xff]
        %v855 = vld [vmem:[#allocation5 + $0x20] sm:$0xff]
        %v856 = vld [vmem:[#allocation5 + $0x28] sm:$0xff]
        %v857 = vld [vmem:[#allocation5 + $0x30] sm:$0xff]
        %v858 = vld [vmem:[#allocation5 + $0x38] sm:$0xff]
        %v859 = vld [vmem:[#allocation5 + $0x40] sm:$0xff]
        %v860 = vld [vmem:[#allocation5 + $0x48] sm:$0xff]
        %v861 = vld [vmem:[#allocation5 + $0x50] sm:$0xff]
        %v862 = vld [vmem:[#allocation5 + $0x58] sm:$0xff]
        %v863 = vld [vmem:[#allocation5 + $0x60] sm:$0xff]
        %v864 = vld [vmem:[#allocation5 + $0x68] sm:$0xff]
        %v865 = vld [vmem:[#allocation5 + $0x70] sm:$0xff]
        %v866 = vld [vmem:[#allocation5 + $0x78] sm:$0xff]
        %v867 = vld [vmem:[#allocation5 + $0x80] sm:$0xff]
        %v868 = vld [vmem:[#allocation5 + $0x88] sm:$0xff]
        %v869 = vld [vmem:[#allocation5 + $0x90] sm:$0xff]
        %v870 = vld [vmem:[#allocation5 + $0x98] sm:$0xff]
        %v871 = vld [vmem:[#allocation5 + $0xa0] sm:$0xff]
        %v872 = vld [vmem:[#allocation5 + $0xa8] sm:$0xff]
        %v873 = vld [vmem:[#allocation5 + $0xb0] sm:$0xff]
        %v874 = vld [vmem:[#allocation5 + $0xb8] sm:$0xff]
        %v875 = vld [vmem:[#allocation5 + $0xc0] sm:$0xff]
        %v876 = vld [vmem:[#allocation5 + $0xc8] sm:$0xff]
        %v877 = vld [vmem:[#allocation5 + $0xd0] sm:$0xff]
        %v878 = vld [vmem:[#allocation5 + $0xd8] sm:$0xff]
        %v879 = vld [vmem:[#allocation5 + $0xe0] sm:$0xff]
        %v880 = vld [vmem:[#allocation5 + $0xe8] sm:$0xff]
        %v881 = vld [vmem:[#allocation5 + $0xf0] sm:$0xff]
        %v882 = vld [vmem:[#allocation5 + $0xf8] sm:$0xff]
        %v883 = vld [vmem:[%s4] sm:$0x1]
        %v885 = vlaneseq
        %v886 = vshrl.u32 %v885, 7
        %v887 = vsub.s32 0, %v886
        %v888 = vrot.slane %v883, %v887
        %890 = vmatprep.subr.mxu0 0.0
        %891 = vmatpush1.msra.mxu0 %v851
        %892 = vmatprep.subr.mxu0 0.0
        %893 = vmatpush1.msra.mxu0 %v852
        %894 = vmatprep.subr.mxu0 0.0
        %895 = vmatpush1.msra.mxu0 %v853
        %896 = vmatprep.subr.mxu0 0.0
        %897 = vmatpush1.msra.mxu0 %v854
        %898 = vmatprep.subr.mxu0 0.0
        %899 = vmatpush1.msra.mxu0 %v855
        %900 = vmatprep.subr.mxu0 0.0
        %901 = vmatpush1.msra.mxu0 %v856
        %902 = vmatprep.subr.mxu0 0.0
        %903 = vmatpush1.msra.mxu0 %v857
        %904 = vmatprep.subr.mxu0 0.0
        %905 = vmatpush1.msra.mxu0 %v858
        %906 = vmatprep.subr.mxu0 0.0
        %907 = vmatpush1.msra.mxu0 %v859
        %908 = vmatprep.subr.mxu0 0.0
        %909 = vmatpush1.msra.mxu0 %v860
        %910 = vmatprep.subr.mxu0 0.0
        %911 = vmatpush1.msra.mxu0 %v861
        %912 = vmatprep.subr.mxu0 0.0
        %913 = vmatpush1.msra.mxu0 %v862
        %914 = vmatprep.subr.mxu0 0.0
        %915 = vmatpush1.msra.mxu0 %v863
        %916 = vmatprep.subr.mxu0 0.0
        %917 = vmatpush1.msra.mxu0 %v864
        %918 = vmatprep.subr.mxu0 0.0
        %919 = vmatpush1.msra.mxu0 %v865
        %920 = vmatprep.subr.mxu0 0.0
        %921 = vmatpush1.msra.mxu0 %v866
        %922 = vmatprep.subr.mxu0 0.0
        %923 = vmatpush1.msra.mxu0 %v867
        %924 = vmatprep.subr.mxu0 0.0
        %925 = vmatpush1.msra.mxu0 %v868
        %926 = vmatprep.subr.mxu0 0.0
        %927 = vmatpush1.msra.mxu0 %v869
        %928 = vmatprep.subr.mxu0 0.0
        %929 = vmatpush1.msra.mxu0 %v870
        %930 = vmatprep.subr.mxu0 0.0
        %931 = vmatpush1.msra.mxu0 %v871
        %932 = vmatprep.subr.mxu0 0.0
        %933 = vmatpush1.msra.mxu0 %v872
        %934 = vmatprep.subr.mxu0 0.0
        %935 = vmatpush1.msra.mxu0 %v873
        %936 = vmatprep.subr.mxu0 0.0
        %937 = vmatpush1.msra.mxu0 %v874
        %938 = vmatprep.subr.mxu0 0.0
        %939 = vmatpush1.msra.mxu0 %v875
        %940 = vmatprep.subr.mxu0 0.0
        %941 = vmatpush1.msra.mxu0 %v876
        %942 = vmatprep.subr.mxu0 0.0
        %943 = vmatpush1.msra.mxu0 %v877
        %944 = vmatprep.subr.mxu0 0.0
        %945 = vmatpush1.msra.mxu0 %v878
        %946 = vmatprep.subr.mxu0 0.0
        %947 = vmatpush1.msra.mxu0 %v879
        %948 = vmatprep.subr.mxu0 0.0
        %949 = vmatpush1.msra.mxu0 %v880
        %950 = vmatprep.subr.mxu0 0.0
        %951 = vmatpush1.msra.mxu0 %v881
        %952 = vmatprep.subr.mxu0 0.0
        %953 = vmatpush1.msra.mxu0 %v882
        %954 = vmatprep.mubr.f32.mxu0 %v848
        %955 = vmatmul.mubr.f32.gmra.mrb[0].mxu0 %v847
        %v956 = vpop.f32.mrb[0].mxu0
        %v957 = vadd.f32 %v888, %v956
        %v958 = vpop.f32.mrb[0].mxu0
        %959 = vdwg.mxu0
        %v960 = vmax.f32 %v957, 0.0
        %v961 = vld [vmem:[#allocation7] sm:$0xff]
        %v962 = vld [vmem:[#allocation7 + $0x8] sm:$0xff]
        %v963 = vld [vmem:[#allocation7 + $0x10] sm:$0xff]
        %v964 = vld [vmem:[#allocation7 + $0x18] sm:$0xff]
        %v965 = vld [vmem:[#allocation7 + $0x20] sm:$0xff]
        %v966 = vld [vmem:[#allocation7 + $0x28] sm:$0xff]
        %v967 = vld [vmem:[#allocation7 + $0x30] sm:$0xff]
        %v968 = vld [vmem:[#allocation7 + $0x38] sm:$0xff]
        %v969 = vld [vmem:[#allocation7 + $0x40] sm:$0xff]
        %v970 = vld [vmem:[#allocation7 + $0x48] sm:$0xff]
        %v971 = vld [vmem:[#allocation7 + $0x50] sm:$0xff]
        %v972 = vld [vmem:[#allocation7 + $0x58] sm:$0xff]
        %v973 = vld [vmem:[#allocation7 + $0x60] sm:$0xff]
        %v974 = vld [vmem:[#allocation7 + $0x68] sm:$0xff]
        %v975 = vld [vmem:[#allocation7 + $0x70] sm:$0xff]
        %v976 = vld [vmem:[#allocation7 + $0x78] sm:$0xff]
        %v977 = vld [vmem:[#allocation7 + $0x80] sm:$0xff]
        %v978 = vld [vmem:[#allocation7 + $0x88] sm:$0xff]
        %v979 = vld [vmem:[#allocation7 + $0x90] sm:$0xff]
        %v980 = vld [vmem:[#allocation7 + $0x98] sm:$0xff]
        %v981 = vld [vmem:[#allocation7 + $0xa0] sm:$0xff]
        %v982 = vld [vmem:[#allocation7 + $0xa8] sm:$0xff]
        %v983 = vld [vmem:[#allocation7 + $0xb0] sm:$0xff]
        %v984 = vld [vmem:[#allocation7 + $0xb8] sm:$0xff]
        %v985 = vld [vmem:[#allocation7 + $0xc0] sm:$0xff]
        %v986 = vld [vmem:[#allocation7 + $0xc8] sm:$0xff]
        %v987 = vld [vmem:[#allocation7 + $0xd0] sm:$0xff]
        %v988 = vld [vmem:[#allocation7 + $0xd8] sm:$0xff]
        %v989 = vld [vmem:[#allocation7 + $0xe0] sm:$0xff]
        %v990 = vld [vmem:[#allocation7 + $0xe8] sm:$0xff]
        %v991 = vld [vmem:[#allocation7 + $0xf0] sm:$0xff]
        %v992 = vld [vmem:[#allocation7 + $0xf8] sm:$0xff]
        %v993 = vld [vmem:[%s6] sm:$0x1]
        %v995 = vlaneseq
        %v996 = vshrl.u32 %v995, 7
        %v997 = vsub.s32 0, %v996
        %v998 = vrot.slane %v993, %v997
        %1000 = vmatprep.subr.mxu0 0.0
        %1001 = vmatpush1.msra.mxu0 %v961
        %1002 = vmatprep.subr.mxu0 0.0
        %1003 = vmatpush1.msra.mxu0 %v962
        %1004 = vmatprep.subr.mxu0 0.0
        %1005 = vmatpush1.msra.mxu0 %v963
        %1006 = vmatprep.subr.mxu0 0.0
        %1007 = vmatpush1.msra.mxu0 %v964
        %1008 = vmatprep.subr.mxu0 0.0
        %1009 = vmatpush1.msra.mxu0 %v965
        %1010 = vmatprep.subr.mxu0 0.0
        %1011 = vmatpush1.msra.mxu0 %v966
        %1012 = vmatprep.subr.mxu0 0.0
        %1013 = vmatpush1.msra.mxu0 %v967
        %1014 = vmatprep.subr.mxu0 0.0
        %1015 = vmatpush1.msra.mxu0 %v968
        %1016 = vmatprep.subr.mxu0 0.0
        %1017 = vmatpush1.msra.mxu0 %v969
        %1018 = vmatprep.subr.mxu0 0.0
        %1019 = vmatpush1.msra.mxu0 %v970
        %1020 = vmatprep.subr.mxu0 0.0
        %1021 = vmatpush1.msra.mxu0 %v971
        %1022 = vmatprep.subr.mxu0 0.0
        %1023 = vmatpush1.msra.mxu0 %v972
        %1024 = vmatprep.subr.mxu0 0.0
        %1025 = vmatpush1.msra.mxu0 %v973
        %1026 = vmatprep.subr.mxu0 0.0
        %1027 = vmatpush1.msra.mxu0 %v974
        %1028 = vmatprep.subr.mxu0 0.0
        %1029 = vmatpush1.msra.mxu0 %v975
        %1030 = vmatprep.subr.mxu0 0.0
        %1031 = vmatpush1.msra.mxu0 %v976
        %1032 = vmatprep.subr.mxu0 0.0
        %1033 = vmatpush1.msra.mxu0 %v977
        %1034 = vmatprep.subr.mxu0 0.0
        %1035 = vmatpush1.msra.mxu0 %v978
        %1036 = vmatprep.subr.mxu0 0.0
        %1037 = vmatpush1.msra.mxu0 %v979
        %1038 = vmatprep.subr.mxu0 0.0
        %1039 = vmatpush1.msra.mxu0 %v980
        %1040 = vmatprep.subr.mxu0 0.0
        %1041 = vmatpush1.msra.mxu0 %v981
        %1042 = vmatprep.subr.mxu0 0.0
        %1043 = vmatpush1.msra.mxu0 %v982
        %1044 = vmatprep.subr.mxu0 0.0
        %1045 = vmatpush1.msra.mxu0 %v983
        %1046 = vmatprep.subr.mxu0 0.0
        %1047 = vmatpush1.msra.mxu0 %v984
        %1048 = vmatprep.subr.mxu0 0.0
        %1049 = vmatpush1.msra.mxu0 %v985
        %1050 = vmatprep.subr.mxu0 0.0
        %1051 = vmatpush1.msra.mxu0 %v986
        %1052 = vmatprep.subr.mxu0 0.0
        %1053 = vmatpush1.msra.mxu0 %v987
        %1054 = vmatprep.subr.mxu0 0.0
        %1055 = vmatpush1.msra.mxu0 %v988
        %1056 = vmatprep.subr.mxu0 0.0
        %1057 = vmatpush1.msra.mxu0 %v989
        %1058 = vmatprep.subr.mxu0 0.0
        %1059 = vmatpush1.msra.mxu0 %v990
        %1060 = vmatprep.subr.mxu0 0.0
        %1061 = vmatpush1.msra.mxu0 %v991
        %1062 = vmatprep.subr.mxu0 0.0
        %1063 = vmatpush1.msra.mxu0 %v992
        %1064 = vmatprep.mubr.f32.mxu0 %v850
        %1065 = vmatmul.mubr.f32.gmra.mrb[0].mxu0 %v849
        %v1066 = vpop.f32.mrb[0].mxu0
        %v1067 = vadd.f32 %v998, %v1066
        %v1068 = vpop.f32.mrb[0].mxu0
        %1069 = vdwg.mxu0
        %v1070 = vmax.f32 %v1067, 0.0
        %v1071 = vld [vmem:[#allocation8] sm:$0xff]
        %v1072 = vld [vmem:[#allocation8 + $0x8] sm:$0xff]
        %v1073 = vld [vmem:[#allocation8 + $0x10] sm:$0xff]
        %v1074 = vld [vmem:[#allocation8 + $0x18] sm:$0xff]
        %v1075 = vld [vmem:[#allocation8 + $0x20] sm:$0xff]
        %v1076 = vld [vmem:[#allocation8 + $0x28] sm:$0xff]
        %v1077 = vld [vmem:[#allocation8 + $0x30] sm:$0xff]
        %v1078 = vld [vmem:[#allocation8 + $0x38] sm:$0xff]
        %v1079 = vld [vmem:[#allocation8 + $0x40] sm:$0xff]
        %v1080 = vld [vmem:[#allocation8 + $0x48] sm:$0xff]
        %v1081 = vld [vmem:[#allocation8 + $0x50] sm:$0xff]
        %v1082 = vld [vmem:[#allocation8 + $0x58] sm:$0xff]
        %v1083 = vld [vmem:[#allocation8 + $0x60] sm:$0xff]
        %v1084 = vld [vmem:[#allocation8 + $0x68] sm:$0xff]
        %v1085 = vld [vmem:[#allocation8 + $0x70] sm:$0xff]
        %v1086 = vld [vmem:[#allocation8 + $0x78] sm:$0xff]
        %v1087 = vld [vmem:[#allocation8 + $0x80] sm:$0xff]
        %v1088 = vld [vmem:[#allocation8 + $0x88] sm:$0xff]
        %v1089 = vld [vmem:[#allocation8 + $0x90] sm:$0xff]
        %v1090 = vld [vmem:[#allocation8 + $0x98] sm:$0xff]
        %v1091 = vld [vmem:[#allocation8 + $0xa0] sm:$0xff]
        %v1092 = vld [vmem:[#allocation8 + $0xa8] sm:$0xff]
        %v1093 = vld [vmem:[#allocation8 + $0xb0] sm:$0xff]
        %v1094 = vld [vmem:[#allocation8 + $0xb8] sm:$0xff]
        %v1095 = vld [vmem:[#allocation8 + $0xc0] sm:$0xff]
        %v1096 = vld [vmem:[#allocation8 + $0xc8] sm:$0xff]
        %v1097 = vld [vmem:[#allocation8 + $0xd0] sm:$0xff]
        %v1098 = vld [vmem:[#allocation8 + $0xd8] sm:$0xff]
        %v1099 = vld [vmem:[#allocation8 + $0xe0] sm:$0xff]
        %v1100 = vld [vmem:[#allocation8 + $0xe8] sm:$0xff]
        %v1101 = vld [vmem:[#allocation8 + $0xf0] sm:$0xff]
        %v1102 = vld [vmem:[#allocation8 + $0xf8] sm:$0xff]
        %v1103 = vld [vmem:[#allocation10] sm:$0xff]
        %v1104 = vld [vmem:[#allocation10 + $0x8] sm:$0xff]
        %v1105 = vld [vmem:[#allocation10 + $0x10] sm:$0xff]
        %v1106 = vld [vmem:[#allocation10 + $0x18] sm:$0xff]
        %v1107 = vld [vmem:[#allocation10 + $0x20] sm:$0xff]
        %v1108 = vld [vmem:[#allocation10 + $0x28] sm:$0xff]
        %v1109 = vld [vmem:[#allocation10 + $0x30] sm:$0xff]
        %v1110 = vld [vmem:[#allocation10 + $0x38] sm:$0xff]
        %v1111 = vld [vmem:[#allocation10 + $0x40] sm:$0xff]
        %v1112 = vld [vmem:[#allocation10 + $0x48] sm:$0xff]
        %v1113 = vld [vmem:[#allocation10 + $0x50] sm:$0xff]
        %v1114 = vld [vmem:[#allocation10 + $0x58] sm:$0xff]
        %v1115 = vld [vmem:[#allocation10 + $0x60] sm:$0xff]
        %v1116 = vld [vmem:[#allocation10 + $0x68] sm:$0xff]
        %v1117 = vld [vmem:[#allocation10 + $0x70] sm:$0xff]
        %v1118 = vld [vmem:[#allocation10 + $0x78] sm:$0xff]
        %v1119 = vld [vmem:[#allocation10 + $0x80] sm:$0xff]
        %v1120 = vld [vmem:[#allocation10 + $0x88] sm:$0xff]
        %v1121 = vld [vmem:[#allocation10 + $0x90] sm:$0xff]
        %v1122 = vld [vmem:[#allocation10 + $0x98] sm:$0xff]
        %v1123 = vld [vmem:[#allocation10 + $0xa0] sm:$0xff]
        %v1124 = vld [vmem:[#allocation10 + $0xa8] sm:$0xff]
        %v1125 = vld [vmem:[#allocation10 + $0xb0] sm:$0xff]
        %v1126 = vld [vmem:[#allocation10 + $0xb8] sm:$0xff]
        %v1127 = vld [vmem:[#allocation10 + $0xc0] sm:$0xff]
        %v1128 = vld [vmem:[#allocation10 + $0xc8] sm:$0xff]
        %v1129 = vld [vmem:[#allocation10 + $0xd0] sm:$0xff]
        %v1130 = vld [vmem:[#allocation10 + $0xd8] sm:$0xff]
        %v1131 = vld [vmem:[#allocation10 + $0xe0] sm:$0xff]
        %v1132 = vld [vmem:[#allocation10 + $0xe8] sm:$0xff]
        %v1133 = vld [vmem:[#allocation10 + $0xf0] sm:$0xff]
        %v1134 = vld [vmem:[#allocation10 + $0xf8] sm:$0xff]
        %1135 = vmatprep.subr.mxu0 %v1104
        %1136 = vmatpush1.msra.mxu0 %v1103
        %1137 = vmatprep.subr.mxu0 %v1106
        %1138 = vmatpush1.msra.mxu0 %v1105
        %1139 = vmatprep.subr.mxu0 %v1108
        %1140 = vmatpush1.msra.mxu0 %v1107
        %1141 = vmatprep.subr.mxu0 %v1110
        %1142 = vmatpush1.msra.mxu0 %v1109
        %1143 = vmatprep.subr.mxu0 %v1112
        %1144 = vmatpush1.msra.mxu0 %v1111
        %1145 = vmatprep.subr.mxu0 %v1114
        %1146 = vmatpush1.msra.mxu0 %v1113
        %1147 = vmatprep.subr.mxu0 %v1116
        %1148 = vmatpush1.msra.mxu0 %v1115
        %1149 = vmatprep.subr.mxu0 %v1118
        %1150 = vmatpush1.msra.mxu0 %v1117
        %1151 = vmatprep.subr.mxu0 %v1120
        %1152 = vmatpush1.msra.mxu0 %v1119
        %1153 = vmatprep.subr.mxu0 %v1122
        %1154 = vmatpush1.msra.mxu0 %v1121
        %1155 = vmatprep.subr.mxu0 %v1124
        %1156 = vmatpush1.msra.mxu0 %v1123
        %1157 = vmatprep.subr.mxu0 %v1126
        %1158 = vmatpush1.msra.mxu0 %v1125
        %1159 = vmatprep.subr.mxu0 %v1128
        %1160 = vmatpush1.msra.mxu0 %v1127
        %1161 = vmatprep.subr.mxu0 %v1130
        %1162 = vmatpush1.msra.mxu0 %v1129
        %1163 = vmatprep.subr.mxu0 %v1132
        %1164 = vmatpush1.msra.mxu0 %v1131
        %1165 = vmatprep.subr.mxu0 %v1134
        %1166 = vmatpush1.msra.mxu0 %v1133
        %1167 = vmatprep.subr.mxu0 0.0
        %1168 = vmatpush1.msra.mxu0 0.0
        %1169 = vmatprep.subr.mxu0 0.0
        %1170 = vmatpush1.msra.mxu0 0.0
        %1171 = vmatprep.subr.mxu0 0.0
        %1172 = vmatpush1.msra.mxu0 0.0
        %1173 = vmatprep.subr.mxu0 0.0
        %1174 = vmatpush1.msra.mxu0 0.0
        %1175 = vmatprep.subr.mxu0 0.0
        %1176 = vmatpush1.msra.mxu0 0.0
        %1177 = vmatprep.subr.mxu0 0.0
        %1178 = vmatpush1.msra.mxu0 0.0
        %1179 = vmatprep.subr.mxu0 0.0
        %1180 = vmatpush1.msra.mxu0 0.0
        %1181 = vmatprep.subr.mxu0 0.0
        %1182 = vmatpush1.msra.mxu0 0.0
        %1183 = vmatprep.subr.mxu0 0.0
        %1184 = vmatpush1.msra.mxu0 0.0
        %1185 = vmatprep.subr.mxu0 0.0
        %1186 = vmatpush1.msra.mxu0 0.0
        %1187 = vmatprep.subr.mxu0 0.0
        %1188 = vmatpush1.msra.mxu0 0.0
        %1189 = vmatprep.subr.mxu0 0.0
        %1190 = vmatpush1.msra.mxu0 0.0
        %1191 = vmatprep.subr.mxu0 0.0
        %1192 = vmatpush1.msra.mxu0 0.0
        %1193 = vmatprep.subr.mxu0 0.0
        %1194 = vmatpush1.msra.mxu0 0.0
        %1195 = vmatprep.subr.mxu0 0.0
        %1196 = vmatpush1.msra.mxu0 0.0
        %1197 = vmatprep.subr.mxu0 0.0
        %1198 = vmatpush1.msra.mxu0 0.0
        %1199 = vmatprep.mubr.f32.mxu0 0.0
        %1200 = vmatmul.mubr.f32.gmra.mrb[0].mxu0 %v1070
        %v1201 = vpop.f32.mrb[0].mxu0
        %v1202 = vadd.f32 0.0, %v1201
        %v1203 = vpop.f32.mrb[0].mxu0
        %v1204 = vadd.f32 0.0, %v1203
        %1205 = vdwg.mxu0
        %1206 = vmatprep.subr.mxu0 %v1072
        %1207 = vmatpush1.msra.mxu0 %v1071
        %1208 = vmatprep.subr.mxu0 %v1074
        %1209 = vmatpush1.msra.mxu0 %v1073
        %1210 = vmatprep.subr.mxu0 %v1076
        %1211 = vmatpush1.msra.mxu0 %v1075
        %1212 = vmatprep.subr.mxu0 %v1078
        %1213 = vmatpush1.msra.mxu0 %v1077
        %1214 = vmatprep.subr.mxu0 %v1080
        %1215 = vmatpush1.msra.mxu0 %v1079
        %1216 = vmatprep.subr.mxu0 %v1082
        %1217 = vmatpush1.msra.mxu0 %v1081
        %1218 = vmatprep.subr.mxu0 %v1084
        %1219 = vmatpush1.msra.mxu0 %v1083
        %1220 = vmatprep.subr.mxu0 %v1086
        %1221 = vmatpush1.msra.mxu0 %v1085
        %1222 = vmatprep.subr.mxu0 %v1088
        %1223 = vmatpush1.msra.mxu0 %v1087
        %1224 = vmatprep.subr.mxu0 %v1090
        %1225 = vmatpush1.msra.mxu0 %v1089
        %1226 = vmatprep.subr.mxu0 %v1092
        %1227 = vmatpush1.msra.mxu0 %v1091
        %1228 = vmatprep.subr.mxu0 %v1094
        %1229 = vmatpush1.msra.mxu0 %v1093
        %1230 = vmatprep.subr.mxu0 %v1096
        %1231 = vmatpush1.msra.mxu0 %v1095
        %1232 = vmatprep.subr.mxu0 %v1098
        %1233 = vmatpush1.msra.mxu0 %v1097
        %1234 = vmatprep.subr.mxu0 %v1100
        %1235 = vmatpush1.msra.mxu0 %v1099
        %1236 = vmatprep.subr.mxu0 %v1102
        %1237 = vmatpush1.msra.mxu0 %v1101
        %1238 = vmatprep.subr.mxu0 0.0
        %1239 = vmatpush1.msra.mxu0 0.0
        %1240 = vmatprep.subr.mxu0 0.0
        %1241 = vmatpush1.msra.mxu0 0.0
        %1242 = vmatprep.subr.mxu0 0.0
        %1243 = vmatpush1.msra.mxu0 0.0
        %1244 = vmatprep.subr.mxu0 0.0
        %1245 = vmatpush1.msra.mxu0 0.0
        %1246 = vmatprep.subr.mxu0 0.0
        %1247 = vmatpush1.msra.mxu0 0.0
        %1248 = vmatprep.subr.mxu0 0.0
        %1249 = vmatpush1.msra.mxu0 0.0
        %1250 = vmatprep.subr.mxu0 0.0
        %1251 = vmatpush1.msra.mxu0 0.0
        %1252 = vmatprep.subr.mxu0 0.0
        %1253 = vmatpush1.msra.mxu0 0.0
        %1254 = vmatprep.subr.mxu0 0.0
        %1255 = vmatpush1.msra.mxu0 0.0
        %1256 = vmatprep.subr.mxu0 0.0
        %1257 = vmatpush1.msra.mxu0 0.0
        %1258 = vmatprep.subr.mxu0 0.0
        %1259 = vmatpush1.msra.mxu0 0.0
        %1260 = vmatprep.subr.mxu0 0.0
        %1261 = vmatpush1.msra.mxu0 0.0
        %1262 = vmatprep.subr.mxu0 0.0
        %1263 = vmatpush1.msra.mxu0 0.0
        %1264 = vmatprep.subr.mxu0 0.0
        %1265 = vmatpush1.msra.mxu0 0.0
        %1266 = vmatprep.subr.mxu0 0.0
        %1267 = vmatpush1.msra.mxu0 0.0
        %1268 = vmatprep.subr.mxu0 0.0
        %1269 = vmatpush1.msra.mxu0 0.0
        %1270 = vmatprep.mubr.f32.mxu0 0.0
        %1271 = vmatmul.mubr.f32.gmra.mrb[0].mxu0 %v960
        %v1272 = vpop.f32.mrb[0].mxu0
        %v1273 = vadd.f32 %v1202, %v1272
        %v1274 = vpop.f32.mrb[0].mxu0
        %v1275 = vadd.f32 %v1204, %v1274
        %1276 = vdwg.mxu0
        %v1277 = vld [vmem:[%s9] sm:$0x3]
        %v1279 = vlaneseq
        %v1280 = vshrl.u32 %v1279, 7
        %v1281 = vsub.s32 0, %v1280
        %v1282 = vrot.slane %v1277, %v1281
        %v1283 = vlaneseq
        %v1284 = vshrl.u32 %v1283, 7
        %v1285 = vsub.s32 1, %v1284
        %v1286 = vrot.slane %v1277, %v1285
        %v1289 = vadd.f32 %v1273, %v1282
        %v1290 = vadd.f32 %v1275, %v1286
        %v1291 = vmax.f32 %v1289, 0.0
        %v1292 = vmax.f32 %v1290, 0.0
        %v1293 = vld [vmem:[#allocation11] sm:$0xff]
        %v1294 = vld [vmem:[#allocation11 + $0x8] sm:$0xff]
        %v1295 = vld [vmem:[#allocation11 + $0x10] sm:$0xff]
        %v1296 = vld [vmem:[#allocation11 + $0x18] sm:$0xff]
        %v1297 = vld [vmem:[#allocation11 + $0x20] sm:$0xff]
        %v1298 = vld [vmem:[#allocation11 + $0x28] sm:$0xff]
        %v1299 = vld [vmem:[#allocation11 + $0x30] sm:$0xff]
        %v1300 = vld [vmem:[#allocation11 + $0x38] sm:$0xff]
        %v1301 = vld [vmem:[#allocation11 + $0x40] sm:$0xff]
        %v1302 = vld [vmem:[#allocation11 + $0x48] sm:$0xff]
        %v1303 = vld [vmem:[#allocation11 + $0x50] sm:$0xff]
        %v1304 = vld [vmem:[#allocation11 + $0x58] sm:$0xff]
        %v1305 = vld [vmem:[#allocation11 + $0x60] sm:$0xff]
        %v1306 = vld [vmem:[#allocation11 + $0x68] sm:$0xff]
        %v1307 = vld [vmem:[#allocation11 + $0x70] sm:$0xff]
        %v1308 = vld [vmem:[#allocation11 + $0x78] sm:$0xff]
        %v1309 = vld [vmem:[#allocation11 + $0x80] sm:$0xff]
        %v1310 = vld [vmem:[#allocation11 + $0x88] sm:$0xff]
        %v1311 = vld [vmem:[#allocation11 + $0x90] sm:$0xff]
        %v1312 = vld [vmem:[#allocation11 + $0x98] sm:$0xff]
        %v1313 = vld [vmem:[#allocation11 + $0xa0] sm:$0xff]
        %v1314 = vld [vmem:[#allocation11 + $0xa8] sm:$0xff]
        %v1315 = vld [vmem:[#allocation11 + $0xb0] sm:$0xff]
        %v1316 = vld [vmem:[#allocation11 + $0xb8] sm:$0xff]
        %v1317 = vld [vmem:[#allocation11 + $0xc0] sm:$0xff]
        %v1318 = vld [vmem:[#allocation11 + $0xc8] sm:$0xff]
        %v1319 = vld [vmem:[#allocation11 + $0xd0] sm:$0xff]
        %v1320 = vld [vmem:[#allocation11 + $0xd8] sm:$0xff]
        %v1321 = vld [vmem:[#allocation11 + $0xe0] sm:$0xff]
        %v1322 = vld [vmem:[#allocation11 + $0xe8] sm:$0xff]
        %v1323 = vld [vmem:[#allocation11 + $0xf0] sm:$0xff]
        %v1324 = vld [vmem:[#allocation11 + $0xf8] sm:$0xff]
        %v1325 = vld [vmem:[%s11] sm:$0x1]
        %v1327 = vlaneseq
        %v1328 = vshrl.u32 %v1327, 7
        %v1329 = vsub.s32 0, %v1328
        %v1330 = vrot.slane %v1325, %v1329
        %1332 = vmatprep.subr.mxu0 0.0
        %1333 = vmatpush1.msra.mxu0 %v1293
        %1334 = vmatprep.subr.mxu0 0.0
        %1335 = vmatpush1.msra.mxu0 %v1294
        %1336 = vmatprep.subr.mxu0 0.0
        %1337 = vmatpush1.msra.mxu0 %v1295
        %1338 = vmatprep.subr.mxu0 0.0
        %1339 = vmatpush1.msra.mxu0 %v1296
        %1340 = vmatprep.subr.mxu0 0.0
        %1341 = vmatpush1.msra.mxu0 %v1297
        %1342 = vmatprep.subr.mxu0 0.0
        %1343 = vmatpush1.msra.mxu0 %v1298
        %1344 = vmatprep.subr.mxu0 0.0
        %1345 = vmatpush1.msra.mxu0 %v1299
        %1346 = vmatprep.subr.mxu0 0.0
        %1347 = vmatpush1.msra.mxu0 %v1300
        %1348 = vmatprep.subr.mxu0 0.0
        %1349 = vmatpush1.msra.mxu0 %v1301
        %1350 = vmatprep.subr.mxu0 0.0
        %1351 = vmatpush1.msra.mxu0 %v1302
        %1352 = vmatprep.subr.mxu0 0.0
        %1353 = vmatpush1.msra.mxu0 %v1303
        %1354 = vmatprep.subr.mxu0 0.0
        %1355 = vmatpush1.msra.mxu0 %v1304
        %1356 = vmatprep.subr.mxu0 0.0
        %1357 = vmatpush1.msra.mxu0 %v1305
        %1358 = vmatprep.subr.mxu0 0.0
        %1359 = vmatpush1.msra.mxu0 %v1306
        %1360 = vmatprep.subr.mxu0 0.0
        %1361 = vmatpush1.msra.mxu0 %v1307
        %1362 = vmatprep.subr.mxu0 0.0
        %1363 = vmatpush1.msra.mxu0 %v1308
        %1364 = vmatprep.subr.mxu0 0.0
        %1365 = vmatpush1.msra.mxu0 %v1309
        %1366 = vmatprep.subr.mxu0 0.0
        %1367 = vmatpush1.msra.mxu0 %v1310
        %1368 = vmatprep.subr.mxu0 0.0
        %1369 = vmatpush1.msra.mxu0 %v1311
        %1370 = vmatprep.subr.mxu0 0.0
        %1371 = vmatpush1.msra.mxu0 %v1312
        %1372 = vmatprep.subr.mxu0 0.0
        %1373 = vmatpush1.msra.mxu0 %v1313
        %1374 = vmatprep.subr.mxu0 0.0
        %1375 = vmatpush1.msra.mxu0 %v1314
        %1376 = vmatprep.subr.mxu0 0.0
        %1377 = vmatpush1.msra.mxu0 %v1315
        %1378 = vmatprep.subr.mxu0 0.0
        %1379 = vmatpush1.msra.mxu0 %v1316
        %1380 = vmatprep.subr.mxu0 0.0
        %1381 = vmatpush1.msra.mxu0 %v1317
        %1382 = vmatprep.subr.mxu0 0.0
        %1383 = vmatpush1.msra.mxu0 %v1318
        %1384 = vmatprep.subr.mxu0 0.0
        %1385 = vmatpush1.msra.mxu0 %v1319
        %1386 = vmatprep.subr.mxu0 0.0
        %1387 = vmatpush1.msra.mxu0 %v1320
        %1388 = vmatprep.subr.mxu0 0.0
        %1389 = vmatpush1.msra.mxu0 %v1321
        %1390 = vmatprep.subr.mxu0 0.0
        %1391 = vmatpush1.msra.mxu0 %v1322
        %1392 = vmatprep.subr.mxu0 0.0
        %1393 = vmatpush1.msra.mxu0 %v1323
        %1394 = vmatprep.subr.mxu0 0.0
        %1395 = vmatpush1.msra.mxu0 %v1324
        %1396 = vmatprep.mubr.f32.mxu0 %v1292
        %1397 = vmatmul.mubr.f32.gmra.mrb[0].mxu0 %v1291
        %v1398 = vpop.f32.mrb[0].mxu0
        %v1399 = vadd.f32 %v1330, %v1398
        %v1400 = vpop.f32.mrb[0].mxu0
        %1401 = vdwg.mxu0
        %v1402 = vmax.f32 %v1399, 0.0
        %v1403 = vld [vmem:[%s12] sm:$0xff]
        %v1404 = vld [vmem:[%s12 + $0x8] sm:$0xff]
        %v1405 = vld [vmem:[%s12 + $0x10] sm:$0xff]
        %v1406 = vld [vmem:[%s12 + $0x18] sm:$0xff]
        %v1407 = vld [vmem:[%s12 + $0x20] sm:$0xff]
        %v1408 = vld [vmem:[%s12 + $0x28] sm:$0xff]
        %v1409 = vld [vmem:[%s12 + $0x30] sm:$0xff]
        %v1410 = vld [vmem:[%s12 + $0x38] sm:$0xff]
        %v1411 = vld [vmem:[%s12 + $0x40] sm:$0xff]
        %v1412 = vld [vmem:[%s12 + $0x48] sm:$0xff]
        %v1413 = vld [vmem:[%s12 + $0x50] sm:$0xff]
        %v1414 = vld [vmem:[%s12 + $0x58] sm:$0xff]
        %v1415 = vld [vmem:[%s12 + $0x60] sm:$0xff]
        %v1416 = vld [vmem:[%s12 + $0x68] sm:$0xff]
        %v1417 = vld [vmem:[%s12 + $0x70] sm:$0xff]
        %v1418 = vld [vmem:[%s12 + $0x78] sm:$0xff]
        %v1419 = vld [vmem:[%s13] sm:$0x1]
        %v1421 = vlaneseq
        %v1422 = vshrl.u32 %v1421, 7
        %v1423 = vsub.s32 0, %v1422
        %v1424 = vrot.slane %v1419, %v1423
        %1426 = vmatprep.subr.mxu0 0.0
        %1427 = vmatpush1.msra.mxu0 %v1403
        %1428 = vmatprep.subr.mxu0 0.0
        %1429 = vmatpush1.msra.mxu0 %v1404
        %1430 = vmatprep.subr.mxu0 0.0
        %1431 = vmatpush1.msra.mxu0 %v1405
        %1432 = vmatprep.subr.mxu0 0.0
        %1433 = vmatpush1.msra.mxu0 %v1406
        %1434 = vmatprep.subr.mxu0 0.0
        %1435 = vmatpush1.msra.mxu0 %v1407
        %1436 = vmatprep.subr.mxu0 0.0
        %1437 = vmatpush1.msra.mxu0 %v1408
        %1438 = vmatprep.subr.mxu0 0.0
        %1439 = vmatpush1.msra.mxu0 %v1409
        %1440 = vmatprep.subr.mxu0 0.0
        %1441 = vmatpush1.msra.mxu0 %v1410
        %1442 = vmatprep.subr.mxu0 0.0
        %1443 = vmatpush1.msra.mxu0 %v1411
        %1444 = vmatprep.subr.mxu0 0.0
        %1445 = vmatpush1.msra.mxu0 %v1412
        %1446 = vmatprep.subr.mxu0 0.0
        %1447 = vmatpush1.msra.mxu0 %v1413
        %1448 = vmatprep.subr.mxu0 0.0
        %1449 = vmatpush1.msra.mxu0 %v1414
        %1450 = vmatprep.subr.mxu0 0.0
        %1451 = vmatpush1.msra.mxu0 %v1415
        %1452 = vmatprep.subr.mxu0 0.0
        %1453 = vmatpush1.msra.mxu0 %v1416
        %1454 = vmatprep.subr.mxu0 0.0
        %1455 = vmatpush1.msra.mxu0 %v1417
        %1456 = vmatprep.subr.mxu0 0.0
        %1457 = vmatpush1.msra.mxu0 %v1418
        %1458 = vmatprep.subr.mxu0 0.0
        %1459 = vmatpush1.msra.mxu0 0.0
        %1460 = vmatprep.subr.mxu0 0.0
        %1461 = vmatpush1.msra.mxu0 0.0
        %1462 = vmatprep.subr.mxu0 0.0
        %1463 = vmatpush1.msra.mxu0 0.0
        %1464 = vmatprep.subr.mxu0 0.0
        %1465 = vmatpush1.msra.mxu0 0.0
        %1466 = vmatprep.subr.mxu0 0.0
        %1467 = vmatpush1.msra.mxu0 0.0
        %1468 = vmatprep.subr.mxu0 0.0
        %1469 = vmatpush1.msra.mxu0 0.0
        %1470 = vmatprep.subr.mxu0 0.0
        %1471 = vmatpush1.msra.mxu0 0.0
        %1472 = vmatprep.subr.mxu0 0.0
        %1473 = vmatpush1.msra.mxu0 0.0
        %1474 = vmatprep.subr.mxu0 0.0
        %1475 = vmatpush1.msra.mxu0 0.0
        %1476 = vmatprep.subr.mxu0 0.0
        %1477 = vmatpush1.msra.mxu0 0.0
        %1478 = vmatprep.subr.mxu0 0.0
        %1479 = vmatpush1.msra.mxu0 0.0
        %1480 = vmatprep.subr.mxu0 0.0
        %1481 = vmatpush1.msra.mxu0 0.0
        %1482 = vmatprep.subr.mxu0 0.0
        %1483 = vmatpush1.msra.mxu0 0.0
        %1484 = vmatprep.subr.mxu0 0.0
        %1485 = vmatpush1.msra.mxu0 0.0
        %1486 = vmatprep.subr.mxu0 0.0
        %1487 = vmatpush1.msra.mxu0 0.0
        %1488 = vmatprep.subr.mxu0 0.0
        %1489 = vmatpush1.msra.mxu0 0.0
        %1490 = vmatprep.mubr.f32.mxu0 0.0
        %1491 = vmatmul.mubr.f32.gmra.mrb[0].mxu0 %v1402
        %v1492 = vpop.f32.mrb[0].mxu0
        %v1493 = vadd.f32 %v1424, %v1492
        %v1494 = vpop.f32.mrb[0].mxu0
        %1495 = vdwg.mxu0
        %v1496 = vld [vmem:[%s14] sm:$0xff]
        %v1497 = vld [vmem:[%s14 + $0x8] sm:$0xff]
        %v1498 = vld [vmem:[%s14 + $0x10] sm:$0xff]
        %v1499 = vld [vmem:[%s14 + $0x18] sm:$0xff]
        %v1500 = vld [vmem:[%s14 + $0x20] sm:$0xff]
        %v1501 = vld [vmem:[%s14 + $0x28] sm:$0xff]
        %v1502 = vld [vmem:[%s14 + $0x30] sm:$0xff]
        %v1503 = vld [vmem:[%s14 + $0x38] sm:$0xff]
        %v1504 = vld [vmem:[%s14 + $0x40] sm:$0xff]
        %v1505 = vld [vmem:[%s14 + $0x48] sm:$0xff]
        %v1506 = vld [vmem:[%s14 + $0x50] sm:$0xff]
        %v1507 = vld [vmem:[%s14 + $0x58] sm:$0xff]
        %v1508 = vld [vmem:[%s14 + $0x60] sm:$0xff]
        %v1509 = vld [vmem:[%s14 + $0x68] sm:$0xff]
        %v1510 = vld [vmem:[%s14 + $0x70] sm:$0xff]
        %v1511 = vld [vmem:[%s14 + $0x78] sm:$0xff]
        %1512 = vmatprep.subr.mxu0 0.0
        %1513 = vmatpush1.msra.mxu0 %v1496
        %1514 = vmatprep.subr.mxu0 0.0
        %1515 = vmatpush1.msra.mxu0 %v1497
        %1516 = vmatprep.subr.mxu0 0.0
        %1517 = vmatpush1.msra.mxu0 %v1498
        %1518 = vmatprep.subr.mxu0 0.0
        %1519 = vmatpush1.msra.mxu0 %v1499
        %1520 = vmatprep.subr.mxu0 0.0
        %1521 = vmatpush1.msra.mxu0 %v1500
        %1522 = vmatprep.subr.mxu0 0.0
        %1523 = vmatpush1.msra.mxu0 %v1501
        %1524 = vmatprep.subr.mxu0 0.0
        %1525 = vmatpush1.msra.mxu0 %v1502
        %1526 = vmatprep.subr.mxu0 0.0
        %1527 = vmatpush1.msra.mxu0 %v1503
        %1528 = vmatprep.subr.mxu0 0.0
        %1529 = vmatpush1.msra.mxu0 %v1504
        %1530 = vmatprep.subr.mxu0 0.0
        %1531 = vmatpush1.msra.mxu0 %v1505
        %1532 = vmatprep.subr.mxu0 0.0
        %1533 = vmatpush1.msra.mxu0 %v1506
        %1534 = vmatprep.subr.mxu0 0.0
        %1535 = vmatpush1.msra.mxu0 %v1507
        %1536 = vmatprep.subr.mxu0 0.0
        %1537 = vmatpush1.msra.mxu0 %v1508
        %1538 = vmatprep.subr.mxu0 0.0
        %1539 = vmatpush1.msra.mxu0 %v1509
        %1540 = vmatprep.subr.mxu0 0.0
        %1541 = vmatpush1.msra.mxu0 %v1510
        %1542 = vmatprep.subr.mxu0 0.0
        %1543 = vmatpush1.msra.mxu0 %v1511
        %1544 = vmatprep.subr.mxu0 0.0
        %1545 = vmatpush1.msra.mxu0 0.0
        %1546 = vmatprep.subr.mxu0 0.0
        %1547 = vmatpush1.msra.mxu0 0.0
        %1548 = vmatprep.subr.mxu0 0.0
        %1549 = vmatpush1.msra.mxu0 0.0
        %1550 = vmatprep.subr.mxu0 0.0
        %1551 = vmatpush1.msra.mxu0 0.0
        %1552 = vmatprep.subr.mxu0 0.0
        %1553 = vmatpush1.msra.mxu0 0.0
        %1554 = vmatprep.subr.mxu0 0.0
        %1555 = vmatpush1.msra.mxu0 0.0
        %1556 = vmatprep.subr.mxu0 0.0
        %1557 = vmatpush1.msra.mxu0 0.0
        %1558 = vmatprep.subr.mxu0 0.0
        %1559 = vmatpush1.msra.mxu0 0.0
        %1560 = vmatprep.subr.mxu0 0.0
        %1561 = vmatpush1.msra.mxu0 0.0
        %1562 = vmatprep.subr.mxu0 0.0
        %1563 = vmatpush1.msra.mxu0 0.0
        %1564 = vmatprep.subr.mxu0 0.0
        %1565 = vmatpush1.msra.mxu0 0.0
        %1566 = vmatprep.subr.mxu0 0.0
        %1567 = vmatpush1.msra.mxu0 0.0
        %1568 = vmatprep.subr.mxu0 0.0
        %1569 = vmatpush1.msra.mxu0 0.0
        %1570 = vmatprep.subr.mxu0 0.0
        %1571 = vmatpush1.msra.mxu0 0.0
        %1572 = vmatprep.subr.mxu0 0.0
        %1573 = vmatpush1.msra.mxu0 0.0
        %1574 = vmatprep.subr.mxu0 0.0
        %1575 = vmatpush1.msra.mxu0 0.0
        %1576 = vmatprep.mubr.f32.mxu0 0.0
        %1577 = vmatmul.mubr.f32.gmra.mrb[0].mxu0 %v1070
        %v1578 = vpop.f32.mrb[0].mxu0
        %v1579 = vadd.f32 0.0, %v1578
        %v1580 = vpop.f32.mrb[0].mxu0
        %1581 = vdwg.mxu0
        %v1582 = vld [vmem:[#allocation13] sm:$0xff]
        %v1583 = vld [vmem:[#allocation13 + $0x8] sm:$0xff]
        %v1584 = vld [vmem:[#allocation13 + $0x10] sm:$0xff]
        %v1585 = vld [vmem:[#allocation13 + $0x18] sm:$0xff]
        %v1586 = vld [vmem:[#allocation13 + $0x20] sm:$0xff]
        %v1587 = vld [vmem:[#allocation13 + $0x28] sm:$0xff]
        %v1588 = vld [vmem:[#allocation13 + $0x30] sm:$0xff]
        %v1589 = vld [vmem:[#allocation13 + $0x38] sm:$0xff]
        %v1590 = vld [vmem:[#allocation13 + $0x40] sm:$0xff]
        %v1591 = vld [vmem:[#allocation13 + $0x48] sm:$0xff]
        %v1592 = vld [vmem:[#allocation13 + $0x50] sm:$0xff]
        %v1593 = vld [vmem:[#allocation13 + $0x58] sm:$0xff]
        %v1594 = vld [vmem:[#allocation13 + $0x60] sm:$0xff]
        %v1595 = vld [vmem:[#allocation13 + $0x68] sm:$0xff]
        %v1596 = vld [vmem:[#allocation13 + $0x70] sm:$0xff]
        %v1597 = vld [vmem:[#allocation13 + $0x78] sm:$0xff]
        %1598 = vmatprep.subr.mxu0 0.0
        %1599 = vmatpush1.msra.mxu0 %v1582
        %1600 = vmatprep.subr.mxu0 0.0
        %1601 = vmatpush1.msra.mxu0 %v1583
        %1602 = vmatprep.subr.mxu0 0.0
        %1603 = vmatpush1.msra.mxu0 %v1584
        %1604 = vmatprep.subr.mxu0 0.0
        %1605 = vmatpush1.msra.mxu0 %v1585
        %1606 = vmatprep.subr.mxu0 0.0
        %1607 = vmatpush1.msra.mxu0 %v1586
        %1608 = vmatprep.subr.mxu0 0.0
        %1609 = vmatpush1.msra.mxu0 %v1587
        %1610 = vmatprep.subr.mxu0 0.0
        %1611 = vmatpush1.msra.mxu0 %v1588
        %1612 = vmatprep.subr.mxu0 0.0
        %1613 = vmatpush1.msra.mxu0 %v1589
        %1614 = vmatprep.subr.mxu0 0.0
        %1615 = vmatpush1.msra.mxu0 %v1590
        %1616 = vmatprep.subr.mxu0 0.0
        %1617 = vmatpush1.msra.mxu0 %v1591
        %1618 = vmatprep.subr.mxu0 0.0
        %1619 = vmatpush1.msra.mxu0 %v1592
        %1620 = vmatprep.subr.mxu0 0.0
        %1621 = vmatpush1.msra.mxu0 %v1593
        %1622 = vmatprep.subr.mxu0 0.0
        %1623 = vmatpush1.msra.mxu0 %v1594
        %1624 = vmatprep.subr.mxu0 0.0
        %1625 = vmatpush1.msra.mxu0 %v1595
        %1626 = vmatprep.subr.mxu0 0.0
        %1627 = vmatpush1.msra.mxu0 %v1596
        %1628 = vmatprep.subr.mxu0 0.0
        %1629 = vmatpush1.msra.mxu0 %v1597
        %1630 = vmatprep.subr.mxu0 0.0
        %1631 = vmatpush1.msra.mxu0 0.0
        %1632 = vmatprep.subr.mxu0 0.0
        %1633 = vmatpush1.msra.mxu0 0.0
        %1634 = vmatprep.subr.mxu0 0.0
        %1635 = vmatpush1.msra.mxu0 0.0
        %1636 = vmatprep.subr.mxu0 0.0
        %1637 = vmatpush1.msra.mxu0 0.0
        %1638 = vmatprep.subr.mxu0 0.0
        %1639 = vmatpush1.msra.mxu0 0.0
        %1640 = vmatprep.subr.mxu0 0.0
        %1641 = vmatpush1.msra.mxu0 0.0
        %1642 = vmatprep.subr.mxu0 0.0
        %1643 = vmatpush1.msra.mxu0 0.0
        %1644 = vmatprep.subr.mxu0 0.0
        %1645 = vmatpush1.msra.mxu0 0.0
        %1646 = vmatprep.subr.mxu0 0.0
        %1647 = vmatpush1.msra.mxu0 0.0
        %1648 = vmatprep.subr.mxu0 0.0
        %1649 = vmatpush1.msra.mxu0 0.0
        %1650 = vmatprep.subr.mxu0 0.0
        %1651 = vmatpush1.msra.mxu0 0.0
        %1652 = vmatprep.subr.mxu0 0.0
        %1653 = vmatpush1.msra.mxu0 0.0
        %1654 = vmatprep.subr.mxu0 0.0
        %1655 = vmatpush1.msra.mxu0 0.0
        %1656 = vmatprep.subr.mxu0 0.0
        %1657 = vmatpush1.msra.mxu0 0.0
        %1658 = vmatprep.subr.mxu0 0.0
        %1659 = vmatpush1.msra.mxu0 0.0
        %1660 = vmatprep.subr.mxu0 0.0
        %1661 = vmatpush1.msra.mxu0 0.0
        %1662 = vmatprep.mubr.f32.mxu0 0.0
        %1663 = vmatmul.mubr.f32.gmra.mrb[0].mxu0 %v960
        %v1664 = vpop.f32.mrb[0].mxu0
        %v1665 = vadd.f32 0.0, %v1664
        %v1666 = vpop.f32.mrb[0].mxu0
        %1667 = vdwg.mxu0
        %v1668 = vlaneseq
        %v1669 = vand.u32 %v1668, 127
        %vm1670 = vcmp.ge.s32.totalorder %v1669, 8
        %vm1671 = vcmp.lt.s32.totalorder %v1669, 12
        %vm1672 = vmand %vm1670, %vm1671
        %v1673 = vsel %vm1672, 1, 0
        %vm1674 = vcmp.eq.s32.totalorder %v1673, 1
        %1676 = vset.pattern.permute.xlu0 1
        %1677 = vperm.xlu0 %1676, %v1493
        %v1678 = vpop.permute.xlu0 %1677
        %v1680 = vsel %vm1674, %v1678, 1.0
        %v1681 = vmul.f32 %v1579, %v1680
        %1682 = vset.pattern.permute.xlu0 0
        %1683 = vperm.xlu0 %1682, %v1493
        %v1684 = vpop.permute.xlu0 %1683
        %v1686 = vsel %vm1674, %v1684, 1.0
        %v1687 = vmul.f32 %v1665, %v1686
        %v1688 = vadd.f32 %v1681, %v1687
        %v1689 = vld [vmem:[%s16] sm:$0x1]
        %v1691 = vlaneseq
        %v1692 = vshrl.u32 %v1691, 7
        %v1693 = vsub.s32 0, %v1692
        %v1694 = vrot.slane %v1689, %v1693
        %v1696 = vadd.f32 %v1688, %v1694
        %1697 = vst [vmem:[%s641] sm:$0xff] %v1696
        %s1698 = sand.u32 %s405, 1
        %s1699 = scalar_lea.sflag [#allocation4], %s1698
        %s1700 = sand.u32 %s405, 1
        %s1701 = smul.addr %s1700, 8
        %s1702 = scalar_lea.vmem [#allocation14], %s1701
        // Predicated region
        $region117: #{tpu_custom_call.1} parent=87 // pred_check
          %p1703 = pneg %p415
        $region118: #{tpu_custom_call.1} parent=87 // pred_check_branch
          %1705 = sbr.rel (%p1703) target = $region120
        $region119: #{tpu_custom_call.1} parent=87 // pred_region
          %s1707 = ssub.s32 128, 128
          %1708 = vsyncadd %s1699, %s1707
          %s1709 = smul.addr %s35, 128
          %s1710 = scalar_lea.hbm %s17, %s1709
          %s1712 = sshll.u32 %s1702, 4
          %s1713 = int_to_ptr.vmem [resolvable:$true] %s1712
          %1715 = dma.vmem_to_hbm [thread:$0]  %s1713, 128, %s1710, %s1699
        $region120: #{tpu_custom_call.1} parent=87 // pred_fallthru
          _
      $region88: #{tpu_custom_call.1} parent=5 // pred_fallthru
        _
      %p1716 = scmp.le.s32.totalorder 2, %s30
      // Predicated region
      $region121: #{tpu_custom_call.1} parent=5 // pred_check
        %p1717 = pneg %p1716
      $region122: #{tpu_custom_call.1} parent=5 // pred_check_branch
        %1719 = sbr.rel (%p1717) target = $region124
      $region123: #{tpu_custom_call.1} parent=5 // pred_region
        %s1720 = ssub.s32 %s30, 2
        // Predicated region
        $region125: #{tpu_custom_call.1} parent=123 // pred_check
          %p1721 = pneg %p421
        $region126: #{tpu_custom_call.1} parent=123 // pred_check_branch
          %1723 = sbr.rel (%p1721) target = $region128
        $region127: #{tpu_custom_call.1} parent=123 // pred_region
          %s1724 = sand.u32 %s406, 1
          %s1725 = scalar_lea.sflag [#allocation4], %s1724
          %s1726 = sand.u32 %s406, 1
          %s1727 = smul.addr %s1726, 8
          %s1728 = scalar_lea.vmem [#allocation14], %s1727
          %1729 = dma.done %s1725, 128
        $region128: #{tpu_custom_call.1} parent=123 // pred_fallthru
          _
      $region124: #{tpu_custom_call.1} parent=5 // pred_fallthru
        _
    $region6: #{tpu_custom_call.1} parent=1 // loop_footer
      %s34 = sadd.s32 1, %s30
    $region7: #{tpu_custom_call.1} parent=1 // loop_footer_branch
      %29 = sbr.rel target = $region3
    $region8: #{tpu_custom_call.1} parent=1 // loop_exit
      _
    %1730 = vsyncpa [#allocation3], 1
    %s1731 = scalar_lea.sflag [#allocation3], 1
    %1732 = vsyncpa %s1731, 1
    %1733 = vsyncpa [#allocation6], 1
    %1734 = vsyncpa [#allocation9], 1
    %1735 = vsyncpa [#allocation12], 1
    %1736 = vsyncpa [#allocation4], 1
    %s1737 = scalar_lea.sflag [#allocation4], 1
    %1738 = vsyncpa %s1737, 1

// kernel: tpu_custom_call.1
$region0: #{tpu_custom_call.1}
  #allocation0 [shape = 'u32[]', space=smem, size = 0x4, offset = 0x4, fixed_abs, tag = 'smem constant byte address 0x4 - core index']
  #allocation1 [shape = 'u32[144,128]{1,0:T(1,128)}', space=vmem, size = 0x12000, scoped, tag = 'internal scratch']
  %s0 = inlined_call_operand.vmem [shape: f32[24,64], index: 0, kind: input, shape index: {}]
  %s1 = inlined_call_operand.hbm [shape: f32[64,512], index: 1, kind: input, shape index: {}]
  %s2 = inlined_call_operand.vmem [shape: f32[1,512], index: 2, kind: input, shape index: {}]
  %s3 = inlined_call_operand.hbm [shape: f32[256,128], index: 3, kind: input, shape index: {}]
  %s4 = inlined_call_operand.vmem [shape: f32[1,128], index: 4, kind: input, shape index: {}]
  %s5 = inlined_call_operand.hbm [shape: f32[256,128], index: 5, kind: input, shape index: {}]
  %s6 = inlined_call_operand.vmem [shape: f32[1,128], index: 6, kind: input, shape index: {}]
  %s7 = inlined_call_operand.hbm [shape: f32[128,256], index: 7, kind: input, shape index: {}]
  %s8 = inlined_call_operand.hbm [shape: f32[128,256], index: 8, kind: input, shape index: {}]
  %s9 = inlined_call_operand.vmem [shape: f32[1,256], index: 9, kind: input, shape index: {}]
  %s10 = inlined_call_operand.hbm [shape: f32[256,128], index: 10, kind: input, shape index: {}]
  %s11 = inlined_call_operand.vmem [shape: f32[1,128], index: 11, kind: input, shape index: {}]
  %s12 = inlined_call_operand.vmem [shape: f32[128,2], index: 12, kind: input, shape index: {}]
  %s13 = inlined_call_operand.vmem [shape: f32[1,2], index: 13, kind: input, shape index: {}]
  %s14 = inlined_call_operand.vmem [shape: f32[128,128], index: 14, kind: input, shape index: {}]
  %s15 = inlined_call_operand.hbm [shape: f32[128,128], index: 15, kind: input, shape index: {}]
  %s16 = inlined_call_operand.vmem [shape: f32[1,128], index: 16, kind: input, shape index: {}]
  %s17 = inlined_call_operand.hbm [shape: f32[24,128], index: 17, kind: output, shape index: {}]
  %s18 = sld [smem:[#allocation0]]
  $region129: #{tpu_custom_call.1} parent=0
    _
  %s20 = ssub.s32 1, %s18
  %s21 = scalar_select 0, %s20, %s18
  $region1: #{tpu_custom_call.1} parent=0
    #allocation2 [shape = 'u8[131072]{0}', space=vmem, size = 0x20000, scoped, tag = 'input window, operand 1, single buffered']
    #allocation3 [shape = 's32[2]{0}', space=sflag, size = 0x8, scoped, tag = 'scoped memory for tpu_custom_call.1']
    #allocation4 [shape = 's32[2]{0}', space=sflag, size = 0x8, scoped, tag = 'scoped memory for tpu_custom_call.1']
    #allocation5 [shape = 'u8[131072]{0}', space=vmem, size = 0x20000, scoped, tag = 'input window, operand 3, single buffered']
    #allocation6 [shape = 's32[1]{0}', space=sflag, size = 0x4, scoped, tag = 'scoped memory for tpu_custom_call.1']
    #allocation7 [shape = 'u8[131072]{0}', space=vmem, size = 0x20000, scoped, tag = 'input window, operand 5, single buffered']
    #allocation8 [shape = 'u8[131072]{0}', space=vmem, size = 0x20000, scoped, tag = 'input window, operand 7, single buffered']
    #allocation9 [shape = 's32[1]{0}', space=sflag, size = 0x4, scoped, tag = 'scoped memory for tpu_custom_call.1']
    #allocation10 [shape = 'u8[131072]{0}', space=vmem, size = 0x20000, scoped, tag = 'input window, operand 8, single buffered']
    #allocation11 [shape = 'u8[131072]{0}', space=vmem, size = 0x20000, scoped, tag = 'input window, operand 10, single buffered']
    #allocation12 [shape = 's32[1]{0}', space=sflag, size = 0x4, scoped, tag = 'scoped memory for tpu_custom_call.1']
    #allocation13 [shape = 'u8[65536]{0}', space=vmem, size = 0x10000, scoped, tag = 'input window, operand 15, single buffered']
    #allocation14 [shape = 'u8[8192]{0}', space=vmem, size = 0x2000, scoped, tag = 'output window, operand 0']
    %22 = vsyncpa [#allocation3], 0
    %23 = vsyncpa [#allocation6], 0
    %24 = vsyncpa [#allocation9], 0
    %25 = vsyncpa [#allocation12], 0
    %26 = vsyncpa [#allocation4], 0
    %s27 = scalar_lea.sflag [#allocation4], 1
    %28 = vsyncpa %s27, 0
    loop: start=0, step=1, limit=5
    $region2: #{tpu_custom_call.1} parent=1 // loop_pre_header
      _
    $region3: #{tpu_custom_call.1} parent=1 // loop_header
      %s30 = sphi 0, %s34
      %p31 = scmp.ge.s32.totalorder %s30, 5
      %s40 = sphi 0, %s42
      %s43 = sphi 0, %s40
      %s44 = sphi 0, %s43
      %s60 = sphi 0, %s44
      %s64 = sphi 0, %s64
      %s66 = sphi 0, %s64
      %s67 = sphi 0, %s66
      %s81 = sphi 0, %s67
      %s85 = sphi 0, %s85
      %s87 = sphi 0, %s85
      %s88 = sphi 0, %s87
      %s102 = sphi 0, %s88
      %s106 = sphi 0, %s106
      %s108 = sphi 0, %s106
      %s109 = sphi 0, %s108
      %s123 = sphi 0, %s109
      %s127 = sphi 0, %s127
      %s129 = sphi 0, %s127
      %s130 = sphi 0, %s129
      %s144 = sphi 0, %s130
      %s148 = sphi 0, %s148
      %s150 = sphi 0, %s148
      %s151 = sphi 0, %s150
      %s165 = sphi 0, %s151
      %s169 = sphi 0, %s169
      %s171 = sphi 0, %s169
      %s172 = sphi 0, %s171
      %s186 = sphi 0, %s172
      %s190 = sphi 0, %s190
      %s192 = sphi 0, %s190
      %s193 = sphi 0, %s192
      %s207 = sphi 0, %s193
      %s211 = sphi 0, %s211
      %s213 = sphi 0, %s211
      %s214 = sphi 0, %s213
      %s228 = sphi 0, %s214
      %s232 = sphi 0, %s232
      %s234 = sphi 0, %s232
      %s235 = sphi 0, %s234
      %s249 = sphi 0, %s235
      %s253 = sphi 0, %s253
      %s255 = sphi 0, %s253
      %s256 = sphi 0, %s255
      %s270 = sphi 0, %s256
      %s274 = sphi 0, %s274
      %s276 = sphi 0, %s274
      %s277 = sphi 0, %s276
      %s291 = sphi 0, %s277
      %s295 = sphi 0, %s295
      %s297 = sphi 0, %s295
      %s298 = sphi 0, %s297
      %s312 = sphi 0, %s298
      %s316 = sphi 0, %s316
      %s318 = sphi 0, %s316
      %s319 = sphi 0, %s318
      %s333 = sphi 0, %s319
      %s337 = sphi 0, %s337
      %s339 = sphi 0, %s337
      %s340 = sphi 0, %s339
      %s354 = sphi 0, %s340
      %s358 = sphi 0, %s358
      %s360 = sphi 0, %s358
      %s361 = sphi 0, %s360
      %s375 = sphi 0, %s361
      %s379 = sphi 0, %s379
      %s381 = sphi 0, %s379
      %s382 = sphi 0, %s381
      %s396 = sphi 0, %s382
      %s402 = sphi 0, %s404
      %s405 = sphi 0, %s402
      %s406 = sphi 0, %s405
      %s422 = sphi 0, %s406
    $region4: #{tpu_custom_call.1} parent=1 // loop_header_branch
      %33 = sbr.rel (%p31) target = $region8
    $region5: #{tpu_custom_call.1} parent=1 // loop_body
      %s35 = ssub.s32 %s30, 1
      %s36 = ssub.s32 %s30, 2
      %s37 = sadd.s32 %s30, 1
      %s38 = ssub.s32 %s30, %s37
      %p39 = scmp.eq.s32.totalorder %s38, 0
      %s41 = sadd.s32 %s40, 1
      %s42 = scalar_select %p39, %s40, %s41
      %p45 = pneg %p39
      %p46 = scmp.eq.s32.totalorder %s30, 2
      %p47 = por %p45, %p46
      %p48 = scmp.ne.s32.totalorder %s40, %s43
      %p49 = scmp.eq.s32.totalorder %s30, 0
      %p50 = por %p48, %p49
      %p51 = scmp.ne.s32.totalorder %s40, %s43
      %p52 = scmp.eq.s32.totalorder %s35, 2
      %p53 = por %p51, %p52
      %p54 = scmp.ne.s32.totalorder %s43, %s44
      %p55 = scmp.eq.s32.totalorder %s35, 0
      %p56 = por %p54, %p55
      %p57 = scmp.ne.s32.totalorder %s43, %s44
      %p58 = scmp.eq.s32.totalorder %s36, 2
      %p59 = por %p57, %p58
      %p61 = scmp.ne.s32.totalorder %s44, %s60
      %p62 = scmp.eq.s32.totalorder %s36, 0
      %p63 = por %p61, %p62
      %s65 = sadd.s32 %s64, 1
      %p68 = scmp.eq.s32.totalorder %s30, 2
      %p69 = scmp.ne.s32.totalorder %s64, %s66
      %p70 = scmp.eq.s32.totalorder %s30, 0
      %p71 = por %p69, %p70
      %p72 = scmp.ne.s32.totalorder %s64, %s66
      %p73 = scmp.eq.s32.totalorder %s35, 2
      %p74 = por %p72, %p73
      %p75 = scmp.ne.s32.totalorder %s66, %s67
      %p76 = scmp.eq.s32.totalorder %s35, 0
      %p77 = por %p75, %p76
      %p78 = scmp.ne.s32.totalorder %s66, %s67
      %p79 = scmp.eq.s32.totalorder %s36, 2
      %p80 = por %p78, %p79
      %p82 = scmp.ne.s32.totalorder %s67, %s81
      %p83 = scmp.eq.s32.totalorder %s36, 0
      %p84 = por %p82, %p83
      %s86 = sadd.s32 %s85, 1
      %p89 = scmp.eq.s32.totalorder %s30, 2
      %p90 = scmp.ne.s32.totalorder %s85, %s87
      %p91 = scmp.eq.s32.totalorder %s30, 0
      %p92 = por %p90, %p91
      %p93 = scmp.ne.s32.totalorder %s85, %s87
      %p94 = scmp.eq.s32.totalorder %s35, 2
      %p95 = por %p93, %p94
      %p96 = scmp.ne.s32.totalorder %s87, %s88
      %p97 = scmp.eq.s32.totalorder %s35, 0
      %p98 = por %p96, %p97
      %p99 = scmp.ne.s32.totalorder %s87, %s88
      %p100 = scmp.eq.s32.totalorder %s36, 2
      %p101 = por %p99, %p100
      %p103 = scmp.ne.s32.totalorder %s88, %s102
      %p104 = scmp.eq.s32.totalorder %s36, 0
      %p105 = por %p103, %p104
      %s107 = sadd.s32 %s106, 1
      %p110 = scmp.eq.s32.totalorder %s30, 2
      %p111 = scmp.ne.s32.totalorder %s106, %s108
      %p112 = scmp.eq.s32.totalorder %s30, 0
      %p113 = por %p111, %p112
      %p114 = scmp.ne.s32.totalorder %s106, %s108
      %p115 = scmp.eq.s32.totalorder %s35, 2
      %p116 = por %p114, %p115
      %p117 = scmp.ne.s32.totalorder %s108, %s109
      %p118 = scmp.eq.s32.totalorder %s35, 0
      %p119 = por %p117, %p118
      %p120 = scmp.ne.s32.totalorder %s108, %s109
      %p121 = scmp.eq.s32.totalorder %s36, 2
      %p122 = por %p120, %p121
      %p124 = scmp.ne.s32.totalorder %s109, %s123
      %p125 = scmp.eq.s32.totalorder %s36, 0
      %p126 = por %p124, %p125
      %s128 = sadd.s32 %s127, 1
      %p131 = scmp.eq.s32.totalorder %s30, 2
      %p132 = scmp.ne.s32.totalorder %s127, %s129
      %p133 = scmp.eq.s32.totalorder %s30, 0
      %p134 = por %p132, %p133
      %p135 = scmp.ne.s32.totalorder %s127, %s129
      %p136 = scmp.eq.s32.totalorder %s35, 2
      %p137 = por %p135, %p136
      %p138 = scmp.ne.s32.totalorder %s129, %s130
      %p139 = scmp.eq.s32.totalorder %s35, 0
      %p140 = por %p138, %p139
      %p141 = scmp.ne.s32.totalorder %s129, %s130
      %p142 = scmp.eq.s32.totalorder %s36, 2
      %p143 = por %p141, %p142
      %p145 = scmp.ne.s32.totalorder %s130, %s144
      %p146 = scmp.eq.s32.totalorder %s36, 0
      %p147 = por %p145, %p146
      %s149 = sadd.s32 %s148, 1
      %p152 = scmp.eq.s32.totalorder %s30, 2
      %p153 = scmp.ne.s32.totalorder %s148, %s150
      %p154 = scmp.eq.s32.totalorder %s30, 0
      %p155 = por %p153, %p154
      %p156 = scmp.ne.s32.totalorder %s148, %s150
      %p157 = scmp.eq.s32.totalorder %s35, 2
      %p158 = por %p156, %p157
      %p159 = scmp.ne.s32.totalorder %s150, %s151
      %p160 = scmp.eq.s32.totalorder %s35, 0
      %p161 = por %p159, %p160
      %p162 = scmp.ne.s32.totalorder %s150, %s151
      %p163 = scmp.eq.s32.totalorder %s36, 2
      %p164 = por %p162, %p163
      %p166 = scmp.ne.s32.totalorder %s151, %s165
      %p167 = scmp.eq.s32.totalorder %s36, 0
      %p168 = por %p166, %p167
      %s170 = sadd.s32 %s169, 1
      %p173 = scmp.eq.s32.totalorder %s30, 2
      %p174 = scmp.ne.s32.totalorder %s169, %s171
      %p175 = scmp.eq.s32.totalorder %s30, 0
      %p176 = por %p174, %p175
      %p177 = scmp.ne.s32.totalorder %s169, %s171
      %p178 = scmp.eq.s32.totalorder %s35, 2
      %p179 = por %p177, %p178
      %p180 = scmp.ne.s32.totalorder %s171, %s172
      %p181 = scmp.eq.s32.totalorder %s35, 0
      %p182 = por %p180, %p181
      %p183 = scmp.ne.s32.totalorder %s171, %s172
      %p184 = scmp.eq.s32.totalorder %s36, 2
      %p185 = por %p183, %p184
      %p187 = scmp.ne.s32.totalorder %s172, %s186
      %p188 = scmp.eq.s32.totalorder %s36, 0
      %p189 = por %p187, %p188
      %s191 = sadd.s32 %s190, 1
      %p194 = scmp.eq.s32.totalorder %s30, 2
      %p195 = scmp.ne.s32.totalorder %s190, %s192
      %p196 = scmp.eq.s32.totalorder %s30, 0
      %p197 = por %p195, %p196
      %p198 = scmp.ne.s32.totalorder %s190, %s192
      %p199 = scmp.eq.s32.totalorder %s35, 2
      %p200 = por %p198, %p199
      %p201 = scmp.ne.s32.totalorder %s192, %s193
      %p202 = scmp.eq.s32.totalorder %s35, 0
      %p203 = por %p201, %p202
      %p204 = scmp.ne.s32.totalorder %s192, %s193
      %p205 = scmp.eq.s32.totalorder %s36, 2
      %p206 = por %p204, %p205
      %p208 = scmp.ne.s32.totalorder %s193, %s207
      %p209 = scmp.eq.s32.totalorder %s36, 0
      %p210 = por %p208, %p209
      %s212 = sadd.s32 %s211, 1
      %p215 = scmp.eq.s32.totalorder %s30, 2
      %p216 = scmp.ne.s32.totalorder %s211, %s213
      %p217 = scmp.eq.s32.totalorder %s30, 0
      %p218 = por %p216, %p217
      %p219 = scmp.ne.s32.totalorder %s211, %s213
      %p220 = scmp.eq.s32.totalorder %s35, 2
      %p221 = por %p219, %p220
      %p222 = scmp.ne.s32.totalorder %s213, %s214
      %p223 = scmp.eq.s32.totalorder %s35, 0
      %p224 = por %p222, %p223
      %p225 = scmp.ne.s32.totalorder %s213, %s214
      %p226 = scmp.eq.s32.totalorder %s36, 2
      %p227 = por %p225, %p226
      %p229 = scmp.ne.s32.totalorder %s214, %s228
      %p230 = scmp.eq.s32.totalorder %s36, 0
      %p231 = por %p229, %p230
      %s233 = sadd.s32 %s232, 1
      %p236 = scmp.eq.s32.totalorder %s30, 2
      %p237 = scmp.ne.s32.totalorder %s232, %s234
      %p238 = scmp.eq.s32.totalorder %s30, 0
      %p239 = por %p237, %p238
      %p240 = scmp.ne.s32.totalorder %s232, %s234
      %p241 = scmp.eq.s32.totalorder %s35, 2
      %p242 = por %p240, %p241
      %p243 = scmp.ne.s32.totalorder %s234, %s235
      %p244 = scmp.eq.s32.totalorder %s35, 0
      %p245 = por %p243, %p244
      %p246 = scmp.ne.s32.totalorder %s234, %s235
      %p247 = scmp.eq.s32.totalorder %s36, 2
      %p248 = por %p246, %p247
      %p250 = scmp.ne.s32.totalorder %s235, %s249
      %p251 = scmp.eq.s32.totalorder %s36, 0
      %p252 = por %p250, %p251
      %s254 = sadd.s32 %s253, 1
      %p257 = scmp.eq.s32.totalorder %s30, 2
      %p258 = scmp.ne.s32.totalorder %s253, %s255
      %p259 = scmp.eq.s32.totalorder %s30, 0
      %p260 = por %p258, %p259
      %p261 = scmp.ne.s32.totalorder %s253, %s255
      %p262 = scmp.eq.s32.totalorder %s35, 2
      %p263 = por %p261, %p262
      %p264 = scmp.ne.s32.totalorder %s255, %s256
      %p265 = scmp.eq.s32.totalorder %s35, 0
      %p266 = por %p264, %p265
      %p267 = scmp.ne.s32.totalorder %s255, %s256
      %p268 = scmp.eq.s32.totalorder %s36, 2
      %p269 = por %p267, %p268
      %p271 = scmp.ne.s32.totalorder %s256, %s270
      %p272 = scmp.eq.s32.totalorder %s36, 0
      %p273 = por %p271, %p272
      %s275 = sadd.s32 %s274, 1
      %p278 = scmp.eq.s32.totalorder %s30, 2
      %p279 = scmp.ne.s32.totalorder %s274, %s276
      %p280 = scmp.eq.s32.totalorder %s30, 0
      %p281 = por %p279, %p280
      %p282 = scmp.ne.s32.totalorder %s274, %s276
      %p283 = scmp.eq.s32.totalorder %s35, 2
      %p284 = por %p282, %p283
      %p285 = scmp.ne.s32.totalorder %s276, %s277
      %p286 = scmp.eq.s32.totalorder %s35, 0
      %p287 = por %p285, %p286
      %p288 = scmp.ne.s32.totalorder %s276, %s277
      %p289 = scmp.eq.s32.totalorder %s36, 2
      %p290 = por %p288, %p289
      %p292 = scmp.ne.s32.totalorder %s277, %s291
      %p293 = scmp.eq.s32.totalorder %s36, 0
      %p294 = por %p292, %p293
      %s296 = sadd.s32 %s295, 1
      %p299 = scmp.eq.s32.totalorder %s30, 2
      %p300 = scmp.ne.s32.totalorder %s295, %s297
      %p301 = scmp.eq.s32.totalorder %s30, 0
      %p302 = por %p300, %p301
      %p303 = scmp.ne.s32.totalorder %s295, %s297
      %p304 = scmp.eq.s32.totalorder %s35, 2
      %p305 = por %p303, %p304
      %p306 = scmp.ne.s32.totalorder %s297, %s298
      %p307 = scmp.eq.s32.totalorder %s35, 0
      %p308 = por %p306, %p307
      %p309 = scmp.ne.s32.totalorder %s297, %s298
      %p310 = scmp.eq.s32.totalorder %s36, 2
      %p311 = por %p309, %p310
      %p313 = scmp.ne.s32.totalorder %s298, %s312
      %p314 = scmp.eq.s32.totalorder %s36, 0
      %p315 = por %p313, %p314
      %s317 = sadd.s32 %s316, 1
      %p320 = scmp.eq.s32.totalorder %s30, 2
      %p321 = scmp.ne.s32.totalorder %s316, %s318
      %p322 = scmp.eq.s32.totalorder %s30, 0
      %p323 = por %p321, %p322
      %p324 = scmp.ne.s32.totalorder %s316, %s318
      %p325 = scmp.eq.s32.totalorder %s35, 2
      %p326 = por %p324, %p325
      %p327 = scmp.ne.s32.totalorder %s318, %s319
      %p328 = scmp.eq.s32.totalorder %s35, 0
      %p329 = por %p327, %p328
      %p330 = scmp.ne.s32.totalorder %s318, %s319
      %p331 = scmp.eq.s32.totalorder %s36, 2
      %p332 = por %p330, %p331
      %p334 = scmp.ne.s32.totalorder %s319, %s333
      %p335 = scmp.eq.s32.totalorder %s36, 0
      %p336 = por %p334, %p335
      %s338 = sadd.s32 %s337, 1
      %p341 = scmp.eq.s32.totalorder %s30, 2
      %p342 = scmp.ne.s32.totalorder %s337, %s339
      %p343 = scmp.eq.s32.totalorder %s30, 0
      %p344 = por %p342, %p343
      %p345 = scmp.ne.s32.totalorder %s337, %s339
      %p346 = scmp.eq.s32.totalorder %s35, 2
      %p347 = por %p345, %p346
      %p348 = scmp.ne.s32.totalorder %s339, %s340
      %p349 = scmp.eq.s32.totalorder %s35, 0
      %p350 = por %p348, %p349
      %p351 = scmp.ne.s32.totalorder %s339, %s340
      %p352 = scmp.eq.s32.totalorder %s36, 2
      %p353 = por %p351, %p352
      %p355 = scmp.ne.s32.totalorder %s340, %s354
      %p356 = scmp.eq.s32.totalorder %s36, 0
      %p357 = por %p355, %p356
      %s359 = sadd.s32 %s358, 1
      %p362 = scmp.eq.s32.totalorder %s30, 2
      %p363 = scmp.ne.s32.totalorder %s358, %s360
      %p364 = scmp.eq.s32.totalorder %s30, 0
      %p365 = por %p363, %p364
      %p366 = scmp.ne.s32.totalorder %s358, %s360
      %p367 = scmp.eq.s32.totalorder %s35, 2
      %p368 = por %p366, %p367
      %p369 = scmp.ne.s32.totalorder %s360, %s361
      %p370 = scmp.eq.s32.totalorder %s35, 0
      %p371 = por %p369, %p370
      %p372 = scmp.ne.s32.totalorder %s360, %s361
      %p373 = scmp.eq.s32.totalorder %s36, 2
      %p374 = por %p372, %p373
      %p376 = scmp.ne.s32.totalorder %s361, %s375
      %p377 = scmp.eq.s32.totalorder %s36, 0
      %p378 = por %p376, %p377
      %s380 = sadd.s32 %s379, 1
      %p383 = scmp.eq.s32.totalorder %s30, 2
      %p384 = scmp.ne.s32.totalorder %s379, %s381
      %p385 = scmp.eq.s32.totalorder %s30, 0
      %p386 = por %p384, %p385
      %p387 = scmp.ne.s32.totalorder %s379, %s381
      %p388 = scmp.eq.s32.totalorder %s35, 2
      %p389 = por %p387, %p388
      %p390 = scmp.ne.s32.totalorder %s381, %s382
      %p391 = scmp.eq.s32.totalorder %s35, 0
      %p392 = por %p390, %p391
      %p393 = scmp.ne.s32.totalorder %s381, %s382
      %p394 = scmp.eq.s32.totalorder %s36, 2
      %p395 = por %p393, %p394
      %p397 = scmp.ne.s32.totalorder %s382, %s396
      %p398 = scmp.eq.s32.totalorder %s36, 0
      %p399 = por %p397, %p398
      %s400 = ssub.s32 %s30, %s37
      %p401 = scmp.eq.s32.totalorder %s400, 0
      %s403 = sadd.s32 %s402, 1
      %s404 = scalar_select %p401, %s402, %s403
      %p407 = pneg %p401
      %p408 = scmp.eq.s32.totalorder %s30, 2
      %p409 = por %p407, %p408
      %p410 = scmp.ne.s32.totalorder %s402, %s405
      %p411 = scmp.eq.s32.totalorder %s30, 0
      %p412 = por %p410, %p411
      %p413 = scmp.ne.s32.totalorder %s402, %s405
      %p414 = scmp.eq.s32.totalorder %s35, 2
      %p415 = por %p413, %p414
      %p416 = scmp.ne.s32.totalorder %s405, %s406
      %p417 = scmp.eq.s32.totalorder %s35, 0
      %p418 = por %p416, %p417
      %p419 = scmp.ne.s32.totalorder %s405, %s406
      %p420 = scmp.eq.s32.totalorder %s36, 2
      %p421 = por %p419, %p420
      %p423 = scmp.ne.s32.totalorder %s406, %s422
      %p424 = scmp.eq.s32.totalorder %s36, 0
      %p425 = por %p423, %p424
      %p426 = scmp.le.s32.totalorder 1, %s30
      %p427 = scmp.lt.s32.totalorder %s30, 4
      %p428 = pnand %p426, %p427
      %p429 = pneg %p428
      // Predicated region
      $region9: #{tpu_custom_call.1} parent=5 // pred_check
        _
      $region10: #{tpu_custom_call.1} parent=5 // pred_check_branch
        %431 = sbr.rel (%p428) target = $region12
      $region11: #{tpu_custom_call.1} parent=5 // pred_region
        %s432 = ssub.s32 %s30, 1
        // Predicated region
        $region13: #{tpu_custom_call.1} parent=11 // pred_check
          %p433 = pneg %p77
        $region14: #{tpu_custom_call.1} parent=11 // pred_check_branch
          %435 = sbr.rel (%p433) target = $region16
        $region15: #{tpu_custom_call.1} parent=11 // pred_region
          %s437 = ssub.s32 4096, 4096
          %438 = vsyncadd [#allocation3], %s437
          %s439 = sshll.u32 [#allocation2], 4
          %s440 = int_to_ptr.vmem [resolvable:$true] %s439
          %445 = dma.hbm_to_vmem [thread:$0]  %s1, 4096, %s440, [#allocation3], 512, 512, 32
        $region16: #{tpu_custom_call.1} parent=11 // pred_fallthru
          _
        // Predicated region
        $region17: #{tpu_custom_call.1} parent=11 // pred_check
          %p446 = pneg %p98
        $region18: #{tpu_custom_call.1} parent=11 // pred_check_branch
          %448 = sbr.rel (%p446) target = $region20
        $region19: #{tpu_custom_call.1} parent=11 // pred_region
          _
        $region20: #{tpu_custom_call.1} parent=11 // pred_fallthru
          _
        // Predicated region
        $region21: #{tpu_custom_call.1} parent=11 // pred_check
          %p449 = pneg %p119
        $region22: #{tpu_custom_call.1} parent=11 // pred_check_branch
          %451 = sbr.rel (%p449) target = $region24
        $region23: #{tpu_custom_call.1} parent=11 // pred_region
          %s453 = ssub.s32 4096, 4096
          %454 = vsyncadd [#allocation6], %s453
          %s455 = sshll.u32 [#allocation5], 4
          %s456 = int_to_ptr.vmem [resolvable:$true] %s455
          %461 = dma.hbm_to_vmem [thread:$0]  %s3, 4096, %s456, [#allocation6], 128, 128, 8
        $region24: #{tpu_custom_call.1} parent=11 // pred_fallthru
          _
        // Predicated region
        $region25: #{tpu_custom_call.1} parent=11 // pred_check
          %p462 = pneg %p140
        $region26: #{tpu_custom_call.1} parent=11 // pred_check_branch
          %464 = sbr.rel (%p462) target = $region28
        $region27: #{tpu_custom_call.1} parent=11 // pred_region
          _
        $region28: #{tpu_custom_call.1} parent=11 // pred_fallthru
          _
        // Predicated region
        $region29: #{tpu_custom_call.1} parent=11 // pred_check
          %p465 = pneg %p161
        $region30: #{tpu_custom_call.1} parent=11 // pred_check_branch
          %467 = sbr.rel (%p465) target = $region32
        $region31: #{tpu_custom_call.1} parent=11 // pred_region
          %s469 = ssub.s32 4096, 4096
          %470 = vsyncadd [#allocation6], %s469
          %s471 = sshll.u32 [#allocation7], 4
          %s472 = int_to_ptr.vmem [resolvable:$true] %s471
          %477 = dma.hbm_to_vmem [thread:$0]  %s5, 4096, %s472, [#allocation6], 128, 128, 8
        $region32: #{tpu_custom_call.1} parent=11 // pred_fallthru
          _
        // Predicated region
        $region33: #{tpu_custom_call.1} parent=11 // pred_check
          %p478 = pneg %p182
        $region34: #{tpu_custom_call.1} parent=11 // pred_check_branch
          %480 = sbr.rel (%p478) target = $region36
        $region35: #{tpu_custom_call.1} parent=11 // pred_region
          _
        $region36: #{tpu_custom_call.1} parent=11 // pred_fallthru
          _
        // Predicated region
        $region37: #{tpu_custom_call.1} parent=11 // pred_check
          %p481 = pneg %p203
        $region38: #{tpu_custom_call.1} parent=11 // pred_check_branch
          %483 = sbr.rel (%p481) target = $region40
        $region39: #{tpu_custom_call.1} parent=11 // pred_region
          %s485 = ssub.s32 4096, 4096
          %486 = vsyncadd [#allocation9], %s485
          %s487 = sshll.u32 [#allocation8], 4
          %s488 = int_to_ptr.vmem [resolvable:$true] %s487
          %493 = dma.hbm_to_vmem [thread:$0]  %s7, 4096, %s488, [#allocation9], 256, 256, 16
        $region40: #{tpu_custom_call.1} parent=11 // pred_fallthru
          _
        // Predicated region
        $region41: #{tpu_custom_call.1} parent=11 // pred_check
          %p494 = pneg %p224
        $region42: #{tpu_custom_call.1} parent=11 // pred_check_branch
          %496 = sbr.rel (%p494) target = $region44
        $region43: #{tpu_custom_call.1} parent=11 // pred_region
          %s498 = ssub.s32 4096, 4096
          %499 = vsyncadd [#allocation9], %s498
          %s500 = sshll.u32 [#allocation10], 4
          %s501 = int_to_ptr.vmem [resolvable:$true] %s500
          %506 = dma.hbm_to_vmem [thread:$0]  %s8, 4096, %s501, [#allocation9], 256, 256, 16
        $region44: #{tpu_custom_call.1} parent=11 // pred_fallthru
          _
        // Predicated region
        $region45: #{tpu_custom_call.1} parent=11 // pred_check
          %p507 = pneg %p245
        $region46: #{tpu_custom_call.1} parent=11 // pred_check_branch
          %509 = sbr.rel (%p507) target = $region48
        $region47: #{tpu_custom_call.1} parent=11 // pred_region
          _
        $region48: #{tpu_custom_call.1} parent=11 // pred_fallthru
          _
        // Predicated region
        $region49: #{tpu_custom_call.1} parent=11 // pred_check
          %p510 = pneg %p266
        $region50: #{tpu_custom_call.1} parent=11 // pred_check_branch
          %512 = sbr.rel (%p510) target = $region52
        $region51: #{tpu_custom_call.1} parent=11 // pred_region
          %s514 = ssub.s32 4096, 4096
          %515 = vsyncadd [#allocation12], %s514
          %s516 = sshll.u32 [#allocation11], 4
          %s517 = int_to_ptr.vmem [resolvable:$true] %s516
          %522 = dma.hbm_to_vmem [thread:$0]  %s10, 4096, %s517, [#allocation12], 128, 128, 8
        $region52: #{tpu_custom_call.1} parent=11 // pred_fallthru
          _
        // Predicated region
        $region53: #{tpu_custom_call.1} parent=11 // pred_check
          %p523 = pneg %p287
        $region54: #{tpu_custom_call.1} parent=11 // pred_check_branch
          %525 = sbr.rel (%p523) target = $region56
        $region55: #{tpu_custom_call.1} parent=11 // pred_region
          _
        $region56: #{tpu_custom_call.1} parent=11 // pred_fallthru
          _
        // Predicated region
        $region57: #{tpu_custom_call.1} parent=11 // pred_check
          %p526 = pneg %p308
        $region58: #{tpu_custom_call.1} parent=11 // pred_check_branch
          %528 = sbr.rel (%p526) target = $region60
        $region59: #{tpu_custom_call.1} parent=11 // pred_region
          _
        $region60: #{tpu_custom_call.1} parent=11 // pred_fallthru
          _
        // Predicated region
        $region61: #{tpu_custom_call.1} parent=11 // pred_check
          %p529 = pneg %p329
        $region62: #{tpu_custom_call.1} parent=11 // pred_check_branch
          %531 = sbr.rel (%p529) target = $region64
        $region63: #{tpu_custom_call.1} parent=11 // pred_region
          _
        $region64: #{tpu_custom_call.1} parent=11 // pred_fallthru
          _
        // Predicated region
        $region65: #{tpu_custom_call.1} parent=11 // pred_check
          %p532 = pneg %p350
        $region66: #{tpu_custom_call.1} parent=11 // pred_check_branch
          %534 = sbr.rel (%p532) target = $region68
        $region67: #{tpu_custom_call.1} parent=11 // pred_region
          _
        $region68: #{tpu_custom_call.1} parent=11 // pred_fallthru
          _
        // Predicated region
        $region69: #{tpu_custom_call.1} parent=11 // pred_check
          %p535 = pneg %p371
        $region70: #{tpu_custom_call.1} parent=11 // pred_check_branch
          %537 = sbr.rel (%p535) target = $region72
        $region71: #{tpu_custom_call.1} parent=11 // pred_region
          %s539 = ssub.s32 2048, 2048
          %540 = vsyncadd [#allocation12], %s539
          %s541 = sshll.u32 [#allocation13], 4
          %s542 = int_to_ptr.vmem [resolvable:$true] %s541
          %547 = dma.hbm_to_vmem [thread:$0]  %s15, 2048, %s542, [#allocation12], 128, 128, 8
        $region72: #{tpu_custom_call.1} parent=11 // pred_fallthru
          _
        // Predicated region
        $region73: #{tpu_custom_call.1} parent=11 // pred_check
          %p548 = pneg %p392
        $region74: #{tpu_custom_call.1} parent=11 // pred_check_branch
          %550 = sbr.rel (%p548) target = $region76
        $region75: #{tpu_custom_call.1} parent=11 // pred_region
          _
        $region76: #{tpu_custom_call.1} parent=11 // pred_fallthru
          _
      $region12: #{tpu_custom_call.1} parent=5 // pred_fallthru
        _
      %p551 = scmp.lt.s32.totalorder %s30, 3
      // Predicated region
      $region77: #{tpu_custom_call.1} parent=5 // pred_check
        %p552 = pneg %p551
      $region78: #{tpu_custom_call.1} parent=5 // pred_check_branch
        %554 = sbr.rel (%p552) target = $region80
      $region79: #{tpu_custom_call.1} parent=5 // pred_region
        // Predicated region
        $region81: #{tpu_custom_call.1} parent=79 // pred_check
          %p555 = pneg %p50
        $region82: #{tpu_custom_call.1} parent=79 // pred_check_branch
          %557 = sbr.rel (%p555) target = $region84
        $region83: #{tpu_custom_call.1} parent=79 // pred_region
          %p558 = scmp.lt.s32.totalorder %s30, 2
          %s559 = scalar_select %p558, %s30, 2
          %s560 = smul.addr %s559, 8
          %s561 = scalar_lea.vmem %s0, %s560
        $region84: #{tpu_custom_call.1} parent=79 // pred_fallthru
          _
      $region80: #{tpu_custom_call.1} parent=5 // pred_fallthru
        _
      %p562 = scmp.le.s32.totalorder 1, %s30
      %p563 = scmp.lt.s32.totalorder %s30, 4
      %p564 = pnand %p562, %p563
      %p565 = pneg %p564
      // Predicated region
      $region85: #{tpu_custom_call.1} parent=5 // pred_check
        _
      $region86: #{tpu_custom_call.1} parent=5 // pred_check_branch
        %567 = sbr.rel (%p564) target = $region88
      $region87: #{tpu_custom_call.1} parent=5 // pred_region
        %s568 = ssub.s32 %s30, 1
        // Predicated region
        $region89: #{tpu_custom_call.1} parent=87 // pred_check
          %p569 = pneg %p77
        $region90: #{tpu_custom_call.1} parent=87 // pred_check_branch
          %571 = sbr.rel (%p569) target = $region92
        $region91: #{tpu_custom_call.1} parent=87 // pred_region
          %572 = dma.done [#allocation3], 4096
        $region92: #{tpu_custom_call.1} parent=87 // pred_fallthru
          _
        // Predicated region
        $region93: #{tpu_custom_call.1} parent=87 // pred_check
          %p573 = pneg %p119
        $region94: #{tpu_custom_call.1} parent=87 // pred_check_branch
          %575 = sbr.rel (%p573) target = $region96
        $region95: #{tpu_custom_call.1} parent=87 // pred_region
          %576 = dma.done [#allocation6], 4096
        $region96: #{tpu_custom_call.1} parent=87 // pred_fallthru
          _
        // Predicated region
        $region97: #{tpu_custom_call.1} parent=87 // pred_check
          %p577 = pneg %p161
        $region98: #{tpu_custom_call.1} parent=87 // pred_check_branch
          %579 = sbr.rel (%p577) target = $region100
        $region99: #{tpu_custom_call.1} parent=87 // pred_region
          %580 = dma.done [#allocation6], 4096
        $region100: #{tpu_custom_call.1} parent=87 // pred_fallthru
          _
        // Predicated region
        $region101: #{tpu_custom_call.1} parent=87 // pred_check
          %p581 = pneg %p203
        $region102: #{tpu_custom_call.1} parent=87 // pred_check_branch
          %583 = sbr.rel (%p581) target = $region104
        $region103: #{tpu_custom_call.1} parent=87 // pred_region
          %584 = dma.done [#allocation9], 4096
        $region104: #{tpu_custom_call.1} parent=87 // pred_fallthru
          _
        // Predicated region
        $region105: #{tpu_custom_call.1} parent=87 // pred_check
          %p585 = pneg %p224
        $region106: #{tpu_custom_call.1} parent=87 // pred_check_branch
          %587 = sbr.rel (%p585) target = $region108
        $region107: #{tpu_custom_call.1} parent=87 // pred_region
          %588 = dma.done [#allocation9], 4096
        $region108: #{tpu_custom_call.1} parent=87 // pred_fallthru
          _
        // Predicated region
        $region109: #{tpu_custom_call.1} parent=87 // pred_check
          %p589 = pneg %p266
        $region110: #{tpu_custom_call.1} parent=87 // pred_check_branch
          %591 = sbr.rel (%p589) target = $region112
        $region111: #{tpu_custom_call.1} parent=87 // pred_region
          %592 = dma.done [#allocation12], 4096
        $region112: #{tpu_custom_call.1} parent=87 // pred_fallthru
          _
        // Predicated region
        $region113: #{tpu_custom_call.1} parent=87 // pred_check
          %p593 = pneg %p371
        $region114: #{tpu_custom_call.1} parent=87 // pred_check_branch
          %595 = sbr.rel (%p593) target = $region116
        $region115: #{tpu_custom_call.1} parent=87 // pred_region
          %596 = dma.done [#allocation12], 2048
        $region116: #{tpu_custom_call.1} parent=87 // pred_fallthru
          _
        %p597 = scmp.lt.s32.totalorder %s35, 2
        %s598 = scalar_select %p597, %s35, 2
        %s599 = smul.addr %s598, 8
        %s600 = scalar_lea.vmem %s0, %s599
        %p601 = pneg %p56
        %p602 = pneg %p53
        %p603 = pneg %p77
        %p604 = pneg %p74
        %p605 = pneg %p98
        %p606 = pneg %p95
        %p607 = pneg %p119
        %p608 = pneg %p116
        %p609 = pneg %p140
        %p610 = pneg %p137
        %p611 = pneg %p161
        %p612 = pneg %p158
        %p613 = pneg %p182
        %p614 = pneg %p179
        %p615 = pneg %p203
        %p616 = pneg %p200
        %p617 = pneg %p224
        %p618 = pneg %p221
        %p619 = pneg %p245
        %p620 = pneg %p242
        %p621 = pneg %p266
        %p622 = pneg %p263
        %p623 = pneg %p287
        %p624 = pneg %p284
        %p625 = pneg %p308
        %p626 = pneg %p305
        %p627 = pneg %p329
        %p628 = pneg %p326
        %p629 = pneg %p350
        %p630 = pneg %p347
        %p631 = pneg %p371
        %p632 = pneg %p368
        %p633 = pneg %p392
        %p634 = pneg %p389
        %p635 = pneg %p418
        %p636 = pneg %p415
        %s637 = sand.u32 %s405, 1
        %s638 = scalar_lea.sflag [#allocation4], %s637
        %s639 = sand.u32 %s405, 1
        %s640 = smul.addr %s639, 8
        %s641 = scalar_lea.vmem [#allocation14], %s640
        %p642 = scmp.lt.s32.totalorder %s35, 2
        %s643 = scalar_select %p642, %s35, 2
        %s644 = smul.addr %s643, 8
        %s645 = scalar_lea.vmem %s0, %s644
        %v646 = vld [vmem:[%s645] sm:$0xff]
        %v647 = vld [vmem:[#allocation2] sm:$0xff]
        %v648 = vld [vmem:[#allocation2 + $0x8] sm:$0xff]
        %v649 = vld [vmem:[#allocation2 + $0x10] sm:$0xff]
        %v650 = vld [vmem:[#allocation2 + $0x18] sm:$0xff]
        %v651 = vld [vmem:[#allocation2 + $0x20] sm:$0xff]
        %v652 = vld [vmem:[#allocation2 + $0x28] sm:$0xff]
        %v653 = vld [vmem:[#allocation2 + $0x30] sm:$0xff]
        %v654 = vld [vmem:[#allocation2 + $0x38] sm:$0xff]
        %v655 = vld [vmem:[#allocation2 + $0x40] sm:$0xff]
        %v656 = vld [vmem:[#allocation2 + $0x48] sm:$0xff]
        %v657 = vld [vmem:[#allocation2 + $0x50] sm:$0xff]
        %v658 = vld [vmem:[#allocation2 + $0x58] sm:$0xff]
        %v659 = vld [vmem:[#allocation2 + $0x60] sm:$0xff]
        %v660 = vld [vmem:[#allocation2 + $0x68] sm:$0xff]
        %v661 = vld [vmem:[#allocation2 + $0x70] sm:$0xff]
        %v662 = vld [vmem:[#allocation2 + $0x78] sm:$0xff]
        %v663 = vld [vmem:[#allocation2 + $0x80] sm:$0xff]
        %v664 = vld [vmem:[#allocation2 + $0x88] sm:$0xff]
        %v665 = vld [vmem:[#allocation2 + $0x90] sm:$0xff]
        %v666 = vld [vmem:[#allocation2 + $0x98] sm:$0xff]
        %v667 = vld [vmem:[#allocation2 + $0xa0] sm:$0xff]
        %v668 = vld [vmem:[#allocation2 + $0xa8] sm:$0xff]
        %v669 = vld [vmem:[#allocation2 + $0xb0] sm:$0xff]
        %v670 = vld [vmem:[#allocation2 + $0xb8] sm:$0xff]
        %v671 = vld [vmem:[#allocation2 + $0xc0] sm:$0xff]
        %v672 = vld [vmem:[#allocation2 + $0xc8] sm:$0xff]
        %v673 = vld [vmem:[#allocation2 + $0xd0] sm:$0xff]
        %v674 = vld [vmem:[#allocation2 + $0xd8] sm:$0xff]
        %v675 = vld [vmem:[#allocation2 + $0xe0] sm:$0xff]
        %v676 = vld [vmem:[#allocation2 + $0xe8] sm:$0xff]
        %v677 = vld [vmem:[#allocation2 + $0xf0] sm:$0xff]
        %v678 = vld [vmem:[#allocation2 + $0xf8] sm:$0xff]
        %v679 = vld [vmem:[%s2] sm:$0xf]
        %v681 = vlaneseq
        %v682 = vshrl.u32 %v681, 7
        %v683 = vsub.s32 0, %v682
        %v684 = vrot.slane %v679, %v683
        %v685 = vlaneseq
        %v686 = vshrl.u32 %v685, 7
        %v687 = vsub.s32 1, %v686
        %v688 = vrot.slane %v679, %v687
        %v689 = vlaneseq
        %v690 = vshrl.u32 %v689, 7
        %v691 = vsub.s32 2, %v690
        %v692 = vrot.slane %v679, %v691
        %v693 = vlaneseq
        %v694 = vshrl.u32 %v693, 7
        %v695 = vsub.s32 3, %v694
        %v696 = vrot.slane %v679, %v695
        %vm701 = vcmask 523264
        %v703 = vsel %vm701, %v646, 0
        %705 = vmatprep.subr.mxu0 %v648
        %706 = vmatpush1.msra.mxu0 %v647
        %707 = vmatprep.subr.mxu0 %v652
        %708 = vmatpush1.msra.mxu0 %v651
        %709 = vmatprep.subr.mxu0 %v656
        %710 = vmatpush1.msra.mxu0 %v655
        %711 = vmatprep.subr.mxu0 %v660
        %712 = vmatpush1.msra.mxu0 %v659
        %713 = vmatprep.subr.mxu0 %v664
        %714 = vmatpush1.msra.mxu0 %v663
        %715 = vmatprep.subr.mxu0 %v668
        %716 = vmatpush1.msra.mxu0 %v667
        %717 = vmatprep.subr.mxu0 %v672
        %718 = vmatpush1.msra.mxu0 %v671
        %719 = vmatprep.subr.mxu0 %v676
        %720 = vmatpush1.msra.mxu0 %v675
        %721 = vmatprep.subr.mxu0 0.0
        %722 = vmatpush1.msra.mxu0 0.0
        %723 = vmatprep.subr.mxu0 0.0
        %724 = vmatpush1.msra.mxu0 0.0
        %725 = vmatprep.subr.mxu0 0.0
        %726 = vmatpush1.msra.mxu0 0.0
        %727 = vmatprep.subr.mxu0 0.0
        %728 = vmatpush1.msra.mxu0 0.0
        %729 = vmatprep.subr.mxu0 0.0
        %730 = vmatpush1.msra.mxu0 0.0
        %731 = vmatprep.subr.mxu0 0.0
        %732 = vmatpush1.msra.mxu0 0.0
        %733 = vmatprep.subr.mxu0 0.0
        %734 = vmatpush1.msra.mxu0 0.0
        %735 = vmatprep.subr.mxu0 0.0
        %736 = vmatpush1.msra.mxu0 0.0
        %737 = vmatprep.subr.mxu0 0.0
        %738 = vmatpush1.msra.mxu0 0.0
        %739 = vmatprep.subr.mxu0 0.0
        %740 = vmatpush1.msra.mxu0 0.0
        %741 = vmatprep.subr.mxu0 0.0
        %742 = vmatpush1.msra.mxu0 0.0
        %743 = vmatprep.subr.mxu0 0.0
        %744 = vmatpush1.msra.mxu0 0.0
        %745 = vmatprep.subr.mxu0 0.0
        %746 = vmatpush1.msra.mxu0 0.0
        %747 = vmatprep.subr.mxu0 0.0
        %748 = vmatpush1.msra.mxu0 0.0
        %749 = vmatprep.subr.mxu0 0.0
        %750 = vmatpush1.msra.mxu0 0.0
        %751 = vmatprep.subr.mxu0 0.0
        %752 = vmatpush1.msra.mxu0 0.0
        %753 = vmatprep.subr.mxu0 0.0
        %754 = vmatpush1.msra.mxu0 0.0
        %755 = vmatprep.subr.mxu0 0.0
        %756 = vmatpush1.msra.mxu0 0.0
        %757 = vmatprep.subr.mxu0 0.0
        %758 = vmatpush1.msra.mxu0 0.0
        %759 = vmatprep.subr.mxu0 0.0
        %760 = vmatpush1.msra.mxu0 0.0
        %761 = vmatprep.subr.mxu0 0.0
        %762 = vmatpush1.msra.mxu0 0.0
        %763 = vmatprep.subr.mxu0 0.0
        %764 = vmatpush1.msra.mxu0 0.0
        %765 = vmatprep.subr.mxu0 0.0
        %766 = vmatpush1.msra.mxu0 0.0
        %767 = vmatprep.subr.mxu0 0.0
        %768 = vmatpush1.msra.mxu0 0.0
        %769 = vmatprep.mubr.f32.mxu0 0.0
        %770 = vmatmul.mubr.f32.gmra.mrb[0].mxu0 %v703
        %v771 = vpop.f32.mrb[0].mxu0
        %v772 = vadd.f32 %v684, %v771
        %v773 = vpop.f32.mrb[0].mxu0
        %v774 = vadd.f32 %v688, %v773
        %775 = vdwg.mxu0
        %776 = vmatprep.subr.mxu0 %v650
        %777 = vmatpush1.msra.mxu0 %v649
        %778 = vmatprep.subr.mxu0 %v654
        %779 = vmatpush1.msra.mxu0 %v653
        %780 = vmatprep.subr.mxu0 %v658
        %781 = vmatpush1.msra.mxu0 %v657
        %782 = vmatprep.subr.mxu0 %v662
        %783 = vmatpush1.msra.mxu0 %v661
        %784 = vmatprep.subr.mxu0 %v666
        %785 = vmatpush1.msra.mxu0 %v665
        %786 = vmatprep.subr.mxu0 %v670
        %787 = vmatpush1.msra.mxu0 %v669
        %788 = vmatprep.subr.mxu0 %v674
        %789 = vmatpush1.msra.mxu0 %v673
        %790 = vmatprep.subr.mxu0 %v678
        %791 = vmatpush1.msra.mxu0 %v677
        %792 = vmatprep.subr.mxu0 0.0
        %793 = vmatpush1.msra.mxu0 0.0
        %794 = vmatprep.subr.mxu0 0.0
        %795 = vmatpush1.msra.mxu0 0.0
        %796 = vmatprep.subr.mxu0 0.0
        %797 = vmatpush1.msra.mxu0 0.0
        %798 = vmatprep.subr.mxu0 0.0
        %799 = vmatpush1.msra.mxu0 0.0
        %800 = vmatprep.subr.mxu0 0.0
        %801 = vmatpush1.msra.mxu0 0.0
        %802 = vmatprep.subr.mxu0 0.0
        %803 = vmatpush1.msra.mxu0 0.0
        %804 = vmatprep.subr.mxu0 0.0
        %805 = vmatpush1.msra.mxu0 0.0
        %806 = vmatprep.subr.mxu0 0.0
        %807 = vmatpush1.msra.mxu0 0.0
        %808 = vmatprep.subr.mxu0 0.0
        %809 = vmatpush1.msra.mxu0 0.0
        %810 = vmatprep.subr.mxu0 0.0
        %811 = vmatpush1.msra.mxu0 0.0
        %812 = vmatprep.subr.mxu0 0.0
        %813 = vmatpush1.msra.mxu0 0.0
        %814 = vmatprep.subr.mxu0 0.0
        %815 = vmatpush1.msra.mxu0 0.0
        %816 = vmatprep.subr.mxu0 0.0
        %817 = vmatpush1.msra.mxu0 0.0
        %818 = vmatprep.subr.mxu0 0.0
        %819 = vmatpush1.msra.mxu0 0.0
        %820 = vmatprep.subr.mxu0 0.0
        %821 = vmatpush1.msra.mxu0 0.0
        %822 = vmatprep.subr.mxu0 0.0
        %823 = vmatpush1.msra.mxu0 0.0
        %824 = vmatprep.subr.mxu0 0.0
        %825 = vmatpush1.msra.mxu0 0.0
        %826 = vmatprep.subr.mxu0 0.0
        %827 = vmatpush1.msra.mxu0 0.0
        %828 = vmatprep.subr.mxu0 0.0
        %829 = vmatpush1.msra.mxu0 0.0
        %830 = vmatprep.subr.mxu0 0.0
        %831 = vmatpush1.msra.mxu0 0.0
        %832 = vmatprep.subr.mxu0 0.0
        %833 = vmatpush1.msra.mxu0 0.0
        %834 = vmatprep.subr.mxu0 0.0
        %835 = vmatpush1.msra.mxu0 0.0
        %836 = vmatprep.subr.mxu0 0.0
        %837 = vmatpush1.msra.mxu0 0.0
        %838 = vmatprep.subr.mxu0 0.0
        %839 = vmatpush1.msra.mxu0 0.0
        %840 = vmatprep.mubr.f32.mxu0 0.0
        %841 = vmatmul.mubr.f32.gmra.mrb[0].mxu0 %v703
        %v842 = vpop.f32.mrb[0].mxu0
        %v843 = vadd.f32 %v692, %v842
        %v844 = vpop.f32.mrb[0].mxu0
        %v845 = vadd.f32 %v696, %v844
        %846 = vdwg.mxu0
        %v847 = vmax.f32 %v772, 0.0
        %v848 = vmax.f32 %v774, 0.0
        %v849 = vmax.f32 %v843, 0.0
        %v850 = vmax.f32 %v845, 0.0
        %v851 = vld [vmem:[#allocation5] sm:$0xff]
        %v852 = vld [vmem:[#allocation5 + $0x8] sm:$0xff]
        %v853 = vld [vmem:[#allocation5 + $0x10] sm:$0xff]
        %v854 = vld [vmem:[#allocation5 + $0x18] sm:$0xff]
        %v855 = vld [vmem:[#allocation5 + $0x20] sm:$0xff]
        %v856 = vld [vmem:[#allocation5 + $0x28] sm:$0xff]
        %v857 = vld [vmem:[#allocation5 + $0x30] sm:$0xff]
        %v858 = vld [vmem:[#allocation5 + $0x38] sm:$0xff]
        %v859 = vld [vmem:[#allocation5 + $0x40] sm:$0xff]
        %v860 = vld [vmem:[#allocation5 + $0x48] sm:$0xff]
        %v861 = vld [vmem:[#allocation5 + $0x50] sm:$0xff]
        %v862 = vld [vmem:[#allocation5 + $0x58] sm:$0xff]
        %v863 = vld [vmem:[#allocation5 + $0x60] sm:$0xff]
        %v864 = vld [vmem:[#allocation5 + $0x68] sm:$0xff]
        %v865 = vld [vmem:[#allocation5 + $0x70] sm:$0xff]
        %v866 = vld [vmem:[#allocation5 + $0x78] sm:$0xff]
        %v867 = vld [vmem:[#allocation5 + $0x80] sm:$0xff]
        %v868 = vld [vmem:[#allocation5 + $0x88] sm:$0xff]
        %v869 = vld [vmem:[#allocation5 + $0x90] sm:$0xff]
        %v870 = vld [vmem:[#allocation5 + $0x98] sm:$0xff]
        %v871 = vld [vmem:[#allocation5 + $0xa0] sm:$0xff]
        %v872 = vld [vmem:[#allocation5 + $0xa8] sm:$0xff]
        %v873 = vld [vmem:[#allocation5 + $0xb0] sm:$0xff]
        %v874 = vld [vmem:[#allocation5 + $0xb8] sm:$0xff]
        %v875 = vld [vmem:[#allocation5 + $0xc0] sm:$0xff]
        %v876 = vld [vmem:[#allocation5 + $0xc8] sm:$0xff]
        %v877 = vld [vmem:[#allocation5 + $0xd0] sm:$0xff]
        %v878 = vld [vmem:[#allocation5 + $0xd8] sm:$0xff]
        %v879 = vld [vmem:[#allocation5 + $0xe0] sm:$0xff]
        %v880 = vld [vmem:[#allocation5 + $0xe8] sm:$0xff]
        %v881 = vld [vmem:[#allocation5 + $0xf0] sm:$0xff]
        %v882 = vld [vmem:[#allocation5 + $0xf8] sm:$0xff]
        %v883 = vld [vmem:[%s4] sm:$0x1]
        %v885 = vlaneseq
        %v886 = vshrl.u32 %v885, 7
        %v887 = vsub.s32 0, %v886
        %v888 = vrot.slane %v883, %v887
        %890 = vmatprep.subr.mxu0 0.0
        %891 = vmatpush1.msra.mxu0 %v851
        %892 = vmatprep.subr.mxu0 0.0
        %893 = vmatpush1.msra.mxu0 %v852
        %894 = vmatprep.subr.mxu0 0.0
        %895 = vmatpush1.msra.mxu0 %v853
        %896 = vmatprep.subr.mxu0 0.0
        %897 = vmatpush1.msra.mxu0 %v854
        %898 = vmatprep.subr.mxu0 0.0
        %899 = vmatpush1.msra.mxu0 %v855
        %900 = vmatprep.subr.mxu0 0.0
        %901 = vmatpush1.msra.mxu0 %v856
        %902 = vmatprep.subr.mxu0 0.0
        %903 = vmatpush1.msra.mxu0 %v857
        %904 = vmatprep.subr.mxu0 0.0
        %905 = vmatpush1.msra.mxu0 %v858
        %906 = vmatprep.subr.mxu0 0.0
        %907 = vmatpush1.msra.mxu0 %v859
        %908 = vmatprep.subr.mxu0 0.0
        %909 = vmatpush1.msra.mxu0 %v860
        %910 = vmatprep.subr.mxu0 0.0
        %911 = vmatpush1.msra.mxu0 %v861
        %912 = vmatprep.subr.mxu0 0.0
        %913 = vmatpush1.msra.mxu0 %v862
        %914 = vmatprep.subr.mxu0 0.0
        %915 = vmatpush1.msra.mxu0 %v863
        %916 = vmatprep.subr.mxu0 0.0
        %917 = vmatpush1.msra.mxu0 %v864
        %918 = vmatprep.subr.mxu0 0.0
        %919 = vmatpush1.msra.mxu0 %v865
        %920 = vmatprep.subr.mxu0 0.0
        %921 = vmatpush1.msra.mxu0 %v866
        %922 = vmatprep.subr.mxu0 0.0
        %923 = vmatpush1.msra.mxu0 %v867
        %924 = vmatprep.subr.mxu0 0.0
        %925 = vmatpush1.msra.mxu0 %v868
        %926 = vmatprep.subr.mxu0 0.0
        %927 = vmatpush1.msra.mxu0 %v869
        %928 = vmatprep.subr.mxu0 0.0
        %929 = vmatpush1.msra.mxu0 %v870
        %930 = vmatprep.subr.mxu0 0.0
        %931 = vmatpush1.msra.mxu0 %v871
        %932 = vmatprep.subr.mxu0 0.0
        %933 = vmatpush1.msra.mxu0 %v872
        %934 = vmatprep.subr.mxu0 0.0
        %935 = vmatpush1.msra.mxu0 %v873
        %936 = vmatprep.subr.mxu0 0.0
        %937 = vmatpush1.msra.mxu0 %v874
        %938 = vmatprep.subr.mxu0 0.0
        %939 = vmatpush1.msra.mxu0 %v875
        %940 = vmatprep.subr.mxu0 0.0
        %941 = vmatpush1.msra.mxu0 %v876
        %942 = vmatprep.subr.mxu0 0.0
        %943 = vmatpush1.msra.mxu0 %v877
        %944 = vmatprep.subr.mxu0 0.0
        %945 = vmatpush1.msra.mxu0 %v878
        %946 = vmatprep.subr.mxu0 0.0
        %947 = vmatpush1.msra.mxu0 %v879
        %948 = vmatprep.subr.mxu0 0.0
        %949 = vmatpush1.msra.mxu0 %v880
        %950 = vmatprep.subr.mxu0 0.0
        %951 = vmatpush1.msra.mxu0 %v881
        %952 = vmatprep.subr.mxu0 0.0
        %953 = vmatpush1.msra.mxu0 %v882
        %954 = vmatprep.mubr.f32.mxu0 %v848
        %955 = vmatmul.mubr.f32.gmra.mrb[0].mxu0 %v847
        %v956 = vpop.f32.mrb[0].mxu0
        %v957 = vadd.f32 %v888, %v956
        %v958 = vpop.f32.mrb[0].mxu0
        %959 = vdwg.mxu0
        %v960 = vmax.f32 %v957, 0.0
        %v961 = vld [vmem:[#allocation7] sm:$0xff]
        %v962 = vld [vmem:[#allocation7 + $0x8] sm:$0xff]
        %v963 = vld [vmem:[#allocation7 + $0x10] sm:$0xff]
        %v964 = vld [vmem:[#allocation7 + $0x18] sm:$0xff]
        %v965 = vld [vmem:[#allocation7 + $0x20] sm:$0xff]
        %v966 = vld [vmem:[#allocation7 + $0x28] sm:$0xff]
        %v967 = vld [vmem:[#allocation7 + $0x30] sm:$0xff]
        %v968 = vld [vmem:[#allocation7 + $0x38] sm:$0xff]
        %v969 = vld [vmem:[#allocation7 + $0x40] sm:$0xff]
        %v970 = vld [vmem:[#allocation7 + $0x48] sm:$0xff]
        %v971 = vld [vmem:[#allocation7 + $0x50] sm:$0xff]
        %v972 = vld [vmem:[#allocation7 + $0x58] sm:$0xff]
        %v973 = vld [vmem:[#allocation7 + $0x60] sm:$0xff]
        %v974 = vld [vmem:[#allocation7 + $0x68] sm:$0xff]
        %v975 = vld [vmem:[#allocation7 + $0x70] sm:$0xff]
        %v976 = vld [vmem:[#allocation7 + $0x78] sm:$0xff]
        %v977 = vld [vmem:[#allocation7 + $0x80] sm:$0xff]
        %v978 = vld [vmem:[#allocation7 + $0x88] sm:$0xff]
        %v979 = vld [vmem:[#allocation7 + $0x90] sm:$0xff]
        %v980 = vld [vmem:[#allocation7 + $0x98] sm:$0xff]
        %v981 = vld [vmem:[#allocation7 + $0xa0] sm:$0xff]
        %v982 = vld [vmem:[#allocation7 + $0xa8] sm:$0xff]
        %v983 = vld [vmem:[#allocation7 + $0xb0] sm:$0xff]
        %v984 = vld [vmem:[#allocation7 + $0xb8] sm:$0xff]
        %v985 = vld [vmem:[#allocation7 + $0xc0] sm:$0xff]
        %v986 = vld [vmem:[#allocation7 + $0xc8] sm:$0xff]
        %v987 = vld [vmem:[#allocation7 + $0xd0] sm:$0xff]
        %v988 = vld [vmem:[#allocation7 + $0xd8] sm:$0xff]
        %v989 = vld [vmem:[#allocation7 + $0xe0] sm:$0xff]
        %v990 = vld [vmem:[#allocation7 + $0xe8] sm:$0xff]
        %v991 = vld [vmem:[#allocation7 + $0xf0] sm:$0xff]
        %v992 = vld [vmem:[#allocation7 + $0xf8] sm:$0xff]
        %v993 = vld [vmem:[%s6] sm:$0x1]
        %v995 = vlaneseq
        %v996 = vshrl.u32 %v995, 7
        %v997 = vsub.s32 0, %v996
        %v998 = vrot.slane %v993, %v997
        %1000 = vmatprep.subr.mxu0 0.0
        %1001 = vmatpush1.msra.mxu0 %v961
        %1002 = vmatprep.subr.mxu0 0.0
        %1003 = vmatpush1.msra.mxu0 %v962
        %1004 = vmatprep.subr.mxu0 0.0
        %1005 = vmatpush1.msra.mxu0 %v963
        %1006 = vmatprep.subr.mxu0 0.0
        %1007 = vmatpush1.msra.mxu0 %v964
        %1008 = vmatprep.subr.mxu0 0.0
        %1009 = vmatpush1.msra.mxu0 %v965
        %1010 = vmatprep.subr.mxu0 0.0
        %1011 = vmatpush1.msra.mxu0 %v966
        %1012 = vmatprep.subr.mxu0 0.0
        %1013 = vmatpush1.msra.mxu0 %v967
        %1014 = vmatprep.subr.mxu0 0.0
        %1015 = vmatpush1.msra.mxu0 %v968
        %1016 = vmatprep.subr.mxu0 0.0
        %1017 = vmatpush1.msra.mxu0 %v969
        %1018 = vmatprep.subr.mxu0 0.0
        %1019 = vmatpush1.msra.mxu0 %v970
        %1020 = vmatprep.subr.mxu0 0.0
        %1021 = vmatpush1.msra.mxu0 %v971
        %1022 = vmatprep.subr.mxu0 0.0
        %1023 = vmatpush1.msra.mxu0 %v972
        %1024 = vmatprep.subr.mxu0 0.0
        %1025 = vmatpush1.msra.mxu0 %v973
        %1026 = vmatprep.subr.mxu0 0.0
        %1027 = vmatpush1.msra.mxu0 %v974
        %1028 = vmatprep.subr.mxu0 0.0
        %1029 = vmatpush1.msra.mxu0 %v975
        %1030 = vmatprep.subr.mxu0 0.0
        %1031 = vmatpush1.msra.mxu0 %v976
        %1032 = vmatprep.subr.mxu0 0.0
        %1033 = vmatpush1.msra.mxu0 %v977
        %1034 = vmatprep.subr.mxu0 0.0
        %1035 = vmatpush1.msra.mxu0 %v978
        %1036 = vmatprep.subr.mxu0 0.0
        %1037 = vmatpush1.msra.mxu0 %v979
        %1038 = vmatprep.subr.mxu0 0.0
        %1039 = vmatpush1.msra.mxu0 %v980
        %1040 = vmatprep.subr.mxu0 0.0
        %1041 = vmatpush1.msra.mxu0 %v981
        %1042 = vmatprep.subr.mxu0 0.0
        %1043 = vmatpush1.msra.mxu0 %v982
        %1044 = vmatprep.subr.mxu0 0.0
        %1045 = vmatpush1.msra.mxu0 %v983
        %1046 = vmatprep.subr.mxu0 0.0
        %1047 = vmatpush1.msra.mxu0 %v984
        %1048 = vmatprep.subr.mxu0 0.0
        %1049 = vmatpush1.msra.mxu0 %v985
        %1050 = vmatprep.subr.mxu0 0.0
        %1051 = vmatpush1.msra.mxu0 %v986
        %1052 = vmatprep.subr.mxu0 0.0
        %1053 = vmatpush1.msra.mxu0 %v987
        %1054 = vmatprep.subr.mxu0 0.0
        %1055 = vmatpush1.msra.mxu0 %v988
        %1056 = vmatprep.subr.mxu0 0.0
        %1057 = vmatpush1.msra.mxu0 %v989
        %1058 = vmatprep.subr.mxu0 0.0
        %1059 = vmatpush1.msra.mxu0 %v990
        %1060 = vmatprep.subr.mxu0 0.0
        %1061 = vmatpush1.msra.mxu0 %v991
        %1062 = vmatprep.subr.mxu0 0.0
        %1063 = vmatpush1.msra.mxu0 %v992
        %1064 = vmatprep.mubr.f32.mxu0 %v850
        %1065 = vmatmul.mubr.f32.gmra.mrb[0].mxu0 %v849
        %v1066 = vpop.f32.mrb[0].mxu0
        %v1067 = vadd.f32 %v998, %v1066
        %v1068 = vpop.f32.mrb[0].mxu0
        %1069 = vdwg.mxu0
        %v1070 = vmax.f32 %v1067, 0.0
        %v1071 = vld [vmem:[#allocation8] sm:$0xff]
        %v1072 = vld [vmem:[#allocation8 + $0x8] sm:$0xff]
        %v1073 = vld [vmem:[#allocation8 + $0x10] sm:$0xff]
        %v1074 = vld [vmem:[#allocation8 + $0x18] sm:$0xff]
        %v1075 = vld [vmem:[#allocation8 + $0x20] sm:$0xff]
        %v1076 = vld [vmem:[#allocation8 + $0x28] sm:$0xff]
        %v1077 = vld [vmem:[#allocation8 + $0x30] sm:$0xff]
        %v1078 = vld [vmem:[#allocation8 + $0x38] sm:$0xff]
        %v1079 = vld [vmem:[#allocation8 + $0x40] sm:$0xff]
        %v1080 = vld [vmem:[#allocation8 + $0x48] sm:$0xff]
        %v1081 = vld [vmem:[#allocation8 + $0x50] sm:$0xff]
        %v1082 = vld [vmem:[#allocation8 + $0x58] sm:$0xff]
        %v1083 = vld [vmem:[#allocation8 + $0x60] sm:$0xff]
        %v1084 = vld [vmem:[#allocation8 + $0x68] sm:$0xff]
        %v1085 = vld [vmem:[#allocation8 + $0x70] sm:$0xff]
        %v1086 = vld [vmem:[#allocation8 + $0x78] sm:$0xff]
        %v1087 = vld [vmem:[#allocation8 + $0x80] sm:$0xff]
        %v1088 = vld [vmem:[#allocation8 + $0x88] sm:$0xff]
        %v1089 = vld [vmem:[#allocation8 + $0x90] sm:$0xff]
        %v1090 = vld [vmem:[#allocation8 + $0x98] sm:$0xff]
        %v1091 = vld [vmem:[#allocation8 + $0xa0] sm:$0xff]
        %v1092 = vld [vmem:[#allocation8 + $0xa8] sm:$0xff]
        %v1093 = vld [vmem:[#allocation8 + $0xb0] sm:$0xff]
        %v1094 = vld [vmem:[#allocation8 + $0xb8] sm:$0xff]
        %v1095 = vld [vmem:[#allocation8 + $0xc0] sm:$0xff]
        %v1096 = vld [vmem:[#allocation8 + $0xc8] sm:$0xff]
        %v1097 = vld [vmem:[#allocation8 + $0xd0] sm:$0xff]
        %v1098 = vld [vmem:[#allocation8 + $0xd8] sm:$0xff]
        %v1099 = vld [vmem:[#allocation8 + $0xe0] sm:$0xff]
        %v1100 = vld [vmem:[#allocation8 + $0xe8] sm:$0xff]
        %v1101 = vld [vmem:[#allocation8 + $0xf0] sm:$0xff]
        %v1102 = vld [vmem:[#allocation8 + $0xf8] sm:$0xff]
        %v1103 = vld [vmem:[#allocation10] sm:$0xff]
        %v1104 = vld [vmem:[#allocation10 + $0x8] sm:$0xff]
        %v1105 = vld [vmem:[#allocation10 + $0x10] sm:$0xff]
        %v1106 = vld [vmem:[#allocation10 + $0x18] sm:$0xff]
        %v1107 = vld [vmem:[#allocation10 + $0x20] sm:$0xff]
        %v1108 = vld [vmem:[#allocation10 + $0x28] sm:$0xff]
        %v1109 = vld [vmem:[#allocation10 + $0x30] sm:$0xff]
        %v1110 = vld [vmem:[#allocation10 + $0x38] sm:$0xff]
        %v1111 = vld [vmem:[#allocation10 + $0x40] sm:$0xff]
        %v1112 = vld [vmem:[#allocation10 + $0x48] sm:$0xff]
        %v1113 = vld [vmem:[#allocation10 + $0x50] sm:$0xff]
        %v1114 = vld [vmem:[#allocation10 + $0x58] sm:$0xff]
        %v1115 = vld [vmem:[#allocation10 + $0x60] sm:$0xff]
        %v1116 = vld [vmem:[#allocation10 + $0x68] sm:$0xff]
        %v1117 = vld [vmem:[#allocation10 + $0x70] sm:$0xff]
        %v1118 = vld [vmem:[#allocation10 + $0x78] sm:$0xff]
        %v1119 = vld [vmem:[#allocation10 + $0x80] sm:$0xff]
        %v1120 = vld [vmem:[#allocation10 + $0x88] sm:$0xff]
        %v1121 = vld [vmem:[#allocation10 + $0x90] sm:$0xff]
        %v1122 = vld [vmem:[#allocation10 + $0x98] sm:$0xff]
        %v1123 = vld [vmem:[#allocation10 + $0xa0] sm:$0xff]
        %v1124 = vld [vmem:[#allocation10 + $0xa8] sm:$0xff]
        %v1125 = vld [vmem:[#allocation10 + $0xb0] sm:$0xff]
        %v1126 = vld [vmem:[#allocation10 + $0xb8] sm:$0xff]
        %v1127 = vld [vmem:[#allocation10 + $0xc0] sm:$0xff]
        %v1128 = vld [vmem:[#allocation10 + $0xc8] sm:$0xff]
        %v1129 = vld [vmem:[#allocation10 + $0xd0] sm:$0xff]
        %v1130 = vld [vmem:[#allocation10 + $0xd8] sm:$0xff]
        %v1131 = vld [vmem:[#allocation10 + $0xe0] sm:$0xff]
        %v1132 = vld [vmem:[#allocation10 + $0xe8] sm:$0xff]
        %v1133 = vld [vmem:[#allocation10 + $0xf0] sm:$0xff]
        %v1134 = vld [vmem:[#allocation10 + $0xf8] sm:$0xff]
        %1135 = vmatprep.subr.mxu0 %v1104
        %1136 = vmatpush1.msra.mxu0 %v1103
        %1137 = vmatprep.subr.mxu0 %v1106
        %1138 = vmatpush1.msra.mxu0 %v1105
        %1139 = vmatprep.subr.mxu0 %v1108
        %1140 = vmatpush1.msra.mxu0 %v1107
        %1141 = vmatprep.subr.mxu0 %v1110
        %1142 = vmatpush1.msra.mxu0 %v1109
        %1143 = vmatprep.subr.mxu0 %v1112
        %1144 = vmatpush1.msra.mxu0 %v1111
        %1145 = vmatprep.subr.mxu0 %v1114
        %1146 = vmatpush1.msra.mxu0 %v1113
        %1147 = vmatprep.subr.mxu0 %v1116
        %1148 = vmatpush1.msra.mxu0 %v1115
        %1149 = vmatprep.subr.mxu0 %v1118
        %1150 = vmatpush1.msra.mxu0 %v1117
        %1151 = vmatprep.subr.mxu0 %v1120
        %1152 = vmatpush1.msra.mxu0 %v1119
        %1153 = vmatprep.subr.mxu0 %v1122
        %1154 = vmatpush1.msra.mxu0 %v1121
        %1155 = vmatprep.subr.mxu0 %v1124
        %1156 = vmatpush1.msra.mxu0 %v1123
        %1157 = vmatprep.subr.mxu0 %v1126
        %1158 = vmatpush1.msra.mxu0 %v1125
        %1159 = vmatprep.subr.mxu0 %v1128
        %1160 = vmatpush1.msra.mxu0 %v1127
        %1161 = vmatprep.subr.mxu0 %v1130
        %1162 = vmatpush1.msra.mxu0 %v1129
        %1163 = vmatprep.subr.mxu0 %v1132
        %1164 = vmatpush1.msra.mxu0 %v1131
        %1165 = vmatprep.subr.mxu0 %v1134
        %1166 = vmatpush1.msra.mxu0 %v1133
        %1167 = vmatprep.subr.mxu0 0.0
        %1168 = vmatpush1.msra.mxu0 0.0
        %1169 = vmatprep.subr.mxu0 0.0
        %1170 = vmatpush1.msra.mxu0 0.0
        %1171 = vmatprep.subr.mxu0 0.0
        %1172 = vmatpush1.msra.mxu0 0.0
        %1173 = vmatprep.subr.mxu0 0.0
        %1174 = vmatpush1.msra.mxu0 0.0
        %1175 = vmatprep.subr.mxu0 0.0
        %1176 = vmatpush1.msra.mxu0 0.0
        %1177 = vmatprep.subr.mxu0 0.0
        %1178 = vmatpush1.msra.mxu0 0.0
        %1179 = vmatprep.subr.mxu0 0.0
        %1180 = vmatpush1.msra.mxu0 0.0
        %1181 = vmatprep.subr.mxu0 0.0
        %1182 = vmatpush1.msra.mxu0 0.0
        %1183 = vmatprep.subr.mxu0 0.0
        %1184 = vmatpush1.msra.mxu0 0.0
        %1185 = vmatprep.subr.mxu0 0.0
        %1186 = vmatpush1.msra.mxu0 0.0
        %1187 = vmatprep.subr.mxu0 0.0
        %1188 = vmatpush1.msra.mxu0 0.0
        %1189 = vmatprep.subr.mxu0 0.0
        %1190 = vmatpush1.msra.mxu0 0.0
        %1191 = vmatprep.subr.mxu0 0.0
        %1192 = vmatpush1.msra.mxu0 0.0
        %1193 = vmatprep.subr.mxu0 0.0
        %1194 = vmatpush1.msra.mxu0 0.0
        %1195 = vmatprep.subr.mxu0 0.0
        %1196 = vmatpush1.msra.mxu0 0.0
        %1197 = vmatprep.subr.mxu0 0.0
        %1198 = vmatpush1.msra.mxu0 0.0
        %1199 = vmatprep.mubr.f32.mxu0 0.0
        %1200 = vmatmul.mubr.f32.gmra.mrb[0].mxu0 %v1070
        %v1201 = vpop.f32.mrb[0].mxu0
        %v1202 = vadd.f32 0.0, %v1201
        %v1203 = vpop.f32.mrb[0].mxu0
        %v1204 = vadd.f32 0.0, %v1203
        %1205 = vdwg.mxu0
        %1206 = vmatprep.subr.mxu0 %v1072
        %1207 = vmatpush1.msra.mxu0 %v1071
        %1208 = vmatprep.subr.mxu0 %v1074
        %1209 = vmatpush1.msra.mxu0 %v1073
        %1210 = vmatprep.subr.mxu0 %v1076
        %1211 = vmatpush1.msra.mxu0 %v1075
        %1212 = vmatprep.subr.mxu0 %v1078
        %1213 = vmatpush1.msra.mxu0 %v1077
        %1214 = vmatprep.subr.mxu0 %v1080
        %1215 = vmatpush1.msra.mxu0 %v1079
        %1216 = vmatprep.subr.mxu0 %v1082
        %1217 = vmatpush1.msra.mxu0 %v1081
        %1218 = vmatprep.subr.mxu0 %v1084
        %1219 = vmatpush1.msra.mxu0 %v1083
        %1220 = vmatprep.subr.mxu0 %v1086
        %1221 = vmatpush1.msra.mxu0 %v1085
        %1222 = vmatprep.subr.mxu0 %v1088
        %1223 = vmatpush1.msra.mxu0 %v1087
        %1224 = vmatprep.subr.mxu0 %v1090
        %1225 = vmatpush1.msra.mxu0 %v1089
        %1226 = vmatprep.subr.mxu0 %v1092
        %1227 = vmatpush1.msra.mxu0 %v1091
        %1228 = vmatprep.subr.mxu0 %v1094
        %1229 = vmatpush1.msra.mxu0 %v1093
        %1230 = vmatprep.subr.mxu0 %v1096
        %1231 = vmatpush1.msra.mxu0 %v1095
        %1232 = vmatprep.subr.mxu0 %v1098
        %1233 = vmatpush1.msra.mxu0 %v1097
        %1234 = vmatprep.subr.mxu0 %v1100
        %1235 = vmatpush1.msra.mxu0 %v1099
        %1236 = vmatprep.subr.mxu0 %v1102
        %1237 = vmatpush1.msra.mxu0 %v1101
        %1238 = vmatprep.subr.mxu0 0.0
        %1239 = vmatpush1.msra.mxu0 0.0
        %1240 = vmatprep.subr.mxu0 0.0
        %1241 = vmatpush1.msra.mxu0 0.0
        %1242 = vmatprep.subr.mxu0 0.0
        %1243 = vmatpush1.msra.mxu0 0.0
        %1244 = vmatprep.subr.mxu0 0.0
        %1245 = vmatpush1.msra.mxu0 0.0
        %1246 = vmatprep.subr.mxu0 0.0
        %1247 = vmatpush1.msra.mxu0 0.0
        %1248 = vmatprep.subr.mxu0 0.0
        %1249 = vmatpush1.msra.mxu0 0.0
        %1250 = vmatprep.subr.mxu0 0.0
        %1251 = vmatpush1.msra.mxu0 0.0
        %1252 = vmatprep.subr.mxu0 0.0
        %1253 = vmatpush1.msra.mxu0 0.0
        %1254 = vmatprep.subr.mxu0 0.0
        %1255 = vmatpush1.msra.mxu0 0.0
        %1256 = vmatprep.subr.mxu0 0.0
        %1257 = vmatpush1.msra.mxu0 0.0
        %1258 = vmatprep.subr.mxu0 0.0
        %1259 = vmatpush1.msra.mxu0 0.0
        %1260 = vmatprep.subr.mxu0 0.0
        %1261 = vmatpush1.msra.mxu0 0.0
        %1262 = vmatprep.subr.mxu0 0.0
        %1263 = vmatpush1.msra.mxu0 0.0
        %1264 = vmatprep.subr.mxu0 0.0
        %1265 = vmatpush1.msra.mxu0 0.0
        %1266 = vmatprep.subr.mxu0 0.0
        %1267 = vmatpush1.msra.mxu0 0.0
        %1268 = vmatprep.subr.mxu0 0.0
        %1269 = vmatpush1.msra.mxu0 0.0
        %1270 = vmatprep.mubr.f32.mxu0 0.0
        %1271 = vmatmul.mubr.f32.gmra.mrb[0].mxu0 %v960
        %v1272 = vpop.f32.mrb[0].mxu0
        %v1273 = vadd.f32 %v1202, %v1272
        %v1274 = vpop.f32.mrb[0].mxu0
        %v1275 = vadd.f32 %v1204, %v1274
        %1276 = vdwg.mxu0
        %v1277 = vld [vmem:[%s9] sm:$0x3]
        %v1279 = vlaneseq
        %v1280 = vshrl.u32 %v1279, 7
        %v1281 = vsub.s32 0, %v1280
        %v1282 = vrot.slane %v1277, %v1281
        %v1283 = vlaneseq
        %v1284 = vshrl.u32 %v1283, 7
        %v1285 = vsub.s32 1, %v1284
        %v1286 = vrot.slane %v1277, %v1285
        %v1289 = vadd.f32 %v1273, %v1282
        %v1290 = vadd.f32 %v1275, %v1286
        %v1291 = vmax.f32 %v1289, 0.0
        %v1292 = vmax.f32 %v1290, 0.0
        %v1293 = vld [vmem:[#allocation11] sm:$0xff]
        %v1294 = vld [vmem:[#allocation11 + $0x8] sm:$0xff]
        %v1295 = vld [vmem:[#allocation11 + $0x10] sm:$0xff]
        %v1296 = vld [vmem:[#allocation11 + $0x18] sm:$0xff]
        %v1297 = vld [vmem:[#allocation11 + $0x20] sm:$0xff]
        %v1298 = vld [vmem:[#allocation11 + $0x28] sm:$0xff]
        %v1299 = vld [vmem:[#allocation11 + $0x30] sm:$0xff]
        %v1300 = vld [vmem:[#allocation11 + $0x38] sm:$0xff]
        %v1301 = vld [vmem:[#allocation11 + $0x40] sm:$0xff]
        %v1302 = vld [vmem:[#allocation11 + $0x48] sm:$0xff]
        %v1303 = vld [vmem:[#allocation11 + $0x50] sm:$0xff]
        %v1304 = vld [vmem:[#allocation11 + $0x58] sm:$0xff]
        %v1305 = vld [vmem:[#allocation11 + $0x60] sm:$0xff]
        %v1306 = vld [vmem:[#allocation11 + $0x68] sm:$0xff]
        %v1307 = vld [vmem:[#allocation11 + $0x70] sm:$0xff]
        %v1308 = vld [vmem:[#allocation11 + $0x78] sm:$0xff]
        %v1309 = vld [vmem:[#allocation11 + $0x80] sm:$0xff]
        %v1310 = vld [vmem:[#allocation11 + $0x88] sm:$0xff]
        %v1311 = vld [vmem:[#allocation11 + $0x90] sm:$0xff]
        %v1312 = vld [vmem:[#allocation11 + $0x98] sm:$0xff]
        %v1313 = vld [vmem:[#allocation11 + $0xa0] sm:$0xff]
        %v1314 = vld [vmem:[#allocation11 + $0xa8] sm:$0xff]
        %v1315 = vld [vmem:[#allocation11 + $0xb0] sm:$0xff]
        %v1316 = vld [vmem:[#allocation11 + $0xb8] sm:$0xff]
        %v1317 = vld [vmem:[#allocation11 + $0xc0] sm:$0xff]
        %v1318 = vld [vmem:[#allocation11 + $0xc8] sm:$0xff]
        %v1319 = vld [vmem:[#allocation11 + $0xd0] sm:$0xff]
        %v1320 = vld [vmem:[#allocation11 + $0xd8] sm:$0xff]
        %v1321 = vld [vmem:[#allocation11 + $0xe0] sm:$0xff]
        %v1322 = vld [vmem:[#allocation11 + $0xe8] sm:$0xff]
        %v1323 = vld [vmem:[#allocation11 + $0xf0] sm:$0xff]
        %v1324 = vld [vmem:[#allocation11 + $0xf8] sm:$0xff]
        %v1325 = vld [vmem:[%s11] sm:$0x1]
        %v1327 = vlaneseq
        %v1328 = vshrl.u32 %v1327, 7
        %v1329 = vsub.s32 0, %v1328
        %v1330 = vrot.slane %v1325, %v1329
        %1332 = vmatprep.subr.mxu0 0.0
        %1333 = vmatpush1.msra.mxu0 %v1293
        %1334 = vmatprep.subr.mxu0 0.0
        %1335 = vmatpush1.msra.mxu0 %v1294
        %1336 = vmatprep.subr.mxu0 0.0
        %1337 = vmatpush1.msra.mxu0 %v1295
        %1338 = vmatprep.subr.mxu0 0.0
        %1339 = vmatpush1.msra.mxu0 %v1296
        %1340 = vmatprep.subr.mxu0 0.0
        %1341 = vmatpush1.msra.mxu0 %v1297
        %1342 = vmatprep.subr.mxu0 0.0
        %1343 = vmatpush1.msra.mxu0 %v1298
        %1344 = vmatprep.subr.mxu0 0.0
        %1345 = vmatpush1.msra.mxu0 %v1299
        %1346 = vmatprep.subr.mxu0 0.0
        %1347 = vmatpush1.msra.mxu0 %v1300
        %1348 = vmatprep.subr.mxu0 0.0
        %1349 = vmatpush1.msra.mxu0 %v1301
        %1350 = vmatprep.subr.mxu0 0.0
        %1351 = vmatpush1.msra.mxu0 %v1302
        %1352 = vmatprep.subr.mxu0 0.0
        %1353 = vmatpush1.msra.mxu0 %v1303
        %1354 = vmatprep.subr.mxu0 0.0
        %1355 = vmatpush1.msra.mxu0 %v1304
        %1356 = vmatprep.subr.mxu0 0.0
        %1357 = vmatpush1.msra.mxu0 %v1305
        %1358 = vmatprep.subr.mxu0 0.0
        %1359 = vmatpush1.msra.mxu0 %v1306
        %1360 = vmatprep.subr.mxu0 0.0
        %1361 = vmatpush1.msra.mxu0 %v1307
        %1362 = vmatprep.subr.mxu0 0.0
        %1363 = vmatpush1.msra.mxu0 %v1308
        %1364 = vmatprep.subr.mxu0 0.0
        %1365 = vmatpush1.msra.mxu0 %v1309
        %1366 = vmatprep.subr.mxu0 0.0
        %1367 = vmatpush1.msra.mxu0 %v1310
        %1368 = vmatprep.subr.mxu0 0.0
        %1369 = vmatpush1.msra.mxu0 %v1311
        %1370 = vmatprep.subr.mxu0 0.0
        %1371 = vmatpush1.msra.mxu0 %v1312
        %1372 = vmatprep.subr.mxu0 0.0
        %1373 = vmatpush1.msra.mxu0 %v1313
        %1374 = vmatprep.subr.mxu0 0.0
        %1375 = vmatpush1.msra.mxu0 %v1314
        %1376 = vmatprep.subr.mxu0 0.0
        %1377 = vmatpush1.msra.mxu0 %v1315
        %1378 = vmatprep.subr.mxu0 0.0
        %1379 = vmatpush1.msra.mxu0 %v1316
        %1380 = vmatprep.subr.mxu0 0.0
        %1381 = vmatpush1.msra.mxu0 %v1317
        %1382 = vmatprep.subr.mxu0 0.0
        %1383 = vmatpush1.msra.mxu0 %v1318
        %1384 = vmatprep.subr.mxu0 0.0
        %1385 = vmatpush1.msra.mxu0 %v1319
        %1386 = vmatprep.subr.mxu0 0.0
        %1387 = vmatpush1.msra.mxu0 %v1320
        %1388 = vmatprep.subr.mxu0 0.0
        %1389 = vmatpush1.msra.mxu0 %v1321
        %1390 = vmatprep.subr.mxu0 0.0
        %1391 = vmatpush1.msra.mxu0 %v1322
        %1392 = vmatprep.subr.mxu0 0.0
        %1393 = vmatpush1.msra.mxu0 %v1323
        %1394 = vmatprep.subr.mxu0 0.0
        %1395 = vmatpush1.msra.mxu0 %v1324
        %1396 = vmatprep.mubr.f32.mxu0 %v1292
        %1397 = vmatmul.mubr.f32.gmra.mrb[0].mxu0 %v1291
        %v1398 = vpop.f32.mrb[0].mxu0
        %v1399 = vadd.f32 %v1330, %v1398
        %v1400 = vpop.f32.mrb[0].mxu0
        %1401 = vdwg.mxu0
        %v1402 = vmax.f32 %v1399, 0.0
        %v1403 = vld [vmem:[%s12] sm:$0xff]
        %v1404 = vld [vmem:[%s12 + $0x8] sm:$0xff]
        %v1405 = vld [vmem:[%s12 + $0x10] sm:$0xff]
        %v1406 = vld [vmem:[%s12 + $0x18] sm:$0xff]
        %v1407 = vld [vmem:[%s12 + $0x20] sm:$0xff]
        %v1408 = vld [vmem:[%s12 + $0x28] sm:$0xff]
        %v1409 = vld [vmem:[%s12 + $0x30] sm:$0xff]
        %v1410 = vld [vmem:[%s12 + $0x38] sm:$0xff]
        %v1411 = vld [vmem:[%s12 + $0x40] sm:$0xff]
        %v1412 = vld [vmem:[%s12 + $0x48] sm:$0xff]
        %v1413 = vld [vmem:[%s12 + $0x50] sm:$0xff]
        %v1414 = vld [vmem:[%s12 + $0x58] sm:$0xff]
        %v1415 = vld [vmem:[%s12 + $0x60] sm:$0xff]
        %v1416 = vld [vmem:[%s12 + $0x68] sm:$0xff]
        %v1417 = vld [vmem:[%s12 + $0x70] sm:$0xff]
        %v1418 = vld [vmem:[%s12 + $0x78] sm:$0xff]
        %v1419 = vld [vmem:[%s13] sm:$0x1]
        %v1421 = vlaneseq
        %v1422 = vshrl.u32 %v1421, 7
        %v1423 = vsub.s32 0, %v1422
        %v1424 = vrot.slane %v1419, %v1423
        %1426 = vmatprep.subr.mxu0 0.0
        %1427 = vmatpush1.msra.mxu0 %v1403
        %1428 = vmatprep.subr.mxu0 0.0
        %1429 = vmatpush1.msra.mxu0 %v1404
        %1430 = vmatprep.subr.mxu0 0.0
        %1431 = vmatpush1.msra.mxu0 %v1405
        %1432 = vmatprep.subr.mxu0 0.0
        %1433 = vmatpush1.msra.mxu0 %v1406
        %1434 = vmatprep.subr.mxu0 0.0
        %1435 = vmatpush1.msra.mxu0 %v1407
        %1436 = vmatprep.subr.mxu0 0.0
        %1437 = vmatpush1.msra.mxu0 %v1408
        %1438 = vmatprep.subr.mxu0 0.0
        %1439 = vmatpush1.msra.mxu0 %v1409
        %1440 = vmatprep.subr.mxu0 0.0
        %1441 = vmatpush1.msra.mxu0 %v1410
        %1442 = vmatprep.subr.mxu0 0.0
        %1443 = vmatpush1.msra.mxu0 %v1411
        %1444 = vmatprep.subr.mxu0 0.0
        %1445 = vmatpush1.msra.mxu0 %v1412
        %1446 = vmatprep.subr.mxu0 0.0
        %1447 = vmatpush1.msra.mxu0 %v1413
        %1448 = vmatprep.subr.mxu0 0.0
        %1449 = vmatpush1.msra.mxu0 %v1414
        %1450 = vmatprep.subr.mxu0 0.0
        %1451 = vmatpush1.msra.mxu0 %v1415
        %1452 = vmatprep.subr.mxu0 0.0
        %1453 = vmatpush1.msra.mxu0 %v1416
        %1454 = vmatprep.subr.mxu0 0.0
        %1455 = vmatpush1.msra.mxu0 %v1417
        %1456 = vmatprep.subr.mxu0 0.0
        %1457 = vmatpush1.msra.mxu0 %v1418
        %1458 = vmatprep.subr.mxu0 0.0
        %1459 = vmatpush1.msra.mxu0 0.0
        %1460 = vmatprep.subr.mxu0 0.0
        %1461 = vmatpush1.msra.mxu0 0.0
        %1462 = vmatprep.subr.mxu0 0.0
        %1463 = vmatpush1.msra.mxu0 0.0
        %1464 = vmatprep.subr.mxu0 0.0
        %1465 = vmatpush1.msra.mxu0 0.0
        %1466 = vmatprep.subr.mxu0 0.0
        %1467 = vmatpush1.msra.mxu0 0.0
        %1468 = vmatprep.subr.mxu0 0.0
        %1469 = vmatpush1.msra.mxu0 0.0
        %1470 = vmatprep.subr.mxu0 0.0
        %1471 = vmatpush1.msra.mxu0 0.0
        %1472 = vmatprep.subr.mxu0 0.0
        %1473 = vmatpush1.msra.mxu0 0.0
        %1474 = vmatprep.subr.mxu0 0.0
        %1475 = vmatpush1.msra.mxu0 0.0
        %1476 = vmatprep.subr.mxu0 0.0
        %1477 = vmatpush1.msra.mxu0 0.0
        %1478 = vmatprep.subr.mxu0 0.0
        %1479 = vmatpush1.msra.mxu0 0.0
        %1480 = vmatprep.subr.mxu0 0.0
        %1481 = vmatpush1.msra.mxu0 0.0
        %1482 = vmatprep.subr.mxu0 0.0
        %1483 = vmatpush1.msra.mxu0 0.0
        %1484 = vmatprep.subr.mxu0 0.0
        %1485 = vmatpush1.msra.mxu0 0.0
        %1486 = vmatprep.subr.mxu0 0.0
        %1487 = vmatpush1.msra.mxu0 0.0
        %1488 = vmatprep.subr.mxu0 0.0
        %1489 = vmatpush1.msra.mxu0 0.0
        %1490 = vmatprep.mubr.f32.mxu0 0.0
        %1491 = vmatmul.mubr.f32.gmra.mrb[0].mxu0 %v1402
        %v1492 = vpop.f32.mrb[0].mxu0
        %v1493 = vadd.f32 %v1424, %v1492
        %v1494 = vpop.f32.mrb[0].mxu0
        %1495 = vdwg.mxu0
        %v1496 = vld [vmem:[%s14] sm:$0xff]
        %v1497 = vld [vmem:[%s14 + $0x8] sm:$0xff]
        %v1498 = vld [vmem:[%s14 + $0x10] sm:$0xff]
        %v1499 = vld [vmem:[%s14 + $0x18] sm:$0xff]
        %v1500 = vld [vmem:[%s14 + $0x20] sm:$0xff]
        %v1501 = vld [vmem:[%s14 + $0x28] sm:$0xff]
        %v1502 = vld [vmem:[%s14 + $0x30] sm:$0xff]
        %v1503 = vld [vmem:[%s14 + $0x38] sm:$0xff]
        %v1504 = vld [vmem:[%s14 + $0x40] sm:$0xff]
        %v1505 = vld [vmem:[%s14 + $0x48] sm:$0xff]
        %v1506 = vld [vmem:[%s14 + $0x50] sm:$0xff]
        %v1507 = vld [vmem:[%s14 + $0x58] sm:$0xff]
        %v1508 = vld [vmem:[%s14 + $0x60] sm:$0xff]
        %v1509 = vld [vmem:[%s14 + $0x68] sm:$0xff]
        %v1510 = vld [vmem:[%s14 + $0x70] sm:$0xff]
        %v1511 = vld [vmem:[%s14 + $0x78] sm:$0xff]
        %1512 = vmatprep.subr.mxu0 0.0
        %1513 = vmatpush1.msra.mxu0 %v1496
        %1514 = vmatprep.subr.mxu0 0.0
        %1515 = vmatpush1.msra.mxu0 %v1497
        %1516 = vmatprep.subr.mxu0 0.0
        %1517 = vmatpush1.msra.mxu0 %v1498
        %1518 = vmatprep.subr.mxu0 0.0
        %1519 = vmatpush1.msra.mxu0 %v1499
        %1520 = vmatprep.subr.mxu0 0.0
        %1521 = vmatpush1.msra.mxu0 %v1500
        %1522 = vmatprep.subr.mxu0 0.0
        %1523 = vmatpush1.msra.mxu0 %v1501
        %1524 = vmatprep.subr.mxu0 0.0
        %1525 = vmatpush1.msra.mxu0 %v1502
        %1526 = vmatprep.subr.mxu0 0.0
        %1527 = vmatpush1.msra.mxu0 %v1503
        %1528 = vmatprep.subr.mxu0 0.0
        %1529 = vmatpush1.msra.mxu0 %v1504
        %1530 = vmatprep.subr.mxu0 0.0
        %1531 = vmatpush1.msra.mxu0 %v1505
        %1532 = vmatprep.subr.mxu0 0.0
        %1533 = vmatpush1.msra.mxu0 %v1506
        %1534 = vmatprep.subr.mxu0 0.0
        %1535 = vmatpush1.msra.mxu0 %v1507
        %1536 = vmatprep.subr.mxu0 0.0
        %1537 = vmatpush1.msra.mxu0 %v1508
        %1538 = vmatprep.subr.mxu0 0.0
        %1539 = vmatpush1.msra.mxu0 %v1509
        %1540 = vmatprep.subr.mxu0 0.0
        %1541 = vmatpush1.msra.mxu0 %v1510
        %1542 = vmatprep.subr.mxu0 0.0
        %1543 = vmatpush1.msra.mxu0 %v1511
        %1544 = vmatprep.subr.mxu0 0.0
        %1545 = vmatpush1.msra.mxu0 0.0
        %1546 = vmatprep.subr.mxu0 0.0
        %1547 = vmatpush1.msra.mxu0 0.0
        %1548 = vmatprep.subr.mxu0 0.0
        %1549 = vmatpush1.msra.mxu0 0.0
        %1550 = vmatprep.subr.mxu0 0.0
        %1551 = vmatpush1.msra.mxu0 0.0
        %1552 = vmatprep.subr.mxu0 0.0
        %1553 = vmatpush1.msra.mxu0 0.0
        %1554 = vmatprep.subr.mxu0 0.0
        %1555 = vmatpush1.msra.mxu0 0.0
        %1556 = vmatprep.subr.mxu0 0.0
        %1557 = vmatpush1.msra.mxu0 0.0
        %1558 = vmatprep.subr.mxu0 0.0
        %1559 = vmatpush1.msra.mxu0 0.0
        %1560 = vmatprep.subr.mxu0 0.0
        %1561 = vmatpush1.msra.mxu0 0.0
        %1562 = vmatprep.subr.mxu0 0.0
        %1563 = vmatpush1.msra.mxu0 0.0
        %1564 = vmatprep.subr.mxu0 0.0
        %1565 = vmatpush1.msra.mxu0 0.0
        %1566 = vmatprep.subr.mxu0 0.0
        %1567 = vmatpush1.msra.mxu0 0.0
        %1568 = vmatprep.subr.mxu0 0.0
        %1569 = vmatpush1.msra.mxu0 0.0
        %1570 = vmatprep.subr.mxu0 0.0
        %1571 = vmatpush1.msra.mxu0 0.0
        %1572 = vmatprep.subr.mxu0 0.0
        %1573 = vmatpush1.msra.mxu0 0.0
        %1574 = vmatprep.subr.mxu0 0.0
        %1575 = vmatpush1.msra.mxu0 0.0
        %1576 = vmatprep.mubr.f32.mxu0 0.0
        %1577 = vmatmul.mubr.f32.gmra.mrb[0].mxu0 %v1070
        %v1578 = vpop.f32.mrb[0].mxu0
        %v1579 = vadd.f32 0.0, %v1578
        %v1580 = vpop.f32.mrb[0].mxu0
        %1581 = vdwg.mxu0
        %v1582 = vld [vmem:[#allocation13] sm:$0xff]
        %v1583 = vld [vmem:[#allocation13 + $0x8] sm:$0xff]
        %v1584 = vld [vmem:[#allocation13 + $0x10] sm:$0xff]
        %v1585 = vld [vmem:[#allocation13 + $0x18] sm:$0xff]
        %v1586 = vld [vmem:[#allocation13 + $0x20] sm:$0xff]
        %v1587 = vld [vmem:[#allocation13 + $0x28] sm:$0xff]
        %v1588 = vld [vmem:[#allocation13 + $0x30] sm:$0xff]
        %v1589 = vld [vmem:[#allocation13 + $0x38] sm:$0xff]
        %v1590 = vld [vmem:[#allocation13 + $0x40] sm:$0xff]
        %v1591 = vld [vmem:[#allocation13 + $0x48] sm:$0xff]
        %v1592 = vld [vmem:[#allocation13 + $0x50] sm:$0xff]
        %v1593 = vld [vmem:[#allocation13 + $0x58] sm:$0xff]
        %v1594 = vld [vmem:[#allocation13 + $0x60] sm:$0xff]
        %v1595 = vld [vmem:[#allocation13 + $0x68] sm:$0xff]
        %v1596 = vld [vmem:[#allocation13 + $0x70] sm:$0xff]
        %v1597 = vld [vmem:[#allocation13 + $0x78] sm:$0xff]
        %1598 = vmatprep.subr.mxu0 0.0
        %1599 = vmatpush1.msra.mxu0 %v1582
        %1600 = vmatprep.subr.mxu0 0.0
        %1601 = vmatpush1.msra.mxu0 %v1583
        %1602 = vmatprep.subr.mxu0 0.0
        %1603 = vmatpush1.msra.mxu0 %v1584
        %1604 = vmatprep.subr.mxu0 0.0
        %1605 = vmatpush1.msra.mxu0 %v1585
        %1606 = vmatprep.subr.mxu0 0.0
        %1607 = vmatpush1.msra.mxu0 %v1586
        %1608 = vmatprep.subr.mxu0 0.0
        %1609 = vmatpush1.msra.mxu0 %v1587
        %1610 = vmatprep.subr.mxu0 0.0
        %1611 = vmatpush1.msra.mxu0 %v1588
        %1612 = vmatprep.subr.mxu0 0.0
        %1613 = vmatpush1.msra.mxu0 %v1589
        %1614 = vmatprep.subr.mxu0 0.0
        %1615 = vmatpush1.msra.mxu0 %v1590
        %1616 = vmatprep.subr.mxu0 0.0
        %1617 = vmatpush1.msra.mxu0 %v1591
        %1618 = vmatprep.subr.mxu0 0.0
        %1619 = vmatpush1.msra.mxu0 %v1592
        %1620 = vmatprep.subr.mxu0 0.0
        %1621 = vmatpush1.msra.mxu0 %v1593
        %1622 = vmatprep.subr.mxu0 0.0
        %1623 = vmatpush1.msra.mxu0 %v1594
        %1624 = vmatprep.subr.mxu0 0.0
        %1625 = vmatpush1.msra.mxu0 %v1595
        %1626 = vmatprep.subr.mxu0 0.0
        %1627 = vmatpush1.msra.mxu0 %v1596
        %1628 = vmatprep.subr.mxu0 0.0
        %1629 = vmatpush1.msra.mxu0 %v1597
        %1630 = vmatprep.subr.mxu0 0.0
        %1631 = vmatpush1.msra.mxu0 0.0
        %1632 = vmatprep.subr.mxu0 0.0
        %1633 = vmatpush1.msra.mxu0 0.0
        %1634 = vmatprep.subr.mxu0 0.0
        %1635 = vmatpush1.msra.mxu0 0.0
        %1636 = vmatprep.subr.mxu0 0.0
        %1637 = vmatpush1.msra.mxu0 0.0
        %1638 = vmatprep.subr.mxu0 0.0
        %1639 = vmatpush1.msra.mxu0 0.0
        %1640 = vmatprep.subr.mxu0 0.0
        %1641 = vmatpush1.msra.mxu0 0.0
        %1642 = vmatprep.subr.mxu0 0.0
        %1643 = vmatpush1.msra.mxu0 0.0
        %1644 = vmatprep.subr.mxu0 0.0
        %1645 = vmatpush1.msra.mxu0 0.0
        %1646 = vmatprep.subr.mxu0 0.0
        %1647 = vmatpush1.msra.mxu0 0.0
        %1648 = vmatprep.subr.mxu0 0.0
        %1649 = vmatpush1.msra.mxu0 0.0
        %1650 = vmatprep.subr.mxu0 0.0
        %1651 = vmatpush1.msra.mxu0 0.0
        %1652 = vmatprep.subr.mxu0 0.0
        %1653 = vmatpush1.msra.mxu0 0.0
        %1654 = vmatprep.subr.mxu0 0.0
        %1655 = vmatpush1.msra.mxu0 0.0
        %1656 = vmatprep.subr.mxu0 0.0
        %1657 = vmatpush1.msra.mxu0 0.0
        %1658 = vmatprep.subr.mxu0 0.0
        %1659 = vmatpush1.msra.mxu0 0.0
        %1660 = vmatprep.subr.mxu0 0.0
        %1661 = vmatpush1.msra.mxu0 0.0
        %1662 = vmatprep.mubr.f32.mxu0 0.0
        %1663 = vmatmul.mubr.f32.gmra.mrb[0].mxu0 %v960
        %v1664 = vpop.f32.mrb[0].mxu0
        %v1665 = vadd.f32 0.0, %v1664
        %v1666 = vpop.f32.mrb[0].mxu0
        %1667 = vdwg.mxu0
        %v1668 = vlaneseq
        %v1669 = vand.u32 %v1668, 127
        %vm1670 = vcmp.ge.s32.totalorder %v1669, 8
        %vm1671 = vcmp.lt.s32.totalorder %v1669, 12
        %vm1672 = vmand %vm1670, %vm1671
        %v1673 = vsel %vm1672, 1, 0
        %vm1674 = vcmp.eq.s32.totalorder %v1673, 1
        %1676 = vset.pattern.permute.xlu0 1
        %1677 = vperm.xlu0 %1676, %v1493
        %v1678 = vpop.permute.xlu0 %1677
        %v1680 = vsel %vm1674, %v1678, 1.0
        %v1681 = vmul.f32 %v1579, %v1680
        %1682 = vset.pattern.permute.xlu0 0
        %1683 = vperm.xlu0 %1682, %v1493
        %v1684 = vpop.permute.xlu0 %1683
        %v1686 = vsel %vm1674, %v1684, 1.0
        %v1687 = vmul.f32 %v1665, %v1686
        %v1688 = vadd.f32 %v1681, %v1687
        %v1689 = vld [vmem:[%s16] sm:$0x1]
        %v1691 = vlaneseq
        %v1692 = vshrl.u32 %v1691, 7
        %v1693 = vsub.s32 0, %v1692
        %v1694 = vrot.slane %v1689, %v1693
        %v1696 = vadd.f32 %v1688, %v1694
        %1697 = vst [vmem:[%s641] sm:$0xff] %v1696
        %s1698 = sand.u32 %s405, 1
        %s1699 = scalar_lea.sflag [#allocation4], %s1698
        %s1700 = sand.u32 %s405, 1
        %s1701 = smul.addr %s1700, 8
        %s1702 = scalar_lea.vmem [#allocation14], %s1701
        // Predicated region
        $region117: #{tpu_custom_call.1} parent=87 // pred_check
          %p1703 = pneg %p415
        $region118: #{tpu_custom_call.1} parent=87 // pred_check_branch
          %1705 = sbr.rel (%p1703) target = $region120
        $region119: #{tpu_custom_call.1} parent=87 // pred_region
          %s1707 = ssub.s32 128, 128
          %1708 = vsyncadd %s1699, %s1707
          %s1709 = smul.addr %s35, 128
          %s1710 = scalar_lea.hbm %s17, %s1709
          %s1712 = sshll.u32 %s1702, 4
          %s1713 = int_to_ptr.vmem [resolvable:$true] %s1712
          %1715 = dma.vmem_to_hbm [thread:$0]  %s1713, 128, %s1710, %s1699
        $region120: #{tpu_custom_call.1} parent=87 // pred_fallthru
          _
      $region88: #{tpu_custom_call.1} parent=5 // pred_fallthru
        _
      %p1716 = scmp.le.s32.totalorder 2, %s30
      // Predicated region
      $region121: #{tpu_custom_call.1} parent=5 // pred_check
        %p1717 = pneg %p1716
      $region122: #{tpu_custom_call.1} parent=5 // pred_check_branch
        %1719 = sbr.rel (%p1717) target = $region124
      $region123: #{tpu_custom_call.1} parent=5 // pred_region
        %s1720 = ssub.s32 %s30, 2
        // Predicated region
        $region125: #{tpu_custom_call.1} parent=123 // pred_check
          %p1721 = pneg %p421
        $region126: #{tpu_custom_call.1} parent=123 // pred_check_branch
          %1723 = sbr.rel (%p1721) target = $region128
        $region127: #{tpu_custom_call.1} parent=123 // pred_region
          %s1724 = sand.u32 %s406, 1
          %s1725 = scalar_lea.sflag [#allocation4], %s1724
          %s1726 = sand.u32 %s406, 1
          %s1727 = smul.addr %s1726, 8
          %s1728 = scalar_lea.vmem [#allocation14], %s1727
          %1729 = dma.done %s1725, 128
        $region128: #{tpu_custom_call.1} parent=123 // pred_fallthru
          _
      $region124: #{tpu_custom_call.1} parent=5 // pred_fallthru
        _
    $region6: #{tpu_custom_call.1} parent=1 // loop_footer
      %s34 = sadd.s32 1, %s30
    $region7: #{tpu_custom_call.1} parent=1 // loop_footer_branch
      %29 = sbr.rel target = $region3
    $region8: #{tpu_custom_call.1} parent=1 // loop_exit
      _
    %1730 = vsyncpa [#allocation3], 1
    %s1731 = scalar_lea.sflag [#allocation3], 1
    %1732 = vsyncpa %s1731, 1
    %1733 = vsyncpa [#allocation6], 1
    %1734 = vsyncpa [#allocation9], 1
    %1735 = vsyncpa [#allocation12], 1
    %1736 = vsyncpa [#allocation4], 1
    %s1737 = scalar_lea.sflag [#allocation4], 1
    %1738 = vsyncpa %s1737, 1

</llo_original>
